<compile_context>
chip_gen: v5e
topology: v5e:2x2
jax: 0.10.0
libtpu: 0.0.40
codegen_flags: <defaults>
</compile_context>

<pallas_src>
import math

import jax
import jax.numpy as jnp
from jax.experimental import pallas as pl
from jax.experimental.pallas import tpu as pltpu

N_ELEC = 32          # rows of encoder_spatial_features (becomes the LSTM "batch")
HIDDEN = 32          # LSTM hidden / input size
NUM_LAYERS = 4
N_GATES = 3          # packed gate order [i, g, o]; dead f-gate removed
FEAT_D = 16          # feature dim of encoder_spatial_features (small test size)
N_EEG_TIMESTEPS = 8  # n_eeg_timesteps (small test size)
BATCH = 16           # demo batch size
BLOCK_B = 8          # samples per grid step -> M = 256 rows per fused LSTM matmul


def eeg_decoder_kernel(x_ref, w_ref, b_ref, out_ref):
    """One block of samples: corr + per-sample min/max scaling + fused 4-layer LSTM step.

    x_ref  : (Bblk, 32, D)  encoder spatial features for Bblk samples
    w_ref  : (4, 32, 96)    per-layer W_ih.T, dead f-gate columns dropped; [i, g, o]
    b_ref  : (4, 1, 96)     per-layer (b_ih + b_hh); [i, g, o]
    out_ref: (Bblk, 32)     hidden state of LSTM "batch" row 31 after the last layer
    """
    bblk = x_ref.shape[0]
    x = x_ref[...]                                                      # (Bblk, 32, D)

    # corr_s = x_s @ x_s.T for every sample, one batched contraction over D.
    corr = jnp.einsum('bnd,bmd->bnm', x, x,
                      preferred_element_type=jnp.float32)               # (Bblk, 32, 32)

    # Per-sample global min/max scaling to [0, 1]. Exact divide (tiny (Bblk,1,1)
    # tensor) for parity with the PyTorch reference.
    # NOTE: like the PyTorch reference, this is NaN if all corr entries are equal.
    cmin = jnp.min(jnp.min(corr, axis=2, keepdims=True), axis=1, keepdims=True)
    cmax = jnp.max(jnp.max(corr, axis=2, keepdims=True), axis=1, keepdims=True)
    scale = 1.0 / (cmax - cmin)                                         # (Bblk, 1, 1)
    h = (corr - cmin) * scale                                           # (Bblk, 32, 32)

    # Collapse (sample, electrode) into one M = Bblk*32 row dimension so each LSTM
    # layer is a single MXU matmul. Leading-dim merge is layout-free (32 rows per
    # sample is a multiple of 8 sublanes).
    h = h.reshape(bblk * N_ELEC, HIDDEN)                                # (Bblk*32, 32)

    H = HIDDEN
    # Layers 0..2: full single LSTM step from zero state for all rows.
    #   gates = h @ W_ih.T + (b_ih + b_hh); c = sigmoid(i)*tanh(g); h = sigmoid(o)*tanh(c)
    for layer in range(NUM_LAYERS - 1):
        gates = (jnp.dot(h, w_ref[layer], preferred_element_type=jnp.float32)
                 + b_ref[layer])                                        # (Bblk*32, 96)
        i_g = jax.nn.sigmoid(gates[:, 0 * H:1 * H])
        g_g = jnp.tanh(gates[:, 1 * H:2 * H])
        o_g = jax.nn.sigmoid(gates[:, 2 * H:3 * H])
        h = o_g * jnp.tanh(i_g * g_g)                                   # (Bblk*32, 32)

    # Only row 31 of each sample reaches the output -> one batched M = Bblk final
    # layer (sublane-strided static slice, then a single small matmul).
    h_last = h.reshape(bblk, N_ELEC, HIDDEN)[:, N_ELEC - 1, :]          # (Bblk, 32)
    gates = (jnp.dot(h_last, w_ref[NUM_LAYERS - 1],
                     preferred_element_type=jnp.float32)
             + b_ref[NUM_LAYERS - 1])                                   # (Bblk, 96)
    i_g = jax.nn.sigmoid(gates[:, 0 * H:1 * H])
    g_g = jnp.tanh(gates[:, 1 * H:2 * H])
    o_g = jax.nn.sigmoid(gates[:, 2 * H:3 * H])
    out_ref[...] = o_g * jnp.tanh(i_g * g_g)                            # (Bblk, 32)


def eeg_decoder_v3(encoder_spatial_features, w_igo_t, b_igo, n_eeg_timesteps,
                   block_b=BLOCK_B):
    """JAX wrapper.

    For a single (32, D) input returns (1, 32, T) exactly like the PyTorch module.
    For a batched (B, 32, D) input returns (B, 1, 32, T), `block_b` samples per
    grid step (parallel axis -> megacore-shardable on v7x).
    """
    x = jnp.asarray(encoder_spatial_features, jnp.float32)
    single = x.ndim == 2
    if single:
        x = x[None]
    B, N, D = x.shape

    if B <= block_b:
        # Small batch (incl. the single-sample module signature): one gridless
        # invocation, whole operands resident in VMEM. Latency-floor-bound by
        # design; batch calls through the blocked path for throughput.
        vmem = pl.BlockSpec(memory_space=pltpu.MemorySpace.VMEM)
        h_vec = pl.pallas_call(
            eeg_decoder_kernel,
            out_shape=jax.ShapeDtypeStruct((B, HIDDEN), jnp.float32),
            in_specs=[vmem, vmem, vmem],
            out_specs=vmem,
        )(x, w_igo_t, b_igo)
    else:
        # Blocked batch: block_b samples per grid step; pad B up to a multiple
        # (edge replication -> padded rows are valid math, then sliced off).
        pad = (-B) % block_b
        xp = jnp.pad(x, ((0, pad), (0, 0), (0, 0)), mode='edge') if pad else x
        bp = B + pad
        h_vec = pl.pallas_call(
            eeg_decoder_kernel,
            out_shape=jax.ShapeDtypeStruct((bp, HIDDEN), jnp.float32),
            grid=(bp // block_b,),
            in_specs=[
                pl.BlockSpec((block_b, N, D), lambda b: (b, 0, 0)),
                # Weights / biases are grid-invariant blocks (not re-fetched per step).
                pl.BlockSpec((NUM_LAYERS, HIDDEN, N_GATES * HIDDEN),
                             lambda b: (0, 0, 0)),
                pl.BlockSpec((NUM_LAYERS, 1, N_GATES * HIDDEN),
                             lambda b: (0, 0, 0)),
            ],
            out_specs=pl.BlockSpec((block_b, HIDDEN), lambda b: (b, 0)),
            compiler_params=pltpu.CompilerParams(
                dimension_semantics=("parallel",)),
        )(xp, w_igo_t, b_igo)
        h_vec = h_vec[:B]

    # stack(T copies, dim=0).permute(1, 2, 0) is a pure broadcast of the (32,)
    # hidden vector -> do it in XLA where it is free / fusible.
    out = jnp.broadcast_to(h_vec[:, None, :, None],
                           (B, 1, HIDDEN, n_eeg_timesteps))             # (B, 1, 32, T)
    return out[0] if single else out


def init_lstm_params(key):
    """Deterministic PyTorch-style LSTM init: U(-1/sqrt(H), 1/sqrt(H)).

    Packs only what the single-step-from-zero forward actually uses:
      w_igo_t: (4, 32, 96)  W_ih[l].T with the f-gate columns removed; gate order [i, g, o]
      b_igo  : (4, 1, 96)   (b_ih[l] + b_hh[l]) for gates [i, g, o]
    (W_hh multiplies h0 == 0 and the f-gate multiplies c0 == 0, so both are dead.)
    """
    k = 1.0 / math.sqrt(HIDDEN)
    w_layers, b_layers = [], []
    for _ in range(NUM_LAYERS):
        key, k1, k2, k3, k4 = jax.random.split(key, 5)
        w_ih = jax.random.uniform(k1, (4 * HIDDEN, HIDDEN), jnp.float32, -k, k)
        w_hh = jax.random.uniform(k2, (4 * HIDDEN, HIDDEN), jnp.float32, -k, k)
        b_ih = jax.random.uniform(k3, (4 * HIDDEN,), jnp.float32, -k, k)
        b_hh = jax.random.uniform(k4, (4 * HIDDEN,), jnp.float32, -k, k)
        del w_hh  # multiplies h0 == 0
        b = b_ih + b_hh
        # PyTorch gate order is [i, f, g, o]; keep [i, g, o].
        w_rows = jnp.concatenate(
            [w_ih[0 * HIDDEN:1 * HIDDEN],
             w_ih[2 * HIDDEN:3 * HIDDEN],
             w_ih[3 * HIDDEN:4 * HIDDEN]], axis=0)                      # (96, 32)
        b_rows = jnp.concatenate(
            [b[0 * HIDDEN:1 * HIDDEN],
             b[2 * HIDDEN:3 * HIDDEN],
             b[3 * HIDDEN:4 * HIDDEN]], axis=0)                         # (96,)
        w_layers.append(w_rows.T)                                       # (32, 96)
        b_layers.append(b_rows[None, :])                                # (1, 96)
    return jnp.stack(w_layers, axis=0), jnp.stack(b_layers, axis=0)     # (4,32,96), (4,1,96)


if __name__ == "__main__":
    root_key = jax.random.PRNGKey(0)
    key_x, key_params = jax.random.split(root_key)

    # encoder_spatial_features: (B, 32, D). N must be 32 because corr (N, N) feeds
    # an LSTM with input_size=32; D is arbitrary (16 here).
    encoder_spatial_features = jax.random.normal(
        key_x, (BATCH, N_ELEC, FEAT_D), jnp.float32)

    w_igo_t, b_igo = init_lstm_params(key_params)

    # Batched path: BLOCK_B samples per grid step, grid=(2,) parallel blocks.
    out = eeg_decoder_v3(encoder_spatial_features, w_igo_t, b_igo, N_EEG_TIMESTEPS)
    out = jax.block_until_ready(out)
    assert out.shape == (BATCH, 1, HIDDEN, N_EEG_TIMESTEPS), out.shape
    assert bool(jnp.all(jnp.isfinite(out)))
    # All timesteps are copies of the same hidden vector, as in the PyTorch module.
    assert bool(jnp.allclose(out[..., 0:1], out))

    # Single-sample (gridless) path, matching the PyTorch module signature exactly;
    # must agree with the blocked batched path.
    out1 = eeg_decoder_v3(encoder_spatial_features[0], w_igo_t, b_igo, N_EEG_TIMESTEPS)
    out1 = jax.block_until_ready(out1)
    assert out1.shape == (1, HIDDEN, N_EEG_TIMESTEPS), out1.shape
    assert bool(jnp.allclose(out1, out[0], rtol=1e-5, atol=1e-6))

    print("KERNEL_OK")
</pallas_src>

<mosaic_0001>
module attributes {stable_mosaic.version = 11 : i64} {
  func.func @eeg_decoder_kernel(%arg0: i32, %arg1: memref<8x32x16xf32, #tpu.memory_space<vmem>>, %arg2: memref<4x32x96xf32, #tpu.memory_space<vmem>>, %arg3: memref<4x1x96xf32, #tpu.memory_space<vmem>>, %arg4: memref<8x32xf32, #tpu.memory_space<vmem>>) attributes {dimension_semantics = [#tpu.dimension_semantics<parallel>], iteration_bounds = array<i64: 2>, scalar_prefetch = 0 : i64, scratch_operands = 0 : i64, tpu.core_type = #tpu.core_type<tc>, window_params = [{transform_indices = @transform_0, window_bounds = array<i64: 8, 32, 16>}, {pipeline_mode = #tpu.pipeline_mode<synchronous>, transform_indices = @transform_1, window_bounds = array<i64: 4, 32, 96>}, {pipeline_mode = #tpu.pipeline_mode<synchronous>, transform_indices = @transform_2, window_bounds = array<i64: 4, 1, 96>}, {transform_indices = @transform_3, window_bounds = array<i64: 8, 32>}]} {
    %c0 = arith.constant 0 : index
    %c0_0 = arith.constant 0 : index
    %c0_1 = arith.constant 0 : index
    %0 = vector.load %arg1[%c0, %c0_0, %c0_1] : memref<8x32x16xf32, #tpu.memory_space<vmem>>, vector<8x32x16xf32>
    "tpu.trace_start"() <{level = 10 : i32, message = "bnd,bmd->bnm"}> : () -> ()
    %cst = arith.constant dense<0.000000e+00> : vector<8x32x32xf32>
    %1 = tpu.matmul %0, %0, %cst {dimension_numbers = #tpu.dot_dimension_numbers<[2], [2], [1], [1], [0, 0, 0, 1, 1, 1], [0], [0]>} : vector<8x32x16xf32>, vector<8x32x16xf32>, vector<8x32x32xf32> -> vector<8x32x32xf32>
    "tpu.trace_stop"() : () -> ()
    %cst_2 = arith.constant dense<0x7F800000> : vector<8x32xf32>
    %2 = vector.multi_reduction <minimumf>, %1, %cst_2 [2] : vector<8x32x32xf32> to vector<8x32xf32>
    %3 = vector.shape_cast %2 : vector<8x32xf32> to vector<8x32x1xf32>
    %cst_3 = arith.constant dense<0x7F800000> : vector<8x1xf32>
    %4 = vector.multi_reduction <minimumf>, %3, %cst_3 [1] : vector<8x32x1xf32> to vector<8x1xf32>
    %5 = vector.shape_cast %4 : vector<8x1xf32> to vector<8x1x1xf32>
    %cst_4 = arith.constant dense<0xFF800000> : vector<8x32xf32>
    %6 = vector.multi_reduction <maximumf>, %1, %cst_4 [2] : vector<8x32x32xf32> to vector<8x32xf32>
    %7 = vector.shape_cast %6 : vector<8x32xf32> to vector<8x32x1xf32>
    %cst_5 = arith.constant dense<0xFF800000> : vector<8x1xf32>
    %8 = vector.multi_reduction <maximumf>, %7, %cst_5 [1] : vector<8x32x1xf32> to vector<8x1xf32>
    %9 = vector.shape_cast %8 : vector<8x1xf32> to vector<8x1x1xf32>
    %10 = arith.subf %9, %5 : vector<8x1x1xf32>
    %cst_6 = arith.constant 1.000000e+00 : f32
    %11 = vector.broadcast %cst_6 : f32 to vector<8x1x1xf32>
    %12 = arith.divf %11, %10 : vector<8x1x1xf32>
    %13 = vector.broadcast %5 : vector<8x1x1xf32> to vector<8x32x32xf32>
    %14 = arith.subf %1, %13 : vector<8x32x32xf32>
    %15 = vector.broadcast %12 : vector<8x1x1xf32> to vector<8x32x32xf32>
    %16 = arith.mulf %14, %15 : vector<8x32x32xf32>
    %17 = vector.shape_cast %16 : vector<8x32x32xf32> to vector<256x32xf32>
    %c0_7 = arith.constant 0 : index
    %c0_8 = arith.constant 0 : index
    %c0_9 = arith.constant 0 : index
    %18 = vector.load %arg2[%c0_7, %c0_8, %c0_9] : memref<4x32x96xf32, #tpu.memory_space<vmem>>, vector<1x32x96xf32>
    %19 = vector.shape_cast %18 : vector<1x32x96xf32> to vector<32x96xf32>
    %cst_10 = arith.constant dense<0.000000e+00> : vector<256x96xf32>
    %20 = tpu.matmul %17, %19, %cst_10 {dimension_numbers = #tpu.dot_dimension_numbers<[1], [0], [0], [1], [0, 0, 1, 1], [], []>} : vector<256x32xf32>, vector<32x96xf32>, vector<256x96xf32> -> vector<256x96xf32>
    %c0_11 = arith.constant 0 : index
    %c0_12 = arith.constant 0 : index
    %c0_13 = arith.constant 0 : index
    %21 = vector.load %arg3[%c0_11, %c0_12, %c0_13] : memref<4x1x96xf32, #tpu.memory_space<vmem>>, vector<1x1x96xf32>
    %22 = vector.shape_cast %21 : vector<1x1x96xf32> to vector<1x96xf32>
    %23 = vector.broadcast %22 : vector<1x96xf32> to vector<256x96xf32>
    %24 = arith.addf %20, %23 : vector<256x96xf32>
    %25 = vector.extract_strided_slice %24 {offsets = [0, 0], sizes = [256, 32], strides = [1, 1]} : vector<256x96xf32> to vector<256x32xf32>
    %26 = arith.negf %25 : vector<256x32xf32>
    %27 = math.exp %26 : vector<256x32xf32>
    %cst_14 = arith.constant 1.000000e+00 : f32
    %28 = vector.broadcast %cst_14 : f32 to vector<256x32xf32>
    %29 = arith.addf %28, %27 : vector<256x32xf32>
    %30 = arith.divf %28, %29 : vector<256x32xf32>
    %31 = vector.extract_strided_slice %24 {offsets = [0, 32], sizes = [256, 32], strides = [1, 1]} : vector<256x96xf32> to vector<256x32xf32>
    %32 = math.tanh %31 : vector<256x32xf32>
    %33 = vector.extract_strided_slice %24 {offsets = [0, 64], sizes = [256, 32], strides = [1, 1]} : vector<256x96xf32> to vector<256x32xf32>
    %34 = arith.negf %33 : vector<256x32xf32>
    %35 = math.exp %34 : vector<256x32xf32>
    %cst_15 = arith.constant 1.000000e+00 : f32
    %36 = vector.broadcast %cst_15 : f32 to vector<256x32xf32>
    %37 = arith.addf %36, %35 : vector<256x32xf32>
    %38 = arith.divf %36, %37 : vector<256x32xf32>
    %39 = arith.mulf %30, %32 : vector<256x32xf32>
    %40 = math.tanh %39 : vector<256x32xf32>
    %41 = arith.mulf %38, %40 : vector<256x32xf32>
    %c1 = arith.constant 1 : index
    %c0_16 = arith.constant 0 : index
    %c0_17 = arith.constant 0 : index
    %42 = vector.load %arg2[%c1, %c0_16, %c0_17] : memref<4x32x96xf32, #tpu.memory_space<vmem>>, vector<1x32x96xf32>
    %43 = vector.shape_cast %42 : vector<1x32x96xf32> to vector<32x96xf32>
    %cst_18 = arith.constant dense<0.000000e+00> : vector<256x96xf32>
    %44 = tpu.matmul %41, %43, %cst_18 {dimension_numbers = #tpu.dot_dimension_numbers<[1], [0], [0], [1], [0, 0, 1, 1], [], []>} : vector<256x32xf32>, vector<32x96xf32>, vector<256x96xf32> -> vector<256x96xf32>
    %c1_19 = arith.constant 1 : index
    %c0_20 = arith.constant 0 : index
    %c0_21 = arith.constant 0 : index
    %45 = vector.load %arg3[%c1_19, %c0_20, %c0_21] : memref<4x1x96xf32, #tpu.memory_space<vmem>>, vector<1x1x96xf32>
    %46 = vector.shape_cast %45 : vector<1x1x96xf32> to vector<1x96xf32>
    %47 = vector.broadcast %46 : vector<1x96xf32> to vector<256x96xf32>
    %48 = arith.addf %44, %47 : vector<256x96xf32>
    %49 = vector.extract_strided_slice %48 {offsets = [0, 0], sizes = [256, 32], strides = [1, 1]} : vector<256x96xf32> to vector<256x32xf32>
    %50 = arith.negf %49 : vector<256x32xf32>
    %51 = math.exp %50 : vector<256x32xf32>
    %cst_22 = arith.constant 1.000000e+00 : f32
    %52 = vector.broadcast %cst_22 : f32 to vector<256x32xf32>
    %53 = arith.addf %52, %51 : vector<256x32xf32>
    %54 = arith.divf %52, %53 : vector<256x32xf32>
    %55 = vector.extract_strided_slice %48 {offsets = [0, 32], sizes = [256, 32], strides = [1, 1]} : vector<256x96xf32> to vector<256x32xf32>
    %56 = math.tanh %55 : vector<256x32xf32>
    %57 = vector.extract_strided_slice %48 {offsets = [0, 64], sizes = [256, 32], strides = [1, 1]} : vector<256x96xf32> to vector<256x32xf32>
    %58 = arith.negf %57 : vector<256x32xf32>
    %59 = math.exp %58 : vector<256x32xf32>
    %cst_23 = arith.constant 1.000000e+00 : f32
    %60 = vector.broadcast %cst_23 : f32 to vector<256x32xf32>
    %61 = arith.addf %60, %59 : vector<256x32xf32>
    %62 = arith.divf %60, %61 : vector<256x32xf32>
    %63 = arith.mulf %54, %56 : vector<256x32xf32>
    %64 = math.tanh %63 : vector<256x32xf32>
    %65 = arith.mulf %62, %64 : vector<256x32xf32>
    %c2 = arith.constant 2 : index
    %c0_24 = arith.constant 0 : index
    %c0_25 = arith.constant 0 : index
    %66 = vector.load %arg2[%c2, %c0_24, %c0_25] : memref<4x32x96xf32, #tpu.memory_space<vmem>>, vector<1x32x96xf32>
    %67 = vector.shape_cast %66 : vector<1x32x96xf32> to vector<32x96xf32>
    %cst_26 = arith.constant dense<0.000000e+00> : vector<256x96xf32>
    %68 = tpu.matmul %65, %67, %cst_26 {dimension_numbers = #tpu.dot_dimension_numbers<[1], [0], [0], [1], [0, 0, 1, 1], [], []>} : vector<256x32xf32>, vector<32x96xf32>, vector<256x96xf32> -> vector<256x96xf32>
    %c2_27 = arith.constant 2 : index
    %c0_28 = arith.constant 0 : index
    %c0_29 = arith.constant 0 : index
    %69 = vector.load %arg3[%c2_27, %c0_28, %c0_29] : memref<4x1x96xf32, #tpu.memory_space<vmem>>, vector<1x1x96xf32>
    %70 = vector.shape_cast %69 : vector<1x1x96xf32> to vector<1x96xf32>
    %71 = vector.broadcast %70 : vector<1x96xf32> to vector<256x96xf32>
    %72 = arith.addf %68, %71 : vector<256x96xf32>
    %73 = vector.extract_strided_slice %72 {offsets = [0, 0], sizes = [256, 32], strides = [1, 1]} : vector<256x96xf32> to vector<256x32xf32>
    %74 = arith.negf %73 : vector<256x32xf32>
    %75 = math.exp %74 : vector<256x32xf32>
    %cst_30 = arith.constant 1.000000e+00 : f32
    %76 = vector.broadcast %cst_30 : f32 to vector<256x32xf32>
    %77 = arith.addf %76, %75 : vector<256x32xf32>
    %78 = arith.divf %76, %77 : vector<256x32xf32>
    %79 = vector.extract_strided_slice %72 {offsets = [0, 32], sizes = [256, 32], strides = [1, 1]} : vector<256x96xf32> to vector<256x32xf32>
    %80 = math.tanh %79 : vector<256x32xf32>
    %81 = vector.extract_strided_slice %72 {offsets = [0, 64], sizes = [256, 32], strides = [1, 1]} : vector<256x96xf32> to vector<256x32xf32>
    %82 = arith.negf %81 : vector<256x32xf32>
    %83 = math.exp %82 : vector<256x32xf32>
    %cst_31 = arith.constant 1.000000e+00 : f32
    %84 = vector.broadcast %cst_31 : f32 to vector<256x32xf32>
    %85 = arith.addf %84, %83 : vector<256x32xf32>
    %86 = arith.divf %84, %85 : vector<256x32xf32>
    %87 = arith.mulf %78, %80 : vector<256x32xf32>
    %88 = math.tanh %87 : vector<256x32xf32>
    %89 = arith.mulf %86, %88 : vector<256x32xf32>
    %90 = vector.shape_cast %89 : vector<256x32xf32> to vector<8x32x32xf32>
    %91 = vector.extract_strided_slice %90 {offsets = [0, 31, 0], sizes = [8, 1, 32], strides = [1, 1, 1]} : vector<8x32x32xf32> to vector<8x1x32xf32>
    %92 = vector.shape_cast %91 : vector<8x1x32xf32> to vector<8x32xf32>
    %c3 = arith.constant 3 : index
    %c0_32 = arith.constant 0 : index
    %c0_33 = arith.constant 0 : index
    %93 = vector.load %arg2[%c3, %c0_32, %c0_33] : memref<4x32x96xf32, #tpu.memory_space<vmem>>, vector<1x32x96xf32>
    %94 = vector.shape_cast %93 : vector<1x32x96xf32> to vector<32x96xf32>
    %cst_34 = arith.constant dense<0.000000e+00> : vector<8x96xf32>
    %95 = tpu.matmul %92, %94, %cst_34 {dimension_numbers = #tpu.dot_dimension_numbers<[1], [0], [0], [1], [0, 0, 1, 1], [], []>} : vector<8x32xf32>, vector<32x96xf32>, vector<8x96xf32> -> vector<8x96xf32>
    %c3_35 = arith.constant 3 : index
    %c0_36 = arith.constant 0 : index
    %c0_37 = arith.constant 0 : index
    %96 = vector.load %arg3[%c3_35, %c0_36, %c0_37] : memref<4x1x96xf32, #tpu.memory_space<vmem>>, vector<1x1x96xf32>
    %97 = vector.shape_cast %96 : vector<1x1x96xf32> to vector<1x96xf32>
    %98 = vector.broadcast %97 : vector<1x96xf32> to vector<8x96xf32>
    %99 = arith.addf %95, %98 : vector<8x96xf32>
    %100 = vector.extract_strided_slice %99 {offsets = [0, 0], sizes = [8, 32], strides = [1, 1]} : vector<8x96xf32> to vector<8x32xf32>
    %101 = arith.negf %100 : vector<8x32xf32>
    %102 = math.exp %101 : vector<8x32xf32>
    %cst_38 = arith.constant 1.000000e+00 : f32
    %103 = vector.broadcast %cst_38 : f32 to vector<8x32xf32>
    %104 = arith.addf %103, %102 : vector<8x32xf32>
    %105 = arith.divf %103, %104 : vector<8x32xf32>
    %106 = vector.extract_strided_slice %99 {offsets = [0, 32], sizes = [8, 32], strides = [1, 1]} : vector<8x96xf32> to vector<8x32xf32>
    %107 = math.tanh %106 : vector<8x32xf32>
    %108 = vector.extract_strided_slice %99 {offsets = [0, 64], sizes = [8, 32], strides = [1, 1]} : vector<8x96xf32> to vector<8x32xf32>
    %109 = arith.negf %108 : vector<8x32xf32>
    %110 = math.exp %109 : vector<8x32xf32>
    %cst_39 = arith.constant 1.000000e+00 : f32
    %111 = vector.broadcast %cst_39 : f32 to vector<8x32xf32>
    %112 = arith.addf %111, %110 : vector<8x32xf32>
    %113 = arith.divf %111, %112 : vector<8x32xf32>
    %114 = arith.mulf %105, %107 : vector<8x32xf32>
    %115 = math.tanh %114 : vector<8x32xf32>
    %116 = arith.mulf %113, %115 : vector<8x32xf32>
    %c0_40 = arith.constant 0 : index
    %c0_41 = arith.constant 0 : index
    %117 = vector.load %arg4[%c0_40, %c0_41] : memref<8x32xf32, #tpu.memory_space<vmem>>, vector<8x32xf32>
    tpu.vector_store %arg4[%c0_40, %c0_41], %116 {strides = array<i32>} : memref<8x32xf32, #tpu.memory_space<vmem>>, vector<8x32xf32>,
    return
  }
  func.func @transform_0(%arg0: i32) -> (i32, i32, i32) {
    %c0_i32 = arith.constant 0 : i32
    %c0_i32_0 = arith.constant 0 : i32
    %c0_i32_1 = arith.constant 0 : i32
    return %arg0, %c0_i32, %c0_i32_0 : i32, i32, i32
  }
  func.func @transform_1(%arg0: i32) -> (i32, i32, i32) {
    %c0_i32 = arith.constant 0 : i32
    %c0_i32_0 = arith.constant 0 : i32
    %c0_i32_1 = arith.constant 0 : i32
    %c0_i32_2 = arith.constant 0 : i32
    return %c0_i32, %c0_i32_0, %c0_i32_1 : i32, i32, i32
  }
  func.func @transform_2(%arg0: i32) -> (i32, i32, i32) {
    %c0_i32 = arith.constant 0 : i32
    %c0_i32_0 = arith.constant 0 : i32
    %c0_i32_1 = arith.constant 0 : i32
    %c0_i32_2 = arith.constant 0 : i32
    return %c0_i32, %c0_i32_0, %c0_i32_1 : i32, i32, i32
  }
  func.func @transform_3(%arg0: i32) -> (i32, i32) {
    %c0_i32 = arith.constant 0 : i32
    %c0_i32_0 = arith.constant 0 : i32
    return %arg0, %c0_i32 : i32, i32
  }
}

</mosaic_0001>

<llo_original>
// kernel: tpu_custom_call.1
$region0: #{tpu_custom_call.1}
  #allocation0 [shape = 'u32[]', space=smem, size = 0x4, offset = 0x4, fixed_abs, tag = 'smem constant byte address 0x4 - core index']
  #allocation1 [shape = 'u32[72,128]{1,0:T(1,128)}', space=vmem, size = 0x9000, scoped, tag = 'internal scratch']
  %s0 = inlined_call_operand.vmem [shape: f32[16,32,16], index: 0, kind: input, shape index: {}]
  %s1 = inlined_call_operand.vmem [shape: f32[4,32,96], index: 1, kind: input, shape index: {}]
  %s2 = inlined_call_operand.vmem [shape: f32[4,1,96], index: 2, kind: input, shape index: {}]
  %s3 = inlined_call_operand.hbm [shape: f32[16,32], index: 3, kind: output, shape index: {}]
  %s4 = sld [smem:[#allocation0]]
  $region45: #{tpu_custom_call.1} parent=0
    _
  %s6 = ssub.s32 1, %s4
  %s7 = scalar_select 0, %s6, %s4
  $region1: #{tpu_custom_call.1} parent=0
    #allocation2 [shape = 'u8[8192]{0}', space=vmem, size = 0x2000, scoped, tag = 'output window, operand 0']
    #allocation3 [shape = 's32[2]{0}', space=sflag, size = 0x8, scoped, tag = 'scoped memory for tpu_custom_call.1']
    %8 = vsyncpa [#allocation3], 0
    %s9 = scalar_lea.sflag [#allocation3], 1
    %10 = vsyncpa %s9, 0
    loop: start=0, step=1, limit=4
    $region2: #{tpu_custom_call.1} parent=1 // loop_pre_header
      _
    $region3: #{tpu_custom_call.1} parent=1 // loop_header
      %s12 = sphi 0, %s16
      %p13 = scmp.ge.s32.totalorder %s12, 4
      %s22 = sphi 0, %s24
      %s25 = sphi 0, %s22
      %s26 = sphi 0, %s25
      %s42 = sphi 0, %s26
      %s46 = sphi 0, %s46
      %s48 = sphi 0, %s46
      %s49 = sphi 0, %s48
      %s63 = sphi 0, %s49
      %s67 = sphi 0, %s67
      %s69 = sphi 0, %s67
      %s70 = sphi 0, %s69
      %s84 = sphi 0, %s70
      %s90 = sphi 0, %s92
      %s93 = sphi 0, %s90
      %s94 = sphi 0, %s93
      %s110 = sphi 0, %s94
    $region4: #{tpu_custom_call.1} parent=1 // loop_header_branch
      %15 = sbr.rel (%p13) target = $region8
    $region5: #{tpu_custom_call.1} parent=1 // loop_body
      %s17 = ssub.s32 %s12, 1
      %s18 = ssub.s32 %s12, 2
      %s19 = sadd.s32 %s12, 1
      %s20 = ssub.s32 %s12, %s19
      %p21 = scmp.eq.s32.totalorder %s20, 0
      %s23 = sadd.s32 %s22, 1
      %s24 = scalar_select %p21, %s22, %s23
      %p27 = pneg %p21
      %p28 = scmp.eq.s32.totalorder %s12, 1
      %p29 = por %p27, %p28
      %p30 = scmp.ne.s32.totalorder %s22, %s25
      %p31 = scmp.eq.s32.totalorder %s12, 0
      %p32 = por %p30, %p31
      %p33 = scmp.ne.s32.totalorder %s22, %s25
      %p34 = scmp.eq.s32.totalorder %s17, 1
      %p35 = por %p33, %p34
      %p36 = scmp.ne.s32.totalorder %s25, %s26
      %p37 = scmp.eq.s32.totalorder %s17, 0
      %p38 = por %p36, %p37
      %p39 = scmp.ne.s32.totalorder %s25, %s26
      %p40 = scmp.eq.s32.totalorder %s18, 1
      %p41 = por %p39, %p40
      %p43 = scmp.ne.s32.totalorder %s26, %s42
      %p44 = scmp.eq.s32.totalorder %s18, 0
      %p45 = por %p43, %p44
      %s47 = sadd.s32 %s46, 1
      %p50 = scmp.eq.s32.totalorder %s12, 1
      %p51 = scmp.ne.s32.totalorder %s46, %s48
      %p52 = scmp.eq.s32.totalorder %s12, 0
      %p53 = por %p51, %p52
      %p54 = scmp.ne.s32.totalorder %s46, %s48
      %p55 = scmp.eq.s32.totalorder %s17, 1
      %p56 = por %p54, %p55
      %p57 = scmp.ne.s32.totalorder %s48, %s49
      %p58 = scmp.eq.s32.totalorder %s17, 0
      %p59 = por %p57, %p58
      %p60 = scmp.ne.s32.totalorder %s48, %s49
      %p61 = scmp.eq.s32.totalorder %s18, 1
      %p62 = por %p60, %p61
      %p64 = scmp.ne.s32.totalorder %s49, %s63
      %p65 = scmp.eq.s32.totalorder %s18, 0
      %p66 = por %p64, %p65
      %s68 = sadd.s32 %s67, 1
      %p71 = scmp.eq.s32.totalorder %s12, 1
      %p72 = scmp.ne.s32.totalorder %s67, %s69
      %p73 = scmp.eq.s32.totalorder %s12, 0
      %p74 = por %p72, %p73
      %p75 = scmp.ne.s32.totalorder %s67, %s69
      %p76 = scmp.eq.s32.totalorder %s17, 1
      %p77 = por %p75, %p76
      %p78 = scmp.ne.s32.totalorder %s69, %s70
      %p79 = scmp.eq.s32.totalorder %s17, 0
      %p80 = por %p78, %p79
      %p81 = scmp.ne.s32.totalorder %s69, %s70
      %p82 = scmp.eq.s32.totalorder %s18, 1
      %p83 = por %p81, %p82
      %p85 = scmp.ne.s32.totalorder %s70, %s84
      %p86 = scmp.eq.s32.totalorder %s18, 0
      %p87 = por %p85, %p86
      %s88 = ssub.s32 %s12, %s19
      %p89 = scmp.eq.s32.totalorder %s88, 0
      %s91 = sadd.s32 %s90, 1
      %s92 = scalar_select %p89, %s90, %s91
      %p95 = pneg %p89
      %p96 = scmp.eq.s32.totalorder %s12, 1
      %p97 = por %p95, %p96
      %p98 = scmp.ne.s32.totalorder %s90, %s93
      %p99 = scmp.eq.s32.totalorder %s12, 0
      %p100 = por %p98, %p99
      %p101 = scmp.ne.s32.totalorder %s90, %s93
      %p102 = scmp.eq.s32.totalorder %s17, 1
      %p103 = por %p101, %p102
      %p104 = scmp.ne.s32.totalorder %s93, %s94
      %p105 = scmp.eq.s32.totalorder %s17, 0
      %p106 = por %p104, %p105
      %p107 = scmp.ne.s32.totalorder %s93, %s94
      %p108 = scmp.eq.s32.totalorder %s18, 1
      %p109 = por %p107, %p108
      %p111 = scmp.ne.s32.totalorder %s94, %s110
      %p112 = scmp.eq.s32.totalorder %s18, 0
      %p113 = por %p111, %p112
      %p114 = scmp.le.s32.totalorder 1, %s12
      %p115 = scmp.lt.s32.totalorder %s12, 3
      %p116 = pnand %p114, %p115
      %p117 = pneg %p116
      // Predicated region
      $region9: #{tpu_custom_call.1} parent=5 // pred_check
        _
      $region10: #{tpu_custom_call.1} parent=5 // pred_check_branch
        %119 = sbr.rel (%p116) target = $region12
      $region11: #{tpu_custom_call.1} parent=5 // pred_region
        %s120 = ssub.s32 %s12, 1
        // Predicated region
        $region13: #{tpu_custom_call.1} parent=11 // pred_check
          %p121 = pneg %p59
        $region14: #{tpu_custom_call.1} parent=11 // pred_check_branch
          %123 = sbr.rel (%p121) target = $region16
        $region15: #{tpu_custom_call.1} parent=11 // pred_region
          _
        $region16: #{tpu_custom_call.1} parent=11 // pred_fallthru
          _
        // Predicated region
        $region17: #{tpu_custom_call.1} parent=11 // pred_check
          %p124 = pneg %p80
        $region18: #{tpu_custom_call.1} parent=11 // pred_check_branch
          %126 = sbr.rel (%p124) target = $region20
        $region19: #{tpu_custom_call.1} parent=11 // pred_region
          _
        $region20: #{tpu_custom_call.1} parent=11 // pred_fallthru
          _
      $region12: #{tpu_custom_call.1} parent=5 // pred_fallthru
        _
      %p127 = scmp.lt.s32.totalorder %s12, 2
      // Predicated region
      $region21: #{tpu_custom_call.1} parent=5 // pred_check
        %p128 = pneg %p127
      $region22: #{tpu_custom_call.1} parent=5 // pred_check_branch
        %130 = sbr.rel (%p128) target = $region24
      $region23: #{tpu_custom_call.1} parent=5 // pred_region
        // Predicated region
        $region25: #{tpu_custom_call.1} parent=23 // pred_check
          %p131 = pneg %p32
        $region26: #{tpu_custom_call.1} parent=23 // pred_check_branch
          %133 = sbr.rel (%p131) target = $region28
        $region27: #{tpu_custom_call.1} parent=23 // pred_region
          %s134 = smul.u32 8, %s12
          %p135 = scmp.lt.s32.totalorder %s134, 15
          %s136 = scalar_select %p135, %s134, 15
          %s137 = smul.addr %s136, 4
          %s138 = smul.addr %s137, 8
          %s139 = scalar_lea.vmem %s0, %s138
          %s140 = smul.u32 8, %s12
        $region28: #{tpu_custom_call.1} parent=23 // pred_fallthru
          _
      $region24: #{tpu_custom_call.1} parent=5 // pred_fallthru
        _
      %p141 = scmp.le.s32.totalorder 1, %s12
      %p142 = scmp.lt.s32.totalorder %s12, 3
      %p143 = pnand %p141, %p142
      %p144 = pneg %p143
      // Predicated region
      $region29: #{tpu_custom_call.1} parent=5 // pred_check
        _
      $region30: #{tpu_custom_call.1} parent=5 // pred_check_branch
        %146 = sbr.rel (%p143) target = $region32
      $region31: #{tpu_custom_call.1} parent=5 // pred_region
        %s147 = ssub.s32 %s12, 1
        %s148 = smul.u32 8, %s17
        %p149 = scmp.lt.s32.totalorder %s148, 15
        %s150 = scalar_select %p149, %s148, 15
        %s151 = smul.addr %s150, 4
        %s152 = smul.addr %s151, 8
        %s153 = scalar_lea.vmem %s0, %s152
        %p154 = pneg %p38
        %p155 = pneg %p35
        %p156 = pneg %p59
        %p157 = pneg %p56
        %p158 = pneg %p80
        %p159 = pneg %p77
        %p160 = pneg %p106
        %p161 = pneg %p103
        %s162 = sand.u32 %s93, 1
        %s163 = scalar_lea.sflag [#allocation3], %s162
        %s164 = sand.u32 %s93, 1
        %s165 = smul.addr %s164, 8
        %s166 = scalar_lea.vmem [#allocation2], %s165
        %s167 = smul.u32 8, %s17
        %p168 = scmp.lt.s32.totalorder %s167, 15
        %s169 = scalar_select %p168, %s167, 15
        %s170 = smul.addr %s169, 4
        %s171 = smul.addr %s170, 8
        %s172 = scalar_lea.vmem %s0, %s171
        %s173 = smul.u32 8, %s17
        %v174 = vld [vmem:[%s172] sm:$0xff]
        %v175 = vld [vmem:[%s172 + $0x8] sm:$0xff]
        %v176 = vld [vmem:[%s172 + $0x10] sm:$0xff]
        %v177 = vld [vmem:[%s172 + $0x18] sm:$0xff]
        %v178 = vld [vmem:[%s172 + $0x20] sm:$0xff]
        %v179 = vld [vmem:[%s172 + $0x28] sm:$0xff]
        %v180 = vld [vmem:[%s172 + $0x30] sm:$0xff]
        %v181 = vld [vmem:[%s172 + $0x38] sm:$0xff]
        %v182 = vld [vmem:[%s172 + $0x40] sm:$0xff]
        %v183 = vld [vmem:[%s172 + $0x48] sm:$0xff]
        %v184 = vld [vmem:[%s172 + $0x50] sm:$0xff]
        %v185 = vld [vmem:[%s172 + $0x58] sm:$0xff]
        %v186 = vld [vmem:[%s172 + $0x60] sm:$0xff]
        %v187 = vld [vmem:[%s172 + $0x68] sm:$0xff]
        %v188 = vld [vmem:[%s172 + $0x70] sm:$0xff]
        %v189 = vld [vmem:[%s172 + $0x78] sm:$0xff]
        %v190 = vld [vmem:[%s172 + $0x80] sm:$0xff]
        %v191 = vld [vmem:[%s172 + $0x88] sm:$0xff]
        %v192 = vld [vmem:[%s172 + $0x90] sm:$0xff]
        %v193 = vld [vmem:[%s172 + $0x98] sm:$0xff]
        %v194 = vld [vmem:[%s172 + $0xa0] sm:$0xff]
        %v195 = vld [vmem:[%s172 + $0xa8] sm:$0xff]
        %v196 = vld [vmem:[%s172 + $0xb0] sm:$0xff]
        %v197 = vld [vmem:[%s172 + $0xb8] sm:$0xff]
        %v198 = vld [vmem:[%s172 + $0xc0] sm:$0xff]
        %v199 = vld [vmem:[%s172 + $0xc8] sm:$0xff]
        %v200 = vld [vmem:[%s172 + $0xd0] sm:$0xff]
        %v201 = vld [vmem:[%s172 + $0xd8] sm:$0xff]
        %v202 = vld [vmem:[%s172 + $0xe0] sm:$0xff]
        %v203 = vld [vmem:[%s172 + $0xe8] sm:$0xff]
        %v204 = vld [vmem:[%s172 + $0xf0] sm:$0xff]
        %v205 = vld [vmem:[%s172 + $0xf8] sm:$0xff]
        %vm206 = vcmask 130048
        %v208 = vsel %vm206, %v174, 0
        %v211 = vsel %vm206, %v175, 0
        %v214 = vsel %vm206, %v176, 0
        %v217 = vsel %vm206, %v177, 0
        %219 = vmatpush.xpose.msra.mxu0 0.0
        %220 = vmatpush.xpose.msra.mxu0 0.0
        %221 = vmatpush.xpose.msra.mxu0 0.0
        %222 = vmatpush.xpose.msra.mxu0 0.0
        %223 = vmatpush.xpose.msra.mxu0 0.0
        %224 = vmatpush.xpose.msra.mxu0 0.0
        %225 = vmatpush.xpose.msra.mxu0 0.0
        %226 = vmatpush.xpose.msra.mxu0 0.0
        %227 = vmatpush.xpose.msra.mxu0 0.0
        %228 = vmatpush.xpose.msra.mxu0 0.0
        %229 = vmatpush.xpose.msra.mxu0 0.0
        %230 = vmatpush.xpose.msra.mxu0 0.0
        %231 = vmatpush.xpose.msra.mxu0 %v217
        %232 = vmatpush.xpose.msra.mxu0 %v214
        %233 = vmatpush.xpose.msra.mxu0 %v211
        %234 = vmatpush.xpose.msra.mxu0 %v208
        %235 = vmatmul.f32.gmra.mxu0 %v208
        %v236 = vpop.f32.mrf.mxu0
        %v237 = vadd.f32 0.0, %v236
        %238 = vmatmul.f32.gmra.mxu0 %v211
        %v239 = vpop.f32.mrf.mxu0
        %v240 = vadd.f32 0.0, %v239
        %241 = vmatmul.f32.gmra.mxu0 %v214
        %v242 = vpop.f32.mrf.mxu0
        %v243 = vadd.f32 0.0, %v242
        %244 = vmatmul.f32.gmra.mxu0 %v217
        %v245 = vpop.f32.mrf.mxu0
        %v246 = vadd.f32 0.0, %v245
        %247 = vdwg.mxu0
        %v249 = vsel %vm206, %v178, 0
        %v252 = vsel %vm206, %v179, 0
        %v255 = vsel %vm206, %v180, 0
        %v258 = vsel %vm206, %v181, 0
        %260 = vmatpush.xpose.msra.mxu0 0.0
        %261 = vmatpush.xpose.msra.mxu0 0.0
        %262 = vmatpush.xpose.msra.mxu0 0.0
        %263 = vmatpush.xpose.msra.mxu0 0.0
        %264 = vmatpush.xpose.msra.mxu0 0.0
        %265 = vmatpush.xpose.msra.mxu0 0.0
        %266 = vmatpush.xpose.msra.mxu0 0.0
        %267 = vmatpush.xpose.msra.mxu0 0.0
        %268 = vmatpush.xpose.msra.mxu0 0.0
        %269 = vmatpush.xpose.msra.mxu0 0.0
        %270 = vmatpush.xpose.msra.mxu0 0.0
        %271 = vmatpush.xpose.msra.mxu0 0.0
        %272 = vmatpush.xpose.msra.mxu0 %v258
        %273 = vmatpush.xpose.msra.mxu0 %v255
        %274 = vmatpush.xpose.msra.mxu0 %v252
        %275 = vmatpush.xpose.msra.mxu0 %v249
        %276 = vmatmul.f32.gmra.mxu0 %v249
        %v277 = vpop.f32.mrf.mxu0
        %v278 = vadd.f32 0.0, %v277
        %279 = vmatmul.f32.gmra.mxu0 %v252
        %v280 = vpop.f32.mrf.mxu0
        %v281 = vadd.f32 0.0, %v280
        %282 = vmatmul.f32.gmra.mxu0 %v255
        %v283 = vpop.f32.mrf.mxu0
        %v284 = vadd.f32 0.0, %v283
        %285 = vmatmul.f32.gmra.mxu0 %v258
        %v286 = vpop.f32.mrf.mxu0
        %v287 = vadd.f32 0.0, %v286
        %288 = vdwg.mxu0
        %v290 = vsel %vm206, %v182, 0
        %v293 = vsel %vm206, %v183, 0
        %v296 = vsel %vm206, %v184, 0
        %v299 = vsel %vm206, %v185, 0
        %301 = vmatpush.xpose.msra.mxu0 0.0
        %302 = vmatpush.xpose.msra.mxu0 0.0
        %303 = vmatpush.xpose.msra.mxu0 0.0
        %304 = vmatpush.xpose.msra.mxu0 0.0
        %305 = vmatpush.xpose.msra.mxu0 0.0
        %306 = vmatpush.xpose.msra.mxu0 0.0
        %307 = vmatpush.xpose.msra.mxu0 0.0
        %308 = vmatpush.xpose.msra.mxu0 0.0
        %309 = vmatpush.xpose.msra.mxu0 0.0
        %310 = vmatpush.xpose.msra.mxu0 0.0
        %311 = vmatpush.xpose.msra.mxu0 0.0
        %312 = vmatpush.xpose.msra.mxu0 0.0
        %313 = vmatpush.xpose.msra.mxu0 %v299
        %314 = vmatpush.xpose.msra.mxu0 %v296
        %315 = vmatpush.xpose.msra.mxu0 %v293
        %316 = vmatpush.xpose.msra.mxu0 %v290
        %317 = vmatmul.f32.gmra.mxu0 %v290
        %v318 = vpop.f32.mrf.mxu0
        %v319 = vadd.f32 0.0, %v318
        %320 = vmatmul.f32.gmra.mxu0 %v293
        %v321 = vpop.f32.mrf.mxu0
        %v322 = vadd.f32 0.0, %v321
        %323 = vmatmul.f32.gmra.mxu0 %v296
        %v324 = vpop.f32.mrf.mxu0
        %v325 = vadd.f32 0.0, %v324
        %326 = vmatmul.f32.gmra.mxu0 %v299
        %v327 = vpop.f32.mrf.mxu0
        %v328 = vadd.f32 0.0, %v327
        %329 = vdwg.mxu0
        %v331 = vsel %vm206, %v186, 0
        %v334 = vsel %vm206, %v187, 0
        %v337 = vsel %vm206, %v188, 0
        %v340 = vsel %vm206, %v189, 0
        %342 = vmatpush.xpose.msra.mxu0 0.0
        %343 = vmatpush.xpose.msra.mxu0 0.0
        %344 = vmatpush.xpose.msra.mxu0 0.0
        %345 = vmatpush.xpose.msra.mxu0 0.0
        %346 = vmatpush.xpose.msra.mxu0 0.0
        %347 = vmatpush.xpose.msra.mxu0 0.0
        %348 = vmatpush.xpose.msra.mxu0 0.0
        %349 = vmatpush.xpose.msra.mxu0 0.0
        %350 = vmatpush.xpose.msra.mxu0 0.0
        %351 = vmatpush.xpose.msra.mxu0 0.0
        %352 = vmatpush.xpose.msra.mxu0 0.0
        %353 = vmatpush.xpose.msra.mxu0 0.0
        %354 = vmatpush.xpose.msra.mxu0 %v340
        %355 = vmatpush.xpose.msra.mxu0 %v337
        %356 = vmatpush.xpose.msra.mxu0 %v334
        %357 = vmatpush.xpose.msra.mxu0 %v331
        %358 = vmatmul.f32.gmra.mxu0 %v331
        %v359 = vpop.f32.mrf.mxu0
        %v360 = vadd.f32 0.0, %v359
        %361 = vmatmul.f32.gmra.mxu0 %v334
        %v362 = vpop.f32.mrf.mxu0
        %v363 = vadd.f32 0.0, %v362
        %364 = vmatmul.f32.gmra.mxu0 %v337
        %v365 = vpop.f32.mrf.mxu0
        %v366 = vadd.f32 0.0, %v365
        %367 = vmatmul.f32.gmra.mxu0 %v340
        %v368 = vpop.f32.mrf.mxu0
        %v369 = vadd.f32 0.0, %v368
        %370 = vdwg.mxu0
        %v372 = vsel %vm206, %v190, 0
        %v375 = vsel %vm206, %v191, 0
        %v378 = vsel %vm206, %v192, 0
        %v381 = vsel %vm206, %v193, 0
        %383 = vmatpush.xpose.msra.mxu0 0.0
        %384 = vmatpush.xpose.msra.mxu0 0.0
        %385 = vmatpush.xpose.msra.mxu0 0.0
        %386 = vmatpush.xpose.msra.mxu0 0.0
        %387 = vmatpush.xpose.msra.mxu0 0.0
        %388 = vmatpush.xpose.msra.mxu0 0.0
        %389 = vmatpush.xpose.msra.mxu0 0.0
        %390 = vmatpush.xpose.msra.mxu0 0.0
        %391 = vmatpush.xpose.msra.mxu0 0.0
        %392 = vmatpush.xpose.msra.mxu0 0.0
        %393 = vmatpush.xpose.msra.mxu0 0.0
        %394 = vmatpush.xpose.msra.mxu0 0.0
        %395 = vmatpush.xpose.msra.mxu0 %v381
        %396 = vmatpush.xpose.msra.mxu0 %v378
        %397 = vmatpush.xpose.msra.mxu0 %v375
        %398 = vmatpush.xpose.msra.mxu0 %v372
        %399 = vmatmul.f32.gmra.mxu0 %v372
        %v400 = vpop.f32.mrf.mxu0
        %v401 = vadd.f32 0.0, %v400
        %402 = vmatmul.f32.gmra.mxu0 %v375
        %v403 = vpop.f32.mrf.mxu0
        %v404 = vadd.f32 0.0, %v403
        %405 = vmatmul.f32.gmra.mxu0 %v378
        %v406 = vpop.f32.mrf.mxu0
        %v407 = vadd.f32 0.0, %v406
        %408 = vmatmul.f32.gmra.mxu0 %v381
        %v409 = vpop.f32.mrf.mxu0
        %v410 = vadd.f32 0.0, %v409
        %411 = vdwg.mxu0
        %v413 = vsel %vm206, %v194, 0
        %v416 = vsel %vm206, %v195, 0
        %v419 = vsel %vm206, %v196, 0
        %v422 = vsel %vm206, %v197, 0
        %424 = vmatpush.xpose.msra.mxu0 0.0
        %425 = vmatpush.xpose.msra.mxu0 0.0
        %426 = vmatpush.xpose.msra.mxu0 0.0
        %427 = vmatpush.xpose.msra.mxu0 0.0
        %428 = vmatpush.xpose.msra.mxu0 0.0
        %429 = vmatpush.xpose.msra.mxu0 0.0
        %430 = vmatpush.xpose.msra.mxu0 0.0
        %431 = vmatpush.xpose.msra.mxu0 0.0
        %432 = vmatpush.xpose.msra.mxu0 0.0
        %433 = vmatpush.xpose.msra.mxu0 0.0
        %434 = vmatpush.xpose.msra.mxu0 0.0
        %435 = vmatpush.xpose.msra.mxu0 0.0
        %436 = vmatpush.xpose.msra.mxu0 %v422
        %437 = vmatpush.xpose.msra.mxu0 %v419
        %438 = vmatpush.xpose.msra.mxu0 %v416
        %439 = vmatpush.xpose.msra.mxu0 %v413
        %440 = vmatmul.f32.gmra.mxu0 %v413
        %v441 = vpop.f32.mrf.mxu0
        %v442 = vadd.f32 0.0, %v441
        %443 = vmatmul.f32.gmra.mxu0 %v416
        %v444 = vpop.f32.mrf.mxu0
        %v445 = vadd.f32 0.0, %v444
        %446 = vmatmul.f32.gmra.mxu0 %v419
        %v447 = vpop.f32.mrf.mxu0
        %v448 = vadd.f32 0.0, %v447
        %449 = vmatmul.f32.gmra.mxu0 %v422
        %v450 = vpop.f32.mrf.mxu0
        %v451 = vadd.f32 0.0, %v450
        %452 = vdwg.mxu0
        %v454 = vsel %vm206, %v198, 0
        %v457 = vsel %vm206, %v199, 0
        %v460 = vsel %vm206, %v200, 0
        %v463 = vsel %vm206, %v201, 0
        %465 = vmatpush.xpose.msra.mxu0 0.0
        %466 = vmatpush.xpose.msra.mxu0 0.0
        %467 = vmatpush.xpose.msra.mxu0 0.0
        %468 = vmatpush.xpose.msra.mxu0 0.0
        %469 = vmatpush.xpose.msra.mxu0 0.0
        %470 = vmatpush.xpose.msra.mxu0 0.0
        %471 = vmatpush.xpose.msra.mxu0 0.0
        %472 = vmatpush.xpose.msra.mxu0 0.0
        %473 = vmatpush.xpose.msra.mxu0 0.0
        %474 = vmatpush.xpose.msra.mxu0 0.0
        %475 = vmatpush.xpose.msra.mxu0 0.0
        %476 = vmatpush.xpose.msra.mxu0 0.0
        %477 = vmatpush.xpose.msra.mxu0 %v463
        %478 = vmatpush.xpose.msra.mxu0 %v460
        %479 = vmatpush.xpose.msra.mxu0 %v457
        %480 = vmatpush.xpose.msra.mxu0 %v454
        %481 = vmatmul.f32.gmra.mxu0 %v454
        %v482 = vpop.f32.mrf.mxu0
        %v483 = vadd.f32 0.0, %v482
        %484 = vmatmul.f32.gmra.mxu0 %v457
        %v485 = vpop.f32.mrf.mxu0
        %v486 = vadd.f32 0.0, %v485
        %487 = vmatmul.f32.gmra.mxu0 %v460
        %v488 = vpop.f32.mrf.mxu0
        %v489 = vadd.f32 0.0, %v488
        %490 = vmatmul.f32.gmra.mxu0 %v463
        %v491 = vpop.f32.mrf.mxu0
        %v492 = vadd.f32 0.0, %v491
        %493 = vdwg.mxu0
        %v495 = vsel %vm206, %v202, 0
        %v498 = vsel %vm206, %v203, 0
        %v501 = vsel %vm206, %v204, 0
        %v504 = vsel %vm206, %v205, 0
        %506 = vmatpush.xpose.msra.mxu0 0.0
        %507 = vmatpush.xpose.msra.mxu0 0.0
        %508 = vmatpush.xpose.msra.mxu0 0.0
        %509 = vmatpush.xpose.msra.mxu0 0.0
        %510 = vmatpush.xpose.msra.mxu0 0.0
        %511 = vmatpush.xpose.msra.mxu0 0.0
        %512 = vmatpush.xpose.msra.mxu0 0.0
        %513 = vmatpush.xpose.msra.mxu0 0.0
        %514 = vmatpush.xpose.msra.mxu0 0.0
        %515 = vmatpush.xpose.msra.mxu0 0.0
        %516 = vmatpush.xpose.msra.mxu0 0.0
        %517 = vmatpush.xpose.msra.mxu0 0.0
        %518 = vmatpush.xpose.msra.mxu0 %v504
        %519 = vmatpush.xpose.msra.mxu0 %v501
        %520 = vmatpush.xpose.msra.mxu0 %v498
        %521 = vmatpush.xpose.msra.mxu0 %v495
        %522 = vmatmul.f32.gmra.mxu0 %v495
        %v523 = vpop.f32.mrf.mxu0
        %v524 = vadd.f32 0.0, %v523
        %525 = vmatmul.f32.gmra.mxu0 %v498
        %v526 = vpop.f32.mrf.mxu0
        %v527 = vadd.f32 0.0, %v526
        %528 = vmatmul.f32.gmra.mxu0 %v501
        %v529 = vpop.f32.mrf.mxu0
        %v530 = vadd.f32 0.0, %v529
        %531 = vmatmul.f32.gmra.mxu0 %v504
        %v532 = vpop.f32.mrf.mxu0
        %v533 = vadd.f32 0.0, %v532
        %534 = vdwg.mxu0
        %vm535 = vcmask 261120
        %v536 = vsel %vm535, %v237, inf
        %537 = vmin.xlane.f32.xlu0 %v536
        %v538 = vpop.xlane.xlu0 %537
        %v539 = vsel %vm535, %v240, inf
        %540 = vmin.xlane.f32.xlu0 %v539
        %v541 = vpop.xlane.xlu0 %540
        %v542 = vsel %vm535, %v243, inf
        %543 = vmin.xlane.f32.xlu0 %v542
        %v544 = vpop.xlane.xlu0 %543
        %v545 = vsel %vm535, %v246, inf
        %546 = vmin.xlane.f32.xlu0 %v545
        %v547 = vpop.xlane.xlu0 %546
        %v548 = vsel %vm535, %v278, inf
        %549 = vmin.xlane.f32.xlu0 %v548
        %v550 = vpop.xlane.xlu0 %549
        %v551 = vsel %vm535, %v281, inf
        %552 = vmin.xlane.f32.xlu0 %v551
        %v553 = vpop.xlane.xlu0 %552
        %v554 = vsel %vm535, %v284, inf
        %555 = vmin.xlane.f32.xlu0 %v554
        %v556 = vpop.xlane.xlu0 %555
        %v557 = vsel %vm535, %v287, inf
        %558 = vmin.xlane.f32.xlu0 %v557
        %v559 = vpop.xlane.xlu0 %558
        %v560 = vsel %vm535, %v319, inf
        %561 = vmin.xlane.f32.xlu0 %v560
        %v562 = vpop.xlane.xlu0 %561
        %v563 = vsel %vm535, %v322, inf
        %564 = vmin.xlane.f32.xlu0 %v563
        %v565 = vpop.xlane.xlu0 %564
        %v566 = vsel %vm535, %v325, inf
        %567 = vmin.xlane.f32.xlu0 %v566
        %v568 = vpop.xlane.xlu0 %567
        %v569 = vsel %vm535, %v328, inf
        %570 = vmin.xlane.f32.xlu0 %v569
        %v571 = vpop.xlane.xlu0 %570
        %v572 = vsel %vm535, %v360, inf
        %573 = vmin.xlane.f32.xlu0 %v572
        %v574 = vpop.xlane.xlu0 %573
        %v575 = vsel %vm535, %v363, inf
        %576 = vmin.xlane.f32.xlu0 %v575
        %v577 = vpop.xlane.xlu0 %576
        %v578 = vsel %vm535, %v366, inf
        %579 = vmin.xlane.f32.xlu0 %v578
        %v580 = vpop.xlane.xlu0 %579
        %v581 = vsel %vm535, %v369, inf
        %582 = vmin.xlane.f32.xlu0 %v581
        %v583 = vpop.xlane.xlu0 %582
        %v584 = vsel %vm535, %v401, inf
        %585 = vmin.xlane.f32.xlu0 %v584
        %v586 = vpop.xlane.xlu0 %585
        %v587 = vsel %vm535, %v404, inf
        %588 = vmin.xlane.f32.xlu0 %v587
        %v589 = vpop.xlane.xlu0 %588
        %v590 = vsel %vm535, %v407, inf
        %591 = vmin.xlane.f32.xlu0 %v590
        %v592 = vpop.xlane.xlu0 %591
        %v593 = vsel %vm535, %v410, inf
        %594 = vmin.xlane.f32.xlu0 %v593
        %v595 = vpop.xlane.xlu0 %594
        %v596 = vsel %vm535, %v442, inf
        %597 = vmin.xlane.f32.xlu0 %v596
        %v598 = vpop.xlane.xlu0 %597
        %v599 = vsel %vm535, %v445, inf
        %600 = vmin.xlane.f32.xlu0 %v599
        %v601 = vpop.xlane.xlu0 %600
        %v602 = vsel %vm535, %v448, inf
        %603 = vmin.xlane.f32.xlu0 %v602
        %v604 = vpop.xlane.xlu0 %603
        %v605 = vsel %vm535, %v451, inf
        %606 = vmin.xlane.f32.xlu0 %v605
        %v607 = vpop.xlane.xlu0 %606
        %v608 = vsel %vm535, %v483, inf
        %609 = vmin.xlane.f32.xlu0 %v608
        %v610 = vpop.xlane.xlu0 %609
        %v611 = vsel %vm535, %v486, inf
        %612 = vmin.xlane.f32.xlu0 %v611
        %v613 = vpop.xlane.xlu0 %612
        %v614 = vsel %vm535, %v489, inf
        %615 = vmin.xlane.f32.xlu0 %v614
        %v616 = vpop.xlane.xlu0 %615
        %v617 = vsel %vm535, %v492, inf
        %618 = vmin.xlane.f32.xlu0 %v617
        %v619 = vpop.xlane.xlu0 %618
        %v620 = vsel %vm535, %v524, inf
        %621 = vmin.xlane.f32.xlu0 %v620
        %v622 = vpop.xlane.xlu0 %621
        %v623 = vsel %vm535, %v527, inf
        %624 = vmin.xlane.f32.xlu0 %v623
        %v625 = vpop.xlane.xlu0 %624
        %v626 = vsel %vm535, %v530, inf
        %627 = vmin.xlane.f32.xlu0 %v626
        %v628 = vpop.xlane.xlu0 %627
        %v629 = vsel %vm535, %v533, inf
        %630 = vmin.xlane.f32.xlu0 %v629
        %v631 = vpop.xlane.xlu0 %630
        %v632 = vmin.f32 %v538, %v541
        %v633 = vmin.f32 %v632, %v544
        %v634 = vmin.f32 %v633, %v547
        %v635 = vrot.slane %v634, 4
        %v636 = vmin.f32 %v634, %v635
        %v637 = vrot.slane %v636, 2
        %v638 = vmin.f32 %v636, %v637
        %v639 = vrot.slane %v638, 1
        %v640 = vmin.f32 %v638, %v639
        %v641 = vmin.f32 %v550, %v553
        %v642 = vmin.f32 %v641, %v556
        %v643 = vmin.f32 %v642, %v559
        %v644 = vrot.slane %v643, 4
        %v645 = vmin.f32 %v643, %v644
        %v646 = vrot.slane %v645, 2
        %v647 = vmin.f32 %v645, %v646
        %v648 = vrot.slane %v647, 1
        %v649 = vmin.f32 %v647, %v648
        %v650 = vmin.f32 %v562, %v565
        %v651 = vmin.f32 %v650, %v568
        %v652 = vmin.f32 %v651, %v571
        %v653 = vrot.slane %v652, 4
        %v654 = vmin.f32 %v652, %v653
        %v655 = vrot.slane %v654, 2
        %v656 = vmin.f32 %v654, %v655
        %v657 = vrot.slane %v656, 1
        %v658 = vmin.f32 %v656, %v657
        %v659 = vmin.f32 %v574, %v577
        %v660 = vmin.f32 %v659, %v580
        %v661 = vmin.f32 %v660, %v583
        %v662 = vrot.slane %v661, 4
        %v663 = vmin.f32 %v661, %v662
        %v664 = vrot.slane %v663, 2
        %v665 = vmin.f32 %v663, %v664
        %v666 = vrot.slane %v665, 1
        %v667 = vmin.f32 %v665, %v666
        %v668 = vmin.f32 %v586, %v589
        %v669 = vmin.f32 %v668, %v592
        %v670 = vmin.f32 %v669, %v595
        %v671 = vrot.slane %v670, 4
        %v672 = vmin.f32 %v670, %v671
        %v673 = vrot.slane %v672, 2
        %v674 = vmin.f32 %v672, %v673
        %v675 = vrot.slane %v674, 1
        %v676 = vmin.f32 %v674, %v675
        %v677 = vmin.f32 %v598, %v601
        %v678 = vmin.f32 %v677, %v604
        %v679 = vmin.f32 %v678, %v607
        %v680 = vrot.slane %v679, 4
        %v681 = vmin.f32 %v679, %v680
        %v682 = vrot.slane %v681, 2
        %v683 = vmin.f32 %v681, %v682
        %v684 = vrot.slane %v683, 1
        %v685 = vmin.f32 %v683, %v684
        %v686 = vmin.f32 %v610, %v613
        %v687 = vmin.f32 %v686, %v616
        %v688 = vmin.f32 %v687, %v619
        %v689 = vrot.slane %v688, 4
        %v690 = vmin.f32 %v688, %v689
        %v691 = vrot.slane %v690, 2
        %v692 = vmin.f32 %v690, %v691
        %v693 = vrot.slane %v692, 1
        %v694 = vmin.f32 %v692, %v693
        %v695 = vmin.f32 %v622, %v625
        %v696 = vmin.f32 %v695, %v628
        %v697 = vmin.f32 %v696, %v631
        %v698 = vrot.slane %v697, 4
        %v699 = vmin.f32 %v697, %v698
        %v700 = vrot.slane %v699, 2
        %v701 = vmin.f32 %v699, %v700
        %v702 = vrot.slane %v701, 1
        %v703 = vmin.f32 %v701, %v702
        %v704 = vsel %vm535, %v237, -inf
        %705 = vmax.xlane.f32.xlu0 %v704
        %v706 = vpop.xlane.xlu0 %705
        %v707 = vsel %vm535, %v240, -inf
        %708 = vmax.xlane.f32.xlu0 %v707
        %v709 = vpop.xlane.xlu0 %708
        %v710 = vsel %vm535, %v243, -inf
        %711 = vmax.xlane.f32.xlu0 %v710
        %v712 = vpop.xlane.xlu0 %711
        %v713 = vsel %vm535, %v246, -inf
        %714 = vmax.xlane.f32.xlu0 %v713
        %v715 = vpop.xlane.xlu0 %714
        %v716 = vsel %vm535, %v278, -inf
        %717 = vmax.xlane.f32.xlu0 %v716
        %v718 = vpop.xlane.xlu0 %717
        %v719 = vsel %vm535, %v281, -inf
        %720 = vmax.xlane.f32.xlu0 %v719
        %v721 = vpop.xlane.xlu0 %720
        %v722 = vsel %vm535, %v284, -inf
        %723 = vmax.xlane.f32.xlu0 %v722
        %v724 = vpop.xlane.xlu0 %723
        %v725 = vsel %vm535, %v287, -inf
        %726 = vmax.xlane.f32.xlu0 %v725
        %v727 = vpop.xlane.xlu0 %726
        %v728 = vsel %vm535, %v319, -inf
        %729 = vmax.xlane.f32.xlu0 %v728
        %v730 = vpop.xlane.xlu0 %729
        %v731 = vsel %vm535, %v322, -inf
        %732 = vmax.xlane.f32.xlu0 %v731
        %v733 = vpop.xlane.xlu0 %732
        %v734 = vsel %vm535, %v325, -inf
        %735 = vmax.xlane.f32.xlu0 %v734
        %v736 = vpop.xlane.xlu0 %735
        %v737 = vsel %vm535, %v328, -inf
        %738 = vmax.xlane.f32.xlu0 %v737
        %v739 = vpop.xlane.xlu0 %738
        %v740 = vsel %vm535, %v360, -inf
        %741 = vmax.xlane.f32.xlu0 %v740
        %v742 = vpop.xlane.xlu0 %741
        %v743 = vsel %vm535, %v363, -inf
        %744 = vmax.xlane.f32.xlu0 %v743
        %v745 = vpop.xlane.xlu0 %744
        %v746 = vsel %vm535, %v366, -inf
        %747 = vmax.xlane.f32.xlu0 %v746
        %v748 = vpop.xlane.xlu0 %747
        %v749 = vsel %vm535, %v369, -inf
        %750 = vmax.xlane.f32.xlu0 %v749
        %v751 = vpop.xlane.xlu0 %750
        %v752 = vsel %vm535, %v401, -inf
        %753 = vmax.xlane.f32.xlu0 %v752
        %v754 = vpop.xlane.xlu0 %753
        %v755 = vsel %vm535, %v404, -inf
        %756 = vmax.xlane.f32.xlu0 %v755
        %v757 = vpop.xlane.xlu0 %756
        %v758 = vsel %vm535, %v407, -inf
        %759 = vmax.xlane.f32.xlu0 %v758
        %v760 = vpop.xlane.xlu0 %759
        %v761 = vsel %vm535, %v410, -inf
        %762 = vmax.xlane.f32.xlu0 %v761
        %v763 = vpop.xlane.xlu0 %762
        %v764 = vsel %vm535, %v442, -inf
        %765 = vmax.xlane.f32.xlu0 %v764
        %v766 = vpop.xlane.xlu0 %765
        %v767 = vsel %vm535, %v445, -inf
        %768 = vmax.xlane.f32.xlu0 %v767
        %v769 = vpop.xlane.xlu0 %768
        %v770 = vsel %vm535, %v448, -inf
        %771 = vmax.xlane.f32.xlu0 %v770
        %v772 = vpop.xlane.xlu0 %771
        %v773 = vsel %vm535, %v451, -inf
        %774 = vmax.xlane.f32.xlu0 %v773
        %v775 = vpop.xlane.xlu0 %774
        %v776 = vsel %vm535, %v483, -inf
        %777 = vmax.xlane.f32.xlu0 %v776
        %v778 = vpop.xlane.xlu0 %777
        %v779 = vsel %vm535, %v486, -inf
        %780 = vmax.xlane.f32.xlu0 %v779
        %v781 = vpop.xlane.xlu0 %780
        %v782 = vsel %vm535, %v489, -inf
        %783 = vmax.xlane.f32.xlu0 %v782
        %v784 = vpop.xlane.xlu0 %783
        %v785 = vsel %vm535, %v492, -inf
        %786 = vmax.xlane.f32.xlu0 %v785
        %v787 = vpop.xlane.xlu0 %786
        %v788 = vsel %vm535, %v524, -inf
        %789 = vmax.xlane.f32.xlu0 %v788
        %v790 = vpop.xlane.xlu0 %789
        %v791 = vsel %vm535, %v527, -inf
        %792 = vmax.xlane.f32.xlu0 %v791
        %v793 = vpop.xlane.xlu0 %792
        %v794 = vsel %vm535, %v530, -inf
        %795 = vmax.xlane.f32.xlu0 %v794
        %v796 = vpop.xlane.xlu0 %795
        %v797 = vsel %vm535, %v533, -inf
        %798 = vmax.xlane.f32.xlu0 %v797
        %v799 = vpop.xlane.xlu0 %798
        %v800 = vmax.f32 %v706, %v709
        %v801 = vmax.f32 %v800, %v712
        %v802 = vmax.f32 %v801, %v715
        %v803 = vrot.slane %v802, 4
        %v804 = vmax.f32 %v802, %v803
        %v805 = vrot.slane %v804, 2
        %v806 = vmax.f32 %v804, %v805
        %v807 = vrot.slane %v806, 1
        %v808 = vmax.f32 %v806, %v807
        %v809 = vmax.f32 %v718, %v721
        %v810 = vmax.f32 %v809, %v724
        %v811 = vmax.f32 %v810, %v727
        %v812 = vrot.slane %v811, 4
        %v813 = vmax.f32 %v811, %v812
        %v814 = vrot.slane %v813, 2
        %v815 = vmax.f32 %v813, %v814
        %v816 = vrot.slane %v815, 1
        %v817 = vmax.f32 %v815, %v816
        %v818 = vmax.f32 %v730, %v733
        %v819 = vmax.f32 %v818, %v736
        %v820 = vmax.f32 %v819, %v739
        %v821 = vrot.slane %v820, 4
        %v822 = vmax.f32 %v820, %v821
        %v823 = vrot.slane %v822, 2
        %v824 = vmax.f32 %v822, %v823
        %v825 = vrot.slane %v824, 1
        %v826 = vmax.f32 %v824, %v825
        %v827 = vmax.f32 %v742, %v745
        %v828 = vmax.f32 %v827, %v748
        %v829 = vmax.f32 %v828, %v751
        %v830 = vrot.slane %v829, 4
        %v831 = vmax.f32 %v829, %v830
        %v832 = vrot.slane %v831, 2
        %v833 = vmax.f32 %v831, %v832
        %v834 = vrot.slane %v833, 1
        %v835 = vmax.f32 %v833, %v834
        %v836 = vmax.f32 %v754, %v757
        %v837 = vmax.f32 %v836, %v760
        %v838 = vmax.f32 %v837, %v763
        %v839 = vrot.slane %v838, 4
        %v840 = vmax.f32 %v838, %v839
        %v841 = vrot.slane %v840, 2
        %v842 = vmax.f32 %v840, %v841
        %v843 = vrot.slane %v842, 1
        %v844 = vmax.f32 %v842, %v843
        %v845 = vmax.f32 %v766, %v769
        %v846 = vmax.f32 %v845, %v772
        %v847 = vmax.f32 %v846, %v775
        %v848 = vrot.slane %v847, 4
        %v849 = vmax.f32 %v847, %v848
        %v850 = vrot.slane %v849, 2
        %v851 = vmax.f32 %v849, %v850
        %v852 = vrot.slane %v851, 1
        %v853 = vmax.f32 %v851, %v852
        %v854 = vmax.f32 %v778, %v781
        %v855 = vmax.f32 %v854, %v784
        %v856 = vmax.f32 %v855, %v787
        %v857 = vrot.slane %v856, 4
        %v858 = vmax.f32 %v856, %v857
        %v859 = vrot.slane %v858, 2
        %v860 = vmax.f32 %v858, %v859
        %v861 = vrot.slane %v860, 1
        %v862 = vmax.f32 %v860, %v861
        %v863 = vmax.f32 %v790, %v793
        %v864 = vmax.f32 %v863, %v796
        %v865 = vmax.f32 %v864, %v799
        %v866 = vrot.slane %v865, 4
        %v867 = vmax.f32 %v865, %v866
        %v868 = vrot.slane %v867, 2
        %v869 = vmax.f32 %v867, %v868
        %v870 = vrot.slane %v869, 1
        %v871 = vmax.f32 %v869, %v870
        %v872 = vsub.f32 %v808, %v640
        %v873 = vsub.f32 %v817, %v649
        %v874 = vsub.f32 %v826, %v658
        %v875 = vsub.f32 %v835, %v667
        %v876 = vsub.f32 %v844, %v676
        %v877 = vsub.f32 %v853, %v685
        %v878 = vsub.f32 %v862, %v694
        %v879 = vsub.f32 %v871, %v703
        %v880 = vrcp.pop %v872
        %v881 = vmul.f32 %v872, %v880
        %v882 = vsub.f32 1.0, %v881
        %v883 = vmul.f32 %v880, %v882
        %v884 = vadd.f32 %v880, %v883
        %vm885 = vweird.f32 %v872
        %vm886 = vweird.f32 %v880
        %vm887 = vmor %vm885, %vm886
        %v888 = vsel %vm887, %v880, %v884
        %v889 = vand.u32 2147483647, %v872
        %vm890 = vcmp.eq.f32.partialorder %v889, 8.507059e+37
        %v891 = vand.u32 %v872, 2147483648
        %v892 = vor.u32 1.1754944e-38, %v891
        %v893 = vsel %vm890, %v892, %v888
        %v894 = vmul.f32 1.0, %v893
        %v895 = vrcp.pop %v873
        %v896 = vmul.f32 %v873, %v895
        %v897 = vsub.f32 1.0, %v896
        %v898 = vmul.f32 %v895, %v897
        %v899 = vadd.f32 %v895, %v898
        %vm900 = vweird.f32 %v873
        %vm901 = vweird.f32 %v895
        %vm902 = vmor %vm900, %vm901
        %v903 = vsel %vm902, %v895, %v899
        %v904 = vand.u32 2147483647, %v873
        %vm905 = vcmp.eq.f32.partialorder %v904, 8.507059e+37
        %v906 = vand.u32 %v873, 2147483648
        %v907 = vor.u32 1.1754944e-38, %v906
        %v908 = vsel %vm905, %v907, %v903
        %v909 = vmul.f32 1.0, %v908
        %v910 = vrcp.pop %v874
        %v911 = vmul.f32 %v874, %v910
        %v912 = vsub.f32 1.0, %v911
        %v913 = vmul.f32 %v910, %v912
        %v914 = vadd.f32 %v910, %v913
        %vm915 = vweird.f32 %v874
        %vm916 = vweird.f32 %v910
        %vm917 = vmor %vm915, %vm916
        %v918 = vsel %vm917, %v910, %v914
        %v919 = vand.u32 2147483647, %v874
        %vm920 = vcmp.eq.f32.partialorder %v919, 8.507059e+37
        %v921 = vand.u32 %v874, 2147483648
        %v922 = vor.u32 1.1754944e-38, %v921
        %v923 = vsel %vm920, %v922, %v918
        %v924 = vmul.f32 1.0, %v923
        %v925 = vrcp.pop %v875
        %v926 = vmul.f32 %v875, %v925
        %v927 = vsub.f32 1.0, %v926
        %v928 = vmul.f32 %v925, %v927
        %v929 = vadd.f32 %v925, %v928
        %vm930 = vweird.f32 %v875
        %vm931 = vweird.f32 %v925
        %vm932 = vmor %vm930, %vm931
        %v933 = vsel %vm932, %v925, %v929
        %v934 = vand.u32 2147483647, %v875
        %vm935 = vcmp.eq.f32.partialorder %v934, 8.507059e+37
        %v936 = vand.u32 %v875, 2147483648
        %v937 = vor.u32 1.1754944e-38, %v936
        %v938 = vsel %vm935, %v937, %v933
        %v939 = vmul.f32 1.0, %v938
        %v940 = vrcp.pop %v876
        %v941 = vmul.f32 %v876, %v940
        %v942 = vsub.f32 1.0, %v941
        %v943 = vmul.f32 %v940, %v942
        %v944 = vadd.f32 %v940, %v943
        %vm945 = vweird.f32 %v876
        %vm946 = vweird.f32 %v940
        %vm947 = vmor %vm945, %vm946
        %v948 = vsel %vm947, %v940, %v944
        %v949 = vand.u32 2147483647, %v876
        %vm950 = vcmp.eq.f32.partialorder %v949, 8.507059e+37
        %v951 = vand.u32 %v876, 2147483648
        %v952 = vor.u32 1.1754944e-38, %v951
        %v953 = vsel %vm950, %v952, %v948
        %v954 = vmul.f32 1.0, %v953
        %v955 = vrcp.pop %v877
        %v956 = vmul.f32 %v877, %v955
        %v957 = vsub.f32 1.0, %v956
        %v958 = vmul.f32 %v955, %v957
        %v959 = vadd.f32 %v955, %v958
        %vm960 = vweird.f32 %v877
        %vm961 = vweird.f32 %v955
        %vm962 = vmor %vm960, %vm961
        %v963 = vsel %vm962, %v955, %v959
        %v964 = vand.u32 2147483647, %v877
        %vm965 = vcmp.eq.f32.partialorder %v964, 8.507059e+37
        %v966 = vand.u32 %v877, 2147483648
        %v967 = vor.u32 1.1754944e-38, %v966
        %v968 = vsel %vm965, %v967, %v963
        %v969 = vmul.f32 1.0, %v968
        %v970 = vrcp.pop %v878
        %v971 = vmul.f32 %v878, %v970
        %v972 = vsub.f32 1.0, %v971
        %v973 = vmul.f32 %v970, %v972
        %v974 = vadd.f32 %v970, %v973
        %vm975 = vweird.f32 %v878
        %vm976 = vweird.f32 %v970
        %vm977 = vmor %vm975, %vm976
        %v978 = vsel %vm977, %v970, %v974
        %v979 = vand.u32 2147483647, %v878
        %vm980 = vcmp.eq.f32.partialorder %v979, 8.507059e+37
        %v981 = vand.u32 %v878, 2147483648
        %v982 = vor.u32 1.1754944e-38, %v981
        %v983 = vsel %vm980, %v982, %v978
        %v984 = vmul.f32 1.0, %v983
        %v985 = vrcp.pop %v879
        %v986 = vmul.f32 %v879, %v985
        %v987 = vsub.f32 1.0, %v986
        %v988 = vmul.f32 %v985, %v987
        %v989 = vadd.f32 %v985, %v988
        %vm990 = vweird.f32 %v879
        %vm991 = vweird.f32 %v985
        %vm992 = vmor %vm990, %vm991
        %v993 = vsel %vm992, %v985, %v989
        %v994 = vand.u32 2147483647, %v879
        %vm995 = vcmp.eq.f32.partialorder %v994, 8.507059e+37
        %v996 = vand.u32 %v879, 2147483648
        %v997 = vor.u32 1.1754944e-38, %v996
        %v998 = vsel %vm995, %v997, %v993
        %v999 = vmul.f32 1.0, %v998
        %v1000 = vsub.f32 %v237, %v640
        %v1001 = vsub.f32 %v240, %v640
        %v1002 = vsub.f32 %v243, %v640
        %v1003 = vsub.f32 %v246, %v640
        %v1004 = vsub.f32 %v278, %v649
        %v1005 = vsub.f32 %v281, %v649
        %v1006 = vsub.f32 %v284, %v649
        %v1007 = vsub.f32 %v287, %v649
        %v1008 = vsub.f32 %v319, %v658
        %v1009 = vsub.f32 %v322, %v658
        %v1010 = vsub.f32 %v325, %v658
        %v1011 = vsub.f32 %v328, %v658
        %v1012 = vsub.f32 %v360, %v667
        %v1013 = vsub.f32 %v363, %v667
        %v1014 = vsub.f32 %v366, %v667
        %v1015 = vsub.f32 %v369, %v667
        %v1016 = vsub.f32 %v401, %v676
        %v1017 = vsub.f32 %v404, %v676
        %v1018 = vsub.f32 %v407, %v676
        %v1019 = vsub.f32 %v410, %v676
        %v1020 = vsub.f32 %v442, %v685
        %v1021 = vsub.f32 %v445, %v685
        %v1022 = vsub.f32 %v448, %v685
        %v1023 = vsub.f32 %v451, %v685
        %v1024 = vsub.f32 %v483, %v694
        %v1025 = vsub.f32 %v486, %v694
        %v1026 = vsub.f32 %v489, %v694
        %v1027 = vsub.f32 %v492, %v694
        %v1028 = vsub.f32 %v524, %v703
        %v1029 = vsub.f32 %v527, %v703
        %v1030 = vsub.f32 %v530, %v703
        %v1031 = vsub.f32 %v533, %v703
        %v1032 = vmul.f32 %v1000, %v894
        %v1033 = vmul.f32 %v1001, %v894
        %v1034 = vmul.f32 %v1002, %v894
        %v1035 = vmul.f32 %v1003, %v894
        %v1036 = vmul.f32 %v1004, %v909
        %v1037 = vmul.f32 %v1005, %v909
        %v1038 = vmul.f32 %v1006, %v909
        %v1039 = vmul.f32 %v1007, %v909
        %v1040 = vmul.f32 %v1008, %v924
        %v1041 = vmul.f32 %v1009, %v924
        %v1042 = vmul.f32 %v1010, %v924
        %v1043 = vmul.f32 %v1011, %v924
        %v1044 = vmul.f32 %v1012, %v939
        %v1045 = vmul.f32 %v1013, %v939
        %v1046 = vmul.f32 %v1014, %v939
        %v1047 = vmul.f32 %v1015, %v939
        %v1048 = vmul.f32 %v1016, %v954
        %v1049 = vmul.f32 %v1017, %v954
        %v1050 = vmul.f32 %v1018, %v954
        %v1051 = vmul.f32 %v1019, %v954
        %v1052 = vmul.f32 %v1020, %v969
        %v1053 = vmul.f32 %v1021, %v969
        %v1054 = vmul.f32 %v1022, %v969
        %v1055 = vmul.f32 %v1023, %v969
        %v1056 = vmul.f32 %v1024, %v984
        %v1057 = vmul.f32 %v1025, %v984
        %v1058 = vmul.f32 %v1026, %v984
        %v1059 = vmul.f32 %v1027, %v984
        %v1060 = vmul.f32 %v1028, %v999
        %v1061 = vmul.f32 %v1029, %v999
        %v1062 = vmul.f32 %v1030, %v999
        %v1063 = vmul.f32 %v1031, %v999
        %v1064 = vld [vmem:[%s1] sm:$0xff]
        %v1065 = vld [vmem:[%s1 + $0x8] sm:$0xff]
        %v1066 = vld [vmem:[%s1 + $0x10] sm:$0xff]
        %v1067 = vld [vmem:[%s1 + $0x18] sm:$0xff]
        %v1068 = vld [vmem:[%s2] sm:$0x1]
        %v1070 = vperm.slane %v1068, 0
        %v1073 = vsel %vm535, %v1032, 0
        %v1076 = vsel %vm535, %v1033, 0
        %v1079 = vsel %vm535, %v1034, 0
        %v1082 = vsel %vm535, %v1035, 0
        %v1085 = vsel %vm535, %v1036, 0
        %v1088 = vsel %vm535, %v1037, 0
        %v1091 = vsel %vm535, %v1038, 0
        %v1094 = vsel %vm535, %v1039, 0
        %v1097 = vsel %vm535, %v1040, 0
        %v1100 = vsel %vm535, %v1041, 0
        %v1103 = vsel %vm535, %v1042, 0
        %v1106 = vsel %vm535, %v1043, 0
        %v1109 = vsel %vm535, %v1044, 0
        %v1112 = vsel %vm535, %v1045, 0
        %v1115 = vsel %vm535, %v1046, 0
        %v1118 = vsel %vm535, %v1047, 0
        %v1121 = vsel %vm535, %v1048, 0
        %v1124 = vsel %vm535, %v1049, 0
        %v1127 = vsel %vm535, %v1050, 0
        %v1130 = vsel %vm535, %v1051, 0
        %v1133 = vsel %vm535, %v1052, 0
        %v1136 = vsel %vm535, %v1053, 0
        %v1139 = vsel %vm535, %v1054, 0
        %v1142 = vsel %vm535, %v1055, 0
        %v1145 = vsel %vm535, %v1056, 0
        %v1148 = vsel %vm535, %v1057, 0
        %v1151 = vsel %vm535, %v1058, 0
        %v1154 = vsel %vm535, %v1059, 0
        %v1157 = vsel %vm535, %v1060, 0
        %v1160 = vsel %vm535, %v1061, 0
        %v1163 = vsel %vm535, %v1062, 0
        %v1166 = vsel %vm535, %v1063, 0
        %1168 = vmatpush.msra.mxu0 0.0
        %1169 = vmatpush.msra.mxu0 0.0
        %1170 = vmatpush.msra.mxu0 0.0
        %1171 = vmatpush.msra.mxu0 0.0
        %1172 = vmatpush.msra.mxu0 0.0
        %1173 = vmatpush.msra.mxu0 0.0
        %1174 = vmatpush.msra.mxu0 0.0
        %1175 = vmatpush.msra.mxu0 0.0
        %1176 = vmatpush.msra.mxu0 0.0
        %1177 = vmatpush.msra.mxu0 0.0
        %1178 = vmatpush.msra.mxu0 0.0
        %1179 = vmatpush.msra.mxu0 0.0
        %1180 = vmatpush.msra.mxu0 %v1067
        %1181 = vmatpush.msra.mxu0 %v1066
        %1182 = vmatpush.msra.mxu0 %v1065
        %1183 = vmatpush.msra.mxu0 %v1064
        %1184 = vmatmul.f32.gmra.mxu0 %v1073
        %v1185 = vpop.f32.mrf.mxu0
        %v1186 = vadd.f32 %v1070, %v1185
        %1187 = vmatmul.f32.gmra.mxu0 %v1076
        %v1188 = vpop.f32.mrf.mxu0
        %v1189 = vadd.f32 %v1070, %v1188
        %1190 = vmatmul.f32.gmra.mxu0 %v1079
        %v1191 = vpop.f32.mrf.mxu0
        %v1192 = vadd.f32 %v1070, %v1191
        %1193 = vmatmul.f32.gmra.mxu0 %v1082
        %v1194 = vpop.f32.mrf.mxu0
        %v1195 = vadd.f32 %v1070, %v1194
        %1196 = vmatmul.f32.gmra.mxu0 %v1085
        %v1197 = vpop.f32.mrf.mxu0
        %v1198 = vadd.f32 %v1070, %v1197
        %1199 = vmatmul.f32.gmra.mxu0 %v1088
        %v1200 = vpop.f32.mrf.mxu0
        %v1201 = vadd.f32 %v1070, %v1200
        %1202 = vmatmul.f32.gmra.mxu0 %v1091
        %v1203 = vpop.f32.mrf.mxu0
        %v1204 = vadd.f32 %v1070, %v1203
        %1205 = vmatmul.f32.gmra.mxu0 %v1094
        %v1206 = vpop.f32.mrf.mxu0
        %v1207 = vadd.f32 %v1070, %v1206
        %1208 = vmatmul.f32.gmra.mxu0 %v1097
        %v1209 = vpop.f32.mrf.mxu0
        %v1210 = vadd.f32 %v1070, %v1209
        %1211 = vmatmul.f32.gmra.mxu0 %v1100
        %v1212 = vpop.f32.mrf.mxu0
        %v1213 = vadd.f32 %v1070, %v1212
        %1214 = vmatmul.f32.gmra.mxu0 %v1103
        %v1215 = vpop.f32.mrf.mxu0
        %v1216 = vadd.f32 %v1070, %v1215
        %1217 = vmatmul.f32.gmra.mxu0 %v1106
        %v1218 = vpop.f32.mrf.mxu0
        %v1219 = vadd.f32 %v1070, %v1218
        %1220 = vmatmul.f32.gmra.mxu0 %v1109
        %v1221 = vpop.f32.mrf.mxu0
        %v1222 = vadd.f32 %v1070, %v1221
        %1223 = vmatmul.f32.gmra.mxu0 %v1112
        %v1224 = vpop.f32.mrf.mxu0
        %v1225 = vadd.f32 %v1070, %v1224
        %1226 = vmatmul.f32.gmra.mxu0 %v1115
        %v1227 = vpop.f32.mrf.mxu0
        %v1228 = vadd.f32 %v1070, %v1227
        %1229 = vmatmul.f32.gmra.mxu0 %v1118
        %v1230 = vpop.f32.mrf.mxu0
        %v1231 = vadd.f32 %v1070, %v1230
        %1232 = vmatmul.f32.gmra.mxu0 %v1121
        %v1233 = vpop.f32.mrf.mxu0
        %v1234 = vadd.f32 %v1070, %v1233
        %1235 = vmatmul.f32.gmra.mxu0 %v1124
        %v1236 = vpop.f32.mrf.mxu0
        %v1237 = vadd.f32 %v1070, %v1236
        %1238 = vmatmul.f32.gmra.mxu0 %v1127
        %v1239 = vpop.f32.mrf.mxu0
        %v1240 = vadd.f32 %v1070, %v1239
        %1241 = vmatmul.f32.gmra.mxu0 %v1130
        %v1242 = vpop.f32.mrf.mxu0
        %v1243 = vadd.f32 %v1070, %v1242
        %1244 = vmatmul.f32.gmra.mxu0 %v1133
        %v1245 = vpop.f32.mrf.mxu0
        %v1246 = vadd.f32 %v1070, %v1245
        %1247 = vmatmul.f32.gmra.mxu0 %v1136
        %v1248 = vpop.f32.mrf.mxu0
        %v1249 = vadd.f32 %v1070, %v1248
        %1250 = vmatmul.f32.gmra.mxu0 %v1139
        %v1251 = vpop.f32.mrf.mxu0
        %v1252 = vadd.f32 %v1070, %v1251
        %1253 = vmatmul.f32.gmra.mxu0 %v1142
        %v1254 = vpop.f32.mrf.mxu0
        %v1255 = vadd.f32 %v1070, %v1254
        %1256 = vmatmul.f32.gmra.mxu0 %v1145
        %v1257 = vpop.f32.mrf.mxu0
        %v1258 = vadd.f32 %v1070, %v1257
        %1259 = vmatmul.f32.gmra.mxu0 %v1148
        %v1260 = vpop.f32.mrf.mxu0
        %v1261 = vadd.f32 %v1070, %v1260
        %1262 = vmatmul.f32.gmra.mxu0 %v1151
        %v1263 = vpop.f32.mrf.mxu0
        %v1264 = vadd.f32 %v1070, %v1263
        %1265 = vmatmul.f32.gmra.mxu0 %v1154
        %v1266 = vpop.f32.mrf.mxu0
        %v1267 = vadd.f32 %v1070, %v1266
        %1268 = vmatmul.f32.gmra.mxu0 %v1157
        %v1269 = vpop.f32.mrf.mxu0
        %v1270 = vadd.f32 %v1070, %v1269
        %1271 = vmatmul.f32.gmra.mxu0 %v1160
        %v1272 = vpop.f32.mrf.mxu0
        %v1273 = vadd.f32 %v1070, %v1272
        %1274 = vmatmul.f32.gmra.mxu0 %v1163
        %v1275 = vpop.f32.mrf.mxu0
        %v1276 = vadd.f32 %v1070, %v1275
        %1277 = vmatmul.f32.gmra.mxu0 %v1166
        %v1278 = vpop.f32.mrf.mxu0
        %v1279 = vadd.f32 %v1070, %v1278
        %1280 = vdwg.mxu0
        %v1281 = vxor.u32 %v1186, 2147483648
        %v1282 = vxor.u32 %v1189, 2147483648
        %v1283 = vxor.u32 %v1192, 2147483648
        %v1284 = vxor.u32 %v1195, 2147483648
        %v1285 = vxor.u32 %v1198, 2147483648
        %v1286 = vxor.u32 %v1201, 2147483648
        %v1287 = vxor.u32 %v1204, 2147483648
        %v1288 = vxor.u32 %v1207, 2147483648
        %v1289 = vxor.u32 %v1210, 2147483648
        %v1290 = vxor.u32 %v1213, 2147483648
        %v1291 = vxor.u32 %v1216, 2147483648
        %v1292 = vxor.u32 %v1219, 2147483648
        %v1293 = vxor.u32 %v1222, 2147483648
        %v1294 = vxor.u32 %v1225, 2147483648
        %v1295 = vxor.u32 %v1228, 2147483648
        %v1296 = vxor.u32 %v1231, 2147483648
        %v1297 = vxor.u32 %v1234, 2147483648
        %v1298 = vxor.u32 %v1237, 2147483648
        %v1299 = vxor.u32 %v1240, 2147483648
        %v1300 = vxor.u32 %v1243, 2147483648
        %v1301 = vxor.u32 %v1246, 2147483648
        %v1302 = vxor.u32 %v1249, 2147483648
        %v1303 = vxor.u32 %v1252, 2147483648
        %v1304 = vxor.u32 %v1255, 2147483648
        %v1305 = vxor.u32 %v1258, 2147483648
        %v1306 = vxor.u32 %v1261, 2147483648
        %v1307 = vxor.u32 %v1264, 2147483648
        %v1308 = vxor.u32 %v1267, 2147483648
        %v1309 = vxor.u32 %v1270, 2147483648
        %v1310 = vxor.u32 %v1273, 2147483648
        %v1311 = vxor.u32 %v1276, 2147483648
        %v1312 = vxor.u32 %v1279, 2147483648
        %v1313 = vmul.f32 %v1281, 1.442695
        %v1314 = vpow.pop %v1313
        %v1315 = vmul.f32 %v1282, 1.442695
        %v1316 = vpow.pop %v1315
        %v1317 = vmul.f32 %v1283, 1.442695
        %v1318 = vpow.pop %v1317
        %v1319 = vmul.f32 %v1284, 1.442695
        %v1320 = vpow.pop %v1319
        %v1321 = vmul.f32 %v1285, 1.442695
        %v1322 = vpow.pop %v1321
        %v1323 = vmul.f32 %v1286, 1.442695
        %v1324 = vpow.pop %v1323
        %v1325 = vmul.f32 %v1287, 1.442695
        %v1326 = vpow.pop %v1325
        %v1327 = vmul.f32 %v1288, 1.442695
        %v1328 = vpow.pop %v1327
        %v1329 = vmul.f32 %v1289, 1.442695
        %v1330 = vpow.pop %v1329
        %v1331 = vmul.f32 %v1290, 1.442695
        %v1332 = vpow.pop %v1331
        %v1333 = vmul.f32 %v1291, 1.442695
        %v1334 = vpow.pop %v1333
        %v1335 = vmul.f32 %v1292, 1.442695
        %v1336 = vpow.pop %v1335
        %v1337 = vmul.f32 %v1293, 1.442695
        %v1338 = vpow.pop %v1337
        %v1339 = vmul.f32 %v1294, 1.442695
        %v1340 = vpow.pop %v1339
        %v1341 = vmul.f32 %v1295, 1.442695
        %v1342 = vpow.pop %v1341
        %v1343 = vmul.f32 %v1296, 1.442695
        %v1344 = vpow.pop %v1343
        %v1345 = vmul.f32 %v1297, 1.442695
        %v1346 = vpow.pop %v1345
        %v1347 = vmul.f32 %v1298, 1.442695
        %v1348 = vpow.pop %v1347
        %v1349 = vmul.f32 %v1299, 1.442695
        %v1350 = vpow.pop %v1349
        %v1351 = vmul.f32 %v1300, 1.442695
        %v1352 = vpow.pop %v1351
        %v1353 = vmul.f32 %v1301, 1.442695
        %v1354 = vpow.pop %v1353
        %v1355 = vmul.f32 %v1302, 1.442695
        %v1356 = vpow.pop %v1355
        %v1357 = vmul.f32 %v1303, 1.442695
        %v1358 = vpow.pop %v1357
        %v1359 = vmul.f32 %v1304, 1.442695
        %v1360 = vpow.pop %v1359
        %v1361 = vmul.f32 %v1305, 1.442695
        %v1362 = vpow.pop %v1361
        %v1363 = vmul.f32 %v1306, 1.442695
        %v1364 = vpow.pop %v1363
        %v1365 = vmul.f32 %v1307, 1.442695
        %v1366 = vpow.pop %v1365
        %v1367 = vmul.f32 %v1308, 1.442695
        %v1368 = vpow.pop %v1367
        %v1369 = vmul.f32 %v1309, 1.442695
        %v1370 = vpow.pop %v1369
        %v1371 = vmul.f32 %v1310, 1.442695
        %v1372 = vpow.pop %v1371
        %v1373 = vmul.f32 %v1311, 1.442695
        %v1374 = vpow.pop %v1373
        %v1375 = vmul.f32 %v1312, 1.442695
        %v1376 = vpow.pop %v1375
        %v1377 = vadd.f32 %v1314, 1.0
        %v1378 = vadd.f32 %v1316, 1.0
        %v1379 = vadd.f32 %v1318, 1.0
        %v1380 = vadd.f32 %v1320, 1.0
        %v1381 = vadd.f32 %v1322, 1.0
        %v1382 = vadd.f32 %v1324, 1.0
        %v1383 = vadd.f32 %v1326, 1.0
        %v1384 = vadd.f32 %v1328, 1.0
        %v1385 = vadd.f32 %v1330, 1.0
        %v1386 = vadd.f32 %v1332, 1.0
        %v1387 = vadd.f32 %v1334, 1.0
        %v1388 = vadd.f32 %v1336, 1.0
        %v1389 = vadd.f32 %v1338, 1.0
        %v1390 = vadd.f32 %v1340, 1.0
        %v1391 = vadd.f32 %v1342, 1.0
        %v1392 = vadd.f32 %v1344, 1.0
        %v1393 = vadd.f32 %v1346, 1.0
        %v1394 = vadd.f32 %v1348, 1.0
        %v1395 = vadd.f32 %v1350, 1.0
        %v1396 = vadd.f32 %v1352, 1.0
        %v1397 = vadd.f32 %v1354, 1.0
        %v1398 = vadd.f32 %v1356, 1.0
        %v1399 = vadd.f32 %v1358, 1.0
        %v1400 = vadd.f32 %v1360, 1.0
        %v1401 = vadd.f32 %v1362, 1.0
        %v1402 = vadd.f32 %v1364, 1.0
        %v1403 = vadd.f32 %v1366, 1.0
        %v1404 = vadd.f32 %v1368, 1.0
        %v1405 = vadd.f32 %v1370, 1.0
        %v1406 = vadd.f32 %v1372, 1.0
        %v1407 = vadd.f32 %v1374, 1.0
        %v1408 = vadd.f32 %v1376, 1.0
        %v1409 = vrcp.pop %v1377
        %v1410 = vmul.f32 %v1377, %v1409
        %v1411 = vsub.f32 1.0, %v1410
        %v1412 = vmul.f32 %v1409, %v1411
        %v1413 = vadd.f32 %v1409, %v1412
        %vm1414 = vweird.f32 %v1377
        %vm1415 = vweird.f32 %v1409
        %vm1416 = vmor %vm1414, %vm1415
        %v1417 = vsel %vm1416, %v1409, %v1413
        %v1418 = vand.u32 2147483647, %v1377
        %vm1419 = vcmp.eq.f32.partialorder %v1418, 8.507059e+37
        %v1420 = vand.u32 %v1377, 2147483648
        %v1421 = vor.u32 1.1754944e-38, %v1420
        %v1422 = vsel %vm1419, %v1421, %v1417
        %v1423 = vmul.f32 1.0, %v1422
        %v1424 = vrcp.pop %v1378
        %v1425 = vmul.f32 %v1378, %v1424
        %v1426 = vsub.f32 1.0, %v1425
        %v1427 = vmul.f32 %v1424, %v1426
        %v1428 = vadd.f32 %v1424, %v1427
        %vm1429 = vweird.f32 %v1378
        %vm1430 = vweird.f32 %v1424
        %vm1431 = vmor %vm1429, %vm1430
        %v1432 = vsel %vm1431, %v1424, %v1428
        %v1433 = vand.u32 2147483647, %v1378
        %vm1434 = vcmp.eq.f32.partialorder %v1433, 8.507059e+37
        %v1435 = vand.u32 %v1378, 2147483648
        %v1436 = vor.u32 1.1754944e-38, %v1435
        %v1437 = vsel %vm1434, %v1436, %v1432
        %v1438 = vmul.f32 1.0, %v1437
        %v1439 = vrcp.pop %v1379
        %v1440 = vmul.f32 %v1379, %v1439
        %v1441 = vsub.f32 1.0, %v1440
        %v1442 = vmul.f32 %v1439, %v1441
        %v1443 = vadd.f32 %v1439, %v1442
        %vm1444 = vweird.f32 %v1379
        %vm1445 = vweird.f32 %v1439
        %vm1446 = vmor %vm1444, %vm1445
        %v1447 = vsel %vm1446, %v1439, %v1443
        %v1448 = vand.u32 2147483647, %v1379
        %vm1449 = vcmp.eq.f32.partialorder %v1448, 8.507059e+37
        %v1450 = vand.u32 %v1379, 2147483648
        %v1451 = vor.u32 1.1754944e-38, %v1450
        %v1452 = vsel %vm1449, %v1451, %v1447
        %v1453 = vmul.f32 1.0, %v1452
        %v1454 = vrcp.pop %v1380
        %v1455 = vmul.f32 %v1380, %v1454
        %v1456 = vsub.f32 1.0, %v1455
        %v1457 = vmul.f32 %v1454, %v1456
        %v1458 = vadd.f32 %v1454, %v1457
        %vm1459 = vweird.f32 %v1380
        %vm1460 = vweird.f32 %v1454
        %vm1461 = vmor %vm1459, %vm1460
        %v1462 = vsel %vm1461, %v1454, %v1458
        %v1463 = vand.u32 2147483647, %v1380
        %vm1464 = vcmp.eq.f32.partialorder %v1463, 8.507059e+37
        %v1465 = vand.u32 %v1380, 2147483648
        %v1466 = vor.u32 1.1754944e-38, %v1465
        %v1467 = vsel %vm1464, %v1466, %v1462
        %v1468 = vmul.f32 1.0, %v1467
        %v1469 = vrcp.pop %v1381
        %v1470 = vmul.f32 %v1381, %v1469
        %v1471 = vsub.f32 1.0, %v1470
        %v1472 = vmul.f32 %v1469, %v1471
        %v1473 = vadd.f32 %v1469, %v1472
        %vm1474 = vweird.f32 %v1381
        %vm1475 = vweird.f32 %v1469
        %vm1476 = vmor %vm1474, %vm1475
        %v1477 = vsel %vm1476, %v1469, %v1473
        %v1478 = vand.u32 2147483647, %v1381
        %vm1479 = vcmp.eq.f32.partialorder %v1478, 8.507059e+37
        %v1480 = vand.u32 %v1381, 2147483648
        %v1481 = vor.u32 1.1754944e-38, %v1480
        %v1482 = vsel %vm1479, %v1481, %v1477
        %v1483 = vmul.f32 1.0, %v1482
        %v1484 = vrcp.pop %v1382
        %v1485 = vmul.f32 %v1382, %v1484
        %v1486 = vsub.f32 1.0, %v1485
        %v1487 = vmul.f32 %v1484, %v1486
        %v1488 = vadd.f32 %v1484, %v1487
        %vm1489 = vweird.f32 %v1382
        %vm1490 = vweird.f32 %v1484
        %vm1491 = vmor %vm1489, %vm1490
        %v1492 = vsel %vm1491, %v1484, %v1488
        %v1493 = vand.u32 2147483647, %v1382
        %vm1494 = vcmp.eq.f32.partialorder %v1493, 8.507059e+37
        %v1495 = vand.u32 %v1382, 2147483648
        %v1496 = vor.u32 1.1754944e-38, %v1495
        %v1497 = vsel %vm1494, %v1496, %v1492
        %v1498 = vmul.f32 1.0, %v1497
        %v1499 = vrcp.pop %v1383
        %v1500 = vmul.f32 %v1383, %v1499
        %v1501 = vsub.f32 1.0, %v1500
        %v1502 = vmul.f32 %v1499, %v1501
        %v1503 = vadd.f32 %v1499, %v1502
        %vm1504 = vweird.f32 %v1383
        %vm1505 = vweird.f32 %v1499
        %vm1506 = vmor %vm1504, %vm1505
        %v1507 = vsel %vm1506, %v1499, %v1503
        %v1508 = vand.u32 2147483647, %v1383
        %vm1509 = vcmp.eq.f32.partialorder %v1508, 8.507059e+37
        %v1510 = vand.u32 %v1383, 2147483648
        %v1511 = vor.u32 1.1754944e-38, %v1510
        %v1512 = vsel %vm1509, %v1511, %v1507
        %v1513 = vmul.f32 1.0, %v1512
        %v1514 = vrcp.pop %v1384
        %v1515 = vmul.f32 %v1384, %v1514
        %v1516 = vsub.f32 1.0, %v1515
        %v1517 = vmul.f32 %v1514, %v1516
        %v1518 = vadd.f32 %v1514, %v1517
        %vm1519 = vweird.f32 %v1384
        %vm1520 = vweird.f32 %v1514
        %vm1521 = vmor %vm1519, %vm1520
        %v1522 = vsel %vm1521, %v1514, %v1518
        %v1523 = vand.u32 2147483647, %v1384
        %vm1524 = vcmp.eq.f32.partialorder %v1523, 8.507059e+37
        %v1525 = vand.u32 %v1384, 2147483648
        %v1526 = vor.u32 1.1754944e-38, %v1525
        %v1527 = vsel %vm1524, %v1526, %v1522
        %v1528 = vmul.f32 1.0, %v1527
        %v1529 = vrcp.pop %v1385
        %v1530 = vmul.f32 %v1385, %v1529
        %v1531 = vsub.f32 1.0, %v1530
        %v1532 = vmul.f32 %v1529, %v1531
        %v1533 = vadd.f32 %v1529, %v1532
        %vm1534 = vweird.f32 %v1385
        %vm1535 = vweird.f32 %v1529
        %vm1536 = vmor %vm1534, %vm1535
        %v1537 = vsel %vm1536, %v1529, %v1533
        %v1538 = vand.u32 2147483647, %v1385
        %vm1539 = vcmp.eq.f32.partialorder %v1538, 8.507059e+37
        %v1540 = vand.u32 %v1385, 2147483648
        %v1541 = vor.u32 1.1754944e-38, %v1540
        %v1542 = vsel %vm1539, %v1541, %v1537
        %v1543 = vmul.f32 1.0, %v1542
        %v1544 = vrcp.pop %v1386
        %v1545 = vmul.f32 %v1386, %v1544
        %v1546 = vsub.f32 1.0, %v1545
        %v1547 = vmul.f32 %v1544, %v1546
        %v1548 = vadd.f32 %v1544, %v1547
        %vm1549 = vweird.f32 %v1386
        %vm1550 = vweird.f32 %v1544
        %vm1551 = vmor %vm1549, %vm1550
        %v1552 = vsel %vm1551, %v1544, %v1548
        %v1553 = vand.u32 2147483647, %v1386
        %vm1554 = vcmp.eq.f32.partialorder %v1553, 8.507059e+37
        %v1555 = vand.u32 %v1386, 2147483648
        %v1556 = vor.u32 1.1754944e-38, %v1555
        %v1557 = vsel %vm1554, %v1556, %v1552
        %v1558 = vmul.f32 1.0, %v1557
        %v1559 = vrcp.pop %v1387
        %v1560 = vmul.f32 %v1387, %v1559
        %v1561 = vsub.f32 1.0, %v1560
        %v1562 = vmul.f32 %v1559, %v1561
        %v1563 = vadd.f32 %v1559, %v1562
        %vm1564 = vweird.f32 %v1387
        %vm1565 = vweird.f32 %v1559
        %vm1566 = vmor %vm1564, %vm1565
        %v1567 = vsel %vm1566, %v1559, %v1563
        %v1568 = vand.u32 2147483647, %v1387
        %vm1569 = vcmp.eq.f32.partialorder %v1568, 8.507059e+37
        %v1570 = vand.u32 %v1387, 2147483648
        %v1571 = vor.u32 1.1754944e-38, %v1570
        %v1572 = vsel %vm1569, %v1571, %v1567
        %v1573 = vmul.f32 1.0, %v1572
        %v1574 = vrcp.pop %v1388
        %v1575 = vmul.f32 %v1388, %v1574
        %v1576 = vsub.f32 1.0, %v1575
        %v1577 = vmul.f32 %v1574, %v1576
        %v1578 = vadd.f32 %v1574, %v1577
        %vm1579 = vweird.f32 %v1388
        %vm1580 = vweird.f32 %v1574
        %vm1581 = vmor %vm1579, %vm1580
        %v1582 = vsel %vm1581, %v1574, %v1578
        %v1583 = vand.u32 2147483647, %v1388
        %vm1584 = vcmp.eq.f32.partialorder %v1583, 8.507059e+37
        %v1585 = vand.u32 %v1388, 2147483648
        %v1586 = vor.u32 1.1754944e-38, %v1585
        %v1587 = vsel %vm1584, %v1586, %v1582
        %v1588 = vmul.f32 1.0, %v1587
        %v1589 = vrcp.pop %v1389
        %v1590 = vmul.f32 %v1389, %v1589
        %v1591 = vsub.f32 1.0, %v1590
        %v1592 = vmul.f32 %v1589, %v1591
        %v1593 = vadd.f32 %v1589, %v1592
        %vm1594 = vweird.f32 %v1389
        %vm1595 = vweird.f32 %v1589
        %vm1596 = vmor %vm1594, %vm1595
        %v1597 = vsel %vm1596, %v1589, %v1593
        %v1598 = vand.u32 2147483647, %v1389
        %vm1599 = vcmp.eq.f32.partialorder %v1598, 8.507059e+37
        %v1600 = vand.u32 %v1389, 2147483648
        %v1601 = vor.u32 1.1754944e-38, %v1600
        %v1602 = vsel %vm1599, %v1601, %v1597
        %v1603 = vmul.f32 1.0, %v1602
        %v1604 = vrcp.pop %v1390
        %v1605 = vmul.f32 %v1390, %v1604
        %v1606 = vsub.f32 1.0, %v1605
        %v1607 = vmul.f32 %v1604, %v1606
        %v1608 = vadd.f32 %v1604, %v1607
        %vm1609 = vweird.f32 %v1390
        %vm1610 = vweird.f32 %v1604
        %vm1611 = vmor %vm1609, %vm1610
        %v1612 = vsel %vm1611, %v1604, %v1608
        %v1613 = vand.u32 2147483647, %v1390
        %vm1614 = vcmp.eq.f32.partialorder %v1613, 8.507059e+37
        %v1615 = vand.u32 %v1390, 2147483648
        %v1616 = vor.u32 1.1754944e-38, %v1615
        %v1617 = vsel %vm1614, %v1616, %v1612
        %v1618 = vmul.f32 1.0, %v1617
        %v1619 = vrcp.pop %v1391
        %v1620 = vmul.f32 %v1391, %v1619
        %v1621 = vsub.f32 1.0, %v1620
        %v1622 = vmul.f32 %v1619, %v1621
        %v1623 = vadd.f32 %v1619, %v1622
        %vm1624 = vweird.f32 %v1391
        %vm1625 = vweird.f32 %v1619
        %vm1626 = vmor %vm1624, %vm1625
        %v1627 = vsel %vm1626, %v1619, %v1623
        %v1628 = vand.u32 2147483647, %v1391
        %vm1629 = vcmp.eq.f32.partialorder %v1628, 8.507059e+37
        %v1630 = vand.u32 %v1391, 2147483648
        %v1631 = vor.u32 1.1754944e-38, %v1630
        %v1632 = vsel %vm1629, %v1631, %v1627
        %v1633 = vmul.f32 1.0, %v1632
        %v1634 = vrcp.pop %v1392
        %v1635 = vmul.f32 %v1392, %v1634
        %v1636 = vsub.f32 1.0, %v1635
        %v1637 = vmul.f32 %v1634, %v1636
        %v1638 = vadd.f32 %v1634, %v1637
        %vm1639 = vweird.f32 %v1392
        %vm1640 = vweird.f32 %v1634
        %vm1641 = vmor %vm1639, %vm1640
        %v1642 = vsel %vm1641, %v1634, %v1638
        %v1643 = vand.u32 2147483647, %v1392
        %vm1644 = vcmp.eq.f32.partialorder %v1643, 8.507059e+37
        %v1645 = vand.u32 %v1392, 2147483648
        %v1646 = vor.u32 1.1754944e-38, %v1645
        %v1647 = vsel %vm1644, %v1646, %v1642
        %v1648 = vmul.f32 1.0, %v1647
        %v1649 = vrcp.pop %v1393
        %v1650 = vmul.f32 %v1393, %v1649
        %v1651 = vsub.f32 1.0, %v1650
        %v1652 = vmul.f32 %v1649, %v1651
        %v1653 = vadd.f32 %v1649, %v1652
        %vm1654 = vweird.f32 %v1393
        %vm1655 = vweird.f32 %v1649
        %vm1656 = vmor %vm1654, %vm1655
        %v1657 = vsel %vm1656, %v1649, %v1653
        %v1658 = vand.u32 2147483647, %v1393
        %vm1659 = vcmp.eq.f32.partialorder %v1658, 8.507059e+37
        %v1660 = vand.u32 %v1393, 2147483648
        %v1661 = vor.u32 1.1754944e-38, %v1660
        %v1662 = vsel %vm1659, %v1661, %v1657
        %v1663 = vmul.f32 1.0, %v1662
        %v1664 = vrcp.pop %v1394
        %v1665 = vmul.f32 %v1394, %v1664
        %v1666 = vsub.f32 1.0, %v1665
        %v1667 = vmul.f32 %v1664, %v1666
        %v1668 = vadd.f32 %v1664, %v1667
        %vm1669 = vweird.f32 %v1394
        %vm1670 = vweird.f32 %v1664
        %vm1671 = vmor %vm1669, %vm1670
        %v1672 = vsel %vm1671, %v1664, %v1668
        %v1673 = vand.u32 2147483647, %v1394
        %vm1674 = vcmp.eq.f32.partialorder %v1673, 8.507059e+37
        %v1675 = vand.u32 %v1394, 2147483648
        %v1676 = vor.u32 1.1754944e-38, %v1675
        %v1677 = vsel %vm1674, %v1676, %v1672
        %v1678 = vmul.f32 1.0, %v1677
        %v1679 = vrcp.pop %v1395
        %v1680 = vmul.f32 %v1395, %v1679
        %v1681 = vsub.f32 1.0, %v1680
        %v1682 = vmul.f32 %v1679, %v1681
        %v1683 = vadd.f32 %v1679, %v1682
        %vm1684 = vweird.f32 %v1395
        %vm1685 = vweird.f32 %v1679
        %vm1686 = vmor %vm1684, %vm1685
        %v1687 = vsel %vm1686, %v1679, %v1683
        %v1688 = vand.u32 2147483647, %v1395
        %vm1689 = vcmp.eq.f32.partialorder %v1688, 8.507059e+37
        %v1690 = vand.u32 %v1395, 2147483648
        %v1691 = vor.u32 1.1754944e-38, %v1690
        %v1692 = vsel %vm1689, %v1691, %v1687
        %v1693 = vmul.f32 1.0, %v1692
        %v1694 = vrcp.pop %v1396
        %v1695 = vmul.f32 %v1396, %v1694
        %v1696 = vsub.f32 1.0, %v1695
        %v1697 = vmul.f32 %v1694, %v1696
        %v1698 = vadd.f32 %v1694, %v1697
        %vm1699 = vweird.f32 %v1396
        %vm1700 = vweird.f32 %v1694
        %vm1701 = vmor %vm1699, %vm1700
        %v1702 = vsel %vm1701, %v1694, %v1698
        %v1703 = vand.u32 2147483647, %v1396
        %vm1704 = vcmp.eq.f32.partialorder %v1703, 8.507059e+37
        %v1705 = vand.u32 %v1396, 2147483648
        %v1706 = vor.u32 1.1754944e-38, %v1705
        %v1707 = vsel %vm1704, %v1706, %v1702
        %v1708 = vmul.f32 1.0, %v1707
        %v1709 = vrcp.pop %v1397
        %v1710 = vmul.f32 %v1397, %v1709
        %v1711 = vsub.f32 1.0, %v1710
        %v1712 = vmul.f32 %v1709, %v1711
        %v1713 = vadd.f32 %v1709, %v1712
        %vm1714 = vweird.f32 %v1397
        %vm1715 = vweird.f32 %v1709
        %vm1716 = vmor %vm1714, %vm1715
        %v1717 = vsel %vm1716, %v1709, %v1713
        %v1718 = vand.u32 2147483647, %v1397
        %vm1719 = vcmp.eq.f32.partialorder %v1718, 8.507059e+37
        %v1720 = vand.u32 %v1397, 2147483648
        %v1721 = vor.u32 1.1754944e-38, %v1720
        %v1722 = vsel %vm1719, %v1721, %v1717
        %v1723 = vmul.f32 1.0, %v1722
        %v1724 = vrcp.pop %v1398
        %v1725 = vmul.f32 %v1398, %v1724
        %v1726 = vsub.f32 1.0, %v1725
        %v1727 = vmul.f32 %v1724, %v1726
        %v1728 = vadd.f32 %v1724, %v1727
        %vm1729 = vweird.f32 %v1398
        %vm1730 = vweird.f32 %v1724
        %vm1731 = vmor %vm1729, %vm1730
        %v1732 = vsel %vm1731, %v1724, %v1728
        %v1733 = vand.u32 2147483647, %v1398
        %vm1734 = vcmp.eq.f32.partialorder %v1733, 8.507059e+37
        %v1735 = vand.u32 %v1398, 2147483648
        %v1736 = vor.u32 1.1754944e-38, %v1735
        %v1737 = vsel %vm1734, %v1736, %v1732
        %v1738 = vmul.f32 1.0, %v1737
        %v1739 = vrcp.pop %v1399
        %v1740 = vmul.f32 %v1399, %v1739
        %v1741 = vsub.f32 1.0, %v1740
        %v1742 = vmul.f32 %v1739, %v1741
        %v1743 = vadd.f32 %v1739, %v1742
        %vm1744 = vweird.f32 %v1399
        %vm1745 = vweird.f32 %v1739
        %vm1746 = vmor %vm1744, %vm1745
        %v1747 = vsel %vm1746, %v1739, %v1743
        %v1748 = vand.u32 2147483647, %v1399
        %vm1749 = vcmp.eq.f32.partialorder %v1748, 8.507059e+37
        %v1750 = vand.u32 %v1399, 2147483648
        %v1751 = vor.u32 1.1754944e-38, %v1750
        %v1752 = vsel %vm1749, %v1751, %v1747
        %v1753 = vmul.f32 1.0, %v1752
        %v1754 = vrcp.pop %v1400
        %v1755 = vmul.f32 %v1400, %v1754
        %v1756 = vsub.f32 1.0, %v1755
        %v1757 = vmul.f32 %v1754, %v1756
        %v1758 = vadd.f32 %v1754, %v1757
        %vm1759 = vweird.f32 %v1400
        %vm1760 = vweird.f32 %v1754
        %vm1761 = vmor %vm1759, %vm1760
        %v1762 = vsel %vm1761, %v1754, %v1758
        %v1763 = vand.u32 2147483647, %v1400
        %vm1764 = vcmp.eq.f32.partialorder %v1763, 8.507059e+37
        %v1765 = vand.u32 %v1400, 2147483648
        %v1766 = vor.u32 1.1754944e-38, %v1765
        %v1767 = vsel %vm1764, %v1766, %v1762
        %v1768 = vmul.f32 1.0, %v1767
        %v1769 = vrcp.pop %v1401
        %v1770 = vmul.f32 %v1401, %v1769
        %v1771 = vsub.f32 1.0, %v1770
        %v1772 = vmul.f32 %v1769, %v1771
        %v1773 = vadd.f32 %v1769, %v1772
        %vm1774 = vweird.f32 %v1401
        %vm1775 = vweird.f32 %v1769
        %vm1776 = vmor %vm1774, %vm1775
        %v1777 = vsel %vm1776, %v1769, %v1773
        %v1778 = vand.u32 2147483647, %v1401
        %vm1779 = vcmp.eq.f32.partialorder %v1778, 8.507059e+37
        %v1780 = vand.u32 %v1401, 2147483648
        %v1781 = vor.u32 1.1754944e-38, %v1780
        %v1782 = vsel %vm1779, %v1781, %v1777
        %v1783 = vmul.f32 1.0, %v1782
        %v1784 = vrcp.pop %v1402
        %v1785 = vmul.f32 %v1402, %v1784
        %v1786 = vsub.f32 1.0, %v1785
        %v1787 = vmul.f32 %v1784, %v1786
        %v1788 = vadd.f32 %v1784, %v1787
        %vm1789 = vweird.f32 %v1402
        %vm1790 = vweird.f32 %v1784
        %vm1791 = vmor %vm1789, %vm1790
        %v1792 = vsel %vm1791, %v1784, %v1788
        %v1793 = vand.u32 2147483647, %v1402
        %vm1794 = vcmp.eq.f32.partialorder %v1793, 8.507059e+37
        %v1795 = vand.u32 %v1402, 2147483648
        %v1796 = vor.u32 1.1754944e-38, %v1795
        %v1797 = vsel %vm1794, %v1796, %v1792
        %v1798 = vmul.f32 1.0, %v1797
        %v1799 = vrcp.pop %v1403
        %v1800 = vmul.f32 %v1403, %v1799
        %v1801 = vsub.f32 1.0, %v1800
        %v1802 = vmul.f32 %v1799, %v1801
        %v1803 = vadd.f32 %v1799, %v1802
        %vm1804 = vweird.f32 %v1403
        %vm1805 = vweird.f32 %v1799
        %vm1806 = vmor %vm1804, %vm1805
        %v1807 = vsel %vm1806, %v1799, %v1803
        %v1808 = vand.u32 2147483647, %v1403
        %vm1809 = vcmp.eq.f32.partialorder %v1808, 8.507059e+37
        %v1810 = vand.u32 %v1403, 2147483648
        %v1811 = vor.u32 1.1754944e-38, %v1810
        %v1812 = vsel %vm1809, %v1811, %v1807
        %v1813 = vmul.f32 1.0, %v1812
        %v1814 = vrcp.pop %v1404
        %v1815 = vmul.f32 %v1404, %v1814
        %v1816 = vsub.f32 1.0, %v1815
        %v1817 = vmul.f32 %v1814, %v1816
        %v1818 = vadd.f32 %v1814, %v1817
        %vm1819 = vweird.f32 %v1404
        %vm1820 = vweird.f32 %v1814
        %vm1821 = vmor %vm1819, %vm1820
        %v1822 = vsel %vm1821, %v1814, %v1818
        %v1823 = vand.u32 2147483647, %v1404
        %vm1824 = vcmp.eq.f32.partialorder %v1823, 8.507059e+37
        %v1825 = vand.u32 %v1404, 2147483648
        %v1826 = vor.u32 1.1754944e-38, %v1825
        %v1827 = vsel %vm1824, %v1826, %v1822
        %v1828 = vmul.f32 1.0, %v1827
        %v1829 = vrcp.pop %v1405
        %v1830 = vmul.f32 %v1405, %v1829
        %v1831 = vsub.f32 1.0, %v1830
        %v1832 = vmul.f32 %v1829, %v1831
        %v1833 = vadd.f32 %v1829, %v1832
        %vm1834 = vweird.f32 %v1405
        %vm1835 = vweird.f32 %v1829
        %vm1836 = vmor %vm1834, %vm1835
        %v1837 = vsel %vm1836, %v1829, %v1833
        %v1838 = vand.u32 2147483647, %v1405
        %vm1839 = vcmp.eq.f32.partialorder %v1838, 8.507059e+37
        %v1840 = vand.u32 %v1405, 2147483648
        %v1841 = vor.u32 1.1754944e-38, %v1840
        %v1842 = vsel %vm1839, %v1841, %v1837
        %v1843 = vmul.f32 1.0, %v1842
        %v1844 = vrcp.pop %v1406
        %v1845 = vmul.f32 %v1406, %v1844
        %v1846 = vsub.f32 1.0, %v1845
        %v1847 = vmul.f32 %v1844, %v1846
        %v1848 = vadd.f32 %v1844, %v1847
        %vm1849 = vweird.f32 %v1406
        %vm1850 = vweird.f32 %v1844
        %vm1851 = vmor %vm1849, %vm1850
        %v1852 = vsel %vm1851, %v1844, %v1848
        %v1853 = vand.u32 2147483647, %v1406
        %vm1854 = vcmp.eq.f32.partialorder %v1853, 8.507059e+37
        %v1855 = vand.u32 %v1406, 2147483648
        %v1856 = vor.u32 1.1754944e-38, %v1855
        %v1857 = vsel %vm1854, %v1856, %v1852
        %v1858 = vmul.f32 1.0, %v1857
        %v1859 = vrcp.pop %v1407
        %v1860 = vmul.f32 %v1407, %v1859
        %v1861 = vsub.f32 1.0, %v1860
        %v1862 = vmul.f32 %v1859, %v1861
        %v1863 = vadd.f32 %v1859, %v1862
        %vm1864 = vweird.f32 %v1407
        %vm1865 = vweird.f32 %v1859
        %vm1866 = vmor %vm1864, %vm1865
        %v1867 = vsel %vm1866, %v1859, %v1863
        %v1868 = vand.u32 2147483647, %v1407
        %vm1869 = vcmp.eq.f32.partialorder %v1868, 8.507059e+37
        %v1870 = vand.u32 %v1407, 2147483648
        %v1871 = vor.u32 1.1754944e-38, %v1870
        %v1872 = vsel %vm1869, %v1871, %v1867
        %v1873 = vmul.f32 1.0, %v1872
        %v1874 = vrcp.pop %v1408
        %v1875 = vmul.f32 %v1408, %v1874
        %v1876 = vsub.f32 1.0, %v1875
        %v1877 = vmul.f32 %v1874, %v1876
        %v1878 = vadd.f32 %v1874, %v1877
        %vm1879 = vweird.f32 %v1408
        %vm1880 = vweird.f32 %v1874
        %vm1881 = vmor %vm1879, %vm1880
        %v1882 = vsel %vm1881, %v1874, %v1878
        %v1883 = vand.u32 2147483647, %v1408
        %vm1884 = vcmp.eq.f32.partialorder %v1883, 8.507059e+37
        %v1885 = vand.u32 %v1408, 2147483648
        %v1886 = vor.u32 1.1754944e-38, %v1885
        %v1887 = vsel %vm1884, %v1886, %v1882
        %v1888 = vmul.f32 1.0, %v1887
        %v1889 = vtanh.pop %v1186
        %v1890 = vtanh.pop %v1189
        %v1891 = vtanh.pop %v1192
        %v1892 = vtanh.pop %v1195
        %v1893 = vtanh.pop %v1198
        %v1894 = vtanh.pop %v1201
        %v1895 = vtanh.pop %v1204
        %v1896 = vtanh.pop %v1207
        %v1897 = vtanh.pop %v1210
        %v1898 = vtanh.pop %v1213
        %v1899 = vtanh.pop %v1216
        %v1900 = vtanh.pop %v1219
        %v1901 = vtanh.pop %v1222
        %v1902 = vtanh.pop %v1225
        %v1903 = vtanh.pop %v1228
        %v1904 = vtanh.pop %v1231
        %v1905 = vtanh.pop %v1234
        %v1906 = vtanh.pop %v1237
        %v1907 = vtanh.pop %v1240
        %v1908 = vtanh.pop %v1243
        %v1909 = vtanh.pop %v1246
        %v1910 = vtanh.pop %v1249
        %v1911 = vtanh.pop %v1252
        %v1912 = vtanh.pop %v1255
        %v1913 = vtanh.pop %v1258
        %v1914 = vtanh.pop %v1261
        %v1915 = vtanh.pop %v1264
        %v1916 = vtanh.pop %v1267
        %v1917 = vtanh.pop %v1270
        %v1918 = vtanh.pop %v1273
        %v1919 = vtanh.pop %v1276
        %v1920 = vtanh.pop %v1279
        %1953 = vrot.lane.b32.xlu0 %v1889, 96
        %v1954 = vpop.permute.xlu0 %1953
        %1955 = vrot.lane.b32.xlu0 %v1890, 96
        %v1956 = vpop.permute.xlu0 %1955
        %1957 = vrot.lane.b32.xlu0 %v1891, 96
        %v1958 = vpop.permute.xlu0 %1957
        %1959 = vrot.lane.b32.xlu0 %v1892, 96
        %v1960 = vpop.permute.xlu0 %1959
        %1961 = vrot.lane.b32.xlu0 %v1893, 96
        %v1962 = vpop.permute.xlu0 %1961
        %1963 = vrot.lane.b32.xlu0 %v1894, 96
        %v1964 = vpop.permute.xlu0 %1963
        %1965 = vrot.lane.b32.xlu0 %v1895, 96
        %v1966 = vpop.permute.xlu0 %1965
        %1967 = vrot.lane.b32.xlu0 %v1896, 96
        %v1968 = vpop.permute.xlu0 %1967
        %1969 = vrot.lane.b32.xlu0 %v1897, 96
        %v1970 = vpop.permute.xlu0 %1969
        %1971 = vrot.lane.b32.xlu0 %v1898, 96
        %v1972 = vpop.permute.xlu0 %1971
        %1973 = vrot.lane.b32.xlu0 %v1899, 96
        %v1974 = vpop.permute.xlu0 %1973
        %1975 = vrot.lane.b32.xlu0 %v1900, 96
        %v1976 = vpop.permute.xlu0 %1975
        %1977 = vrot.lane.b32.xlu0 %v1901, 96
        %v1978 = vpop.permute.xlu0 %1977
        %1979 = vrot.lane.b32.xlu0 %v1902, 96
        %v1980 = vpop.permute.xlu0 %1979
        %1981 = vrot.lane.b32.xlu0 %v1903, 96
        %v1982 = vpop.permute.xlu0 %1981
        %1983 = vrot.lane.b32.xlu0 %v1904, 96
        %v1984 = vpop.permute.xlu0 %1983
        %1985 = vrot.lane.b32.xlu0 %v1905, 96
        %v1986 = vpop.permute.xlu0 %1985
        %1987 = vrot.lane.b32.xlu0 %v1906, 96
        %v1988 = vpop.permute.xlu0 %1987
        %1989 = vrot.lane.b32.xlu0 %v1907, 96
        %v1990 = vpop.permute.xlu0 %1989
        %1991 = vrot.lane.b32.xlu0 %v1908, 96
        %v1992 = vpop.permute.xlu0 %1991
        %1993 = vrot.lane.b32.xlu0 %v1909, 96
        %v1994 = vpop.permute.xlu0 %1993
        %1995 = vrot.lane.b32.xlu0 %v1910, 96
        %v1996 = vpop.permute.xlu0 %1995
        %1997 = vrot.lane.b32.xlu0 %v1911, 96
        %v1998 = vpop.permute.xlu0 %1997
        %1999 = vrot.lane.b32.xlu0 %v1912, 96
        %v2000 = vpop.permute.xlu0 %1999
        %2001 = vrot.lane.b32.xlu0 %v1913, 96
        %v2002 = vpop.permute.xlu0 %2001
        %2003 = vrot.lane.b32.xlu0 %v1914, 96
        %v2004 = vpop.permute.xlu0 %2003
        %2005 = vrot.lane.b32.xlu0 %v1915, 96
        %v2006 = vpop.permute.xlu0 %2005
        %2007 = vrot.lane.b32.xlu0 %v1916, 96
        %v2008 = vpop.permute.xlu0 %2007
        %2009 = vrot.lane.b32.xlu0 %v1917, 96
        %v2010 = vpop.permute.xlu0 %2009
        %2011 = vrot.lane.b32.xlu0 %v1918, 96
        %v2012 = vpop.permute.xlu0 %2011
        %2013 = vrot.lane.b32.xlu0 %v1919, 96
        %v2014 = vpop.permute.xlu0 %2013
        %2015 = vrot.lane.b32.xlu0 %v1920, 96
        %v2016 = vpop.permute.xlu0 %2015
        %v2049 = vmul.f32 %v1423, %v1954
        %v2050 = vmul.f32 %v1438, %v1956
        %v2051 = vmul.f32 %v1453, %v1958
        %v2052 = vmul.f32 %v1468, %v1960
        %v2053 = vmul.f32 %v1483, %v1962
        %v2054 = vmul.f32 %v1498, %v1964
        %v2055 = vmul.f32 %v1513, %v1966
        %v2056 = vmul.f32 %v1528, %v1968
        %v2057 = vmul.f32 %v1543, %v1970
        %v2058 = vmul.f32 %v1558, %v1972
        %v2059 = vmul.f32 %v1573, %v1974
        %v2060 = vmul.f32 %v1588, %v1976
        %v2061 = vmul.f32 %v1603, %v1978
        %v2062 = vmul.f32 %v1618, %v1980
        %v2063 = vmul.f32 %v1633, %v1982
        %v2064 = vmul.f32 %v1648, %v1984
        %v2065 = vmul.f32 %v1663, %v1986
        %v2066 = vmul.f32 %v1678, %v1988
        %v2067 = vmul.f32 %v1693, %v1990
        %v2068 = vmul.f32 %v1708, %v1992
        %v2069 = vmul.f32 %v1723, %v1994
        %v2070 = vmul.f32 %v1738, %v1996
        %v2071 = vmul.f32 %v1753, %v1998
        %v2072 = vmul.f32 %v1768, %v2000
        %v2073 = vmul.f32 %v1783, %v2002
        %v2074 = vmul.f32 %v1798, %v2004
        %v2075 = vmul.f32 %v1813, %v2006
        %v2076 = vmul.f32 %v1828, %v2008
        %v2077 = vmul.f32 %v1843, %v2010
        %v2078 = vmul.f32 %v1858, %v2012
        %v2079 = vmul.f32 %v1873, %v2014
        %v2080 = vmul.f32 %v1888, %v2016
        %v2081 = vtanh.pop %v2049
        %v2082 = vtanh.pop %v2050
        %v2083 = vtanh.pop %v2051
        %v2084 = vtanh.pop %v2052
        %v2085 = vtanh.pop %v2053
        %v2086 = vtanh.pop %v2054
        %v2087 = vtanh.pop %v2055
        %v2088 = vtanh.pop %v2056
        %v2089 = vtanh.pop %v2057
        %v2090 = vtanh.pop %v2058
        %v2091 = vtanh.pop %v2059
        %v2092 = vtanh.pop %v2060
        %v2093 = vtanh.pop %v2061
        %v2094 = vtanh.pop %v2062
        %v2095 = vtanh.pop %v2063
        %v2096 = vtanh.pop %v2064
        %v2097 = vtanh.pop %v2065
        %v2098 = vtanh.pop %v2066
        %v2099 = vtanh.pop %v2067
        %v2100 = vtanh.pop %v2068
        %v2101 = vtanh.pop %v2069
        %v2102 = vtanh.pop %v2070
        %v2103 = vtanh.pop %v2071
        %v2104 = vtanh.pop %v2072
        %v2105 = vtanh.pop %v2073
        %v2106 = vtanh.pop %v2074
        %v2107 = vtanh.pop %v2075
        %v2108 = vtanh.pop %v2076
        %v2109 = vtanh.pop %v2077
        %v2110 = vtanh.pop %v2078
        %v2111 = vtanh.pop %v2079
        %v2112 = vtanh.pop %v2080
        %2145 = vrot.lane.b32.xlu0 %v2081, 64
        %v2146 = vpop.permute.xlu0 %2145
        %2147 = vrot.lane.b32.xlu0 %v2082, 64
        %v2148 = vpop.permute.xlu0 %2147
        %2149 = vrot.lane.b32.xlu0 %v2083, 64
        %v2150 = vpop.permute.xlu0 %2149
        %2151 = vrot.lane.b32.xlu0 %v2084, 64
        %v2152 = vpop.permute.xlu0 %2151
        %2153 = vrot.lane.b32.xlu0 %v2085, 64
        %v2154 = vpop.permute.xlu0 %2153
        %2155 = vrot.lane.b32.xlu0 %v2086, 64
        %v2156 = vpop.permute.xlu0 %2155
        %2157 = vrot.lane.b32.xlu0 %v2087, 64
        %v2158 = vpop.permute.xlu0 %2157
        %2159 = vrot.lane.b32.xlu0 %v2088, 64
        %v2160 = vpop.permute.xlu0 %2159
        %2161 = vrot.lane.b32.xlu0 %v2089, 64
        %v2162 = vpop.permute.xlu0 %2161
        %2163 = vrot.lane.b32.xlu0 %v2090, 64
        %v2164 = vpop.permute.xlu0 %2163
        %2165 = vrot.lane.b32.xlu0 %v2091, 64
        %v2166 = vpop.permute.xlu0 %2165
        %2167 = vrot.lane.b32.xlu0 %v2092, 64
        %v2168 = vpop.permute.xlu0 %2167
        %2169 = vrot.lane.b32.xlu0 %v2093, 64
        %v2170 = vpop.permute.xlu0 %2169
        %2171 = vrot.lane.b32.xlu0 %v2094, 64
        %v2172 = vpop.permute.xlu0 %2171
        %2173 = vrot.lane.b32.xlu0 %v2095, 64
        %v2174 = vpop.permute.xlu0 %2173
        %2175 = vrot.lane.b32.xlu0 %v2096, 64
        %v2176 = vpop.permute.xlu0 %2175
        %2177 = vrot.lane.b32.xlu0 %v2097, 64
        %v2178 = vpop.permute.xlu0 %2177
        %2179 = vrot.lane.b32.xlu0 %v2098, 64
        %v2180 = vpop.permute.xlu0 %2179
        %2181 = vrot.lane.b32.xlu0 %v2099, 64
        %v2182 = vpop.permute.xlu0 %2181
        %2183 = vrot.lane.b32.xlu0 %v2100, 64
        %v2184 = vpop.permute.xlu0 %2183
        %2185 = vrot.lane.b32.xlu0 %v2101, 64
        %v2186 = vpop.permute.xlu0 %2185
        %2187 = vrot.lane.b32.xlu0 %v2102, 64
        %v2188 = vpop.permute.xlu0 %2187
        %2189 = vrot.lane.b32.xlu0 %v2103, 64
        %v2190 = vpop.permute.xlu0 %2189
        %2191 = vrot.lane.b32.xlu0 %v2104, 64
        %v2192 = vpop.permute.xlu0 %2191
        %2193 = vrot.lane.b32.xlu0 %v2105, 64
        %v2194 = vpop.permute.xlu0 %2193
        %2195 = vrot.lane.b32.xlu0 %v2106, 64
        %v2196 = vpop.permute.xlu0 %2195
        %2197 = vrot.lane.b32.xlu0 %v2107, 64
        %v2198 = vpop.permute.xlu0 %2197
        %2199 = vrot.lane.b32.xlu0 %v2108, 64
        %v2200 = vpop.permute.xlu0 %2199
        %2201 = vrot.lane.b32.xlu0 %v2109, 64
        %v2202 = vpop.permute.xlu0 %2201
        %2203 = vrot.lane.b32.xlu0 %v2110, 64
        %v2204 = vpop.permute.xlu0 %2203
        %2205 = vrot.lane.b32.xlu0 %v2111, 64
        %v2206 = vpop.permute.xlu0 %2205
        %2207 = vrot.lane.b32.xlu0 %v2112, 64
        %v2208 = vpop.permute.xlu0 %2207
        %v2241 = vmul.f32 %v1423, %v2146
        %v2242 = vmul.f32 %v1438, %v2148
        %v2243 = vmul.f32 %v1453, %v2150
        %v2244 = vmul.f32 %v1468, %v2152
        %v2245 = vmul.f32 %v1483, %v2154
        %v2246 = vmul.f32 %v1498, %v2156
        %v2247 = vmul.f32 %v1513, %v2158
        %v2248 = vmul.f32 %v1528, %v2160
        %v2249 = vmul.f32 %v1543, %v2162
        %v2250 = vmul.f32 %v1558, %v2164
        %v2251 = vmul.f32 %v1573, %v2166
        %v2252 = vmul.f32 %v1588, %v2168
        %v2253 = vmul.f32 %v1603, %v2170
        %v2254 = vmul.f32 %v1618, %v2172
        %v2255 = vmul.f32 %v1633, %v2174
        %v2256 = vmul.f32 %v1648, %v2176
        %v2257 = vmul.f32 %v1663, %v2178
        %v2258 = vmul.f32 %v1678, %v2180
        %v2259 = vmul.f32 %v1693, %v2182
        %v2260 = vmul.f32 %v1708, %v2184
        %v2261 = vmul.f32 %v1723, %v2186
        %v2262 = vmul.f32 %v1738, %v2188
        %v2263 = vmul.f32 %v1753, %v2190
        %v2264 = vmul.f32 %v1768, %v2192
        %v2265 = vmul.f32 %v1783, %v2194
        %v2266 = vmul.f32 %v1798, %v2196
        %v2267 = vmul.f32 %v1813, %v2198
        %v2268 = vmul.f32 %v1828, %v2200
        %v2269 = vmul.f32 %v1843, %v2202
        %v2270 = vmul.f32 %v1858, %v2204
        %v2271 = vmul.f32 %v1873, %v2206
        %v2272 = vmul.f32 %v1888, %v2208
        %s2273 = scalar_lea.vmem %s1, 32
        %v2274 = vld [vmem:[%s2273] sm:$0xff]
        %v2275 = vld [vmem:[%s2273 + $0x8] sm:$0xff]
        %v2276 = vld [vmem:[%s2273 + $0x10] sm:$0xff]
        %v2277 = vld [vmem:[%s2273 + $0x18] sm:$0xff]
        %s2278 = scalar_lea.vmem %s2, 1
        %v2279 = vld [vmem:[%s2278] sm:$0x1]
        %v2281 = vperm.slane %v2279, 0
        %2315 = vrot.lane.b32.xlu0 %v2241, 64
        %v2316 = vpop.permute.xlu0 %2315
        %2317 = vrot.lane.b32.xlu0 %v2242, 64
        %v2318 = vpop.permute.xlu0 %2317
        %2319 = vrot.lane.b32.xlu0 %v2243, 64
        %v2320 = vpop.permute.xlu0 %2319
        %2321 = vrot.lane.b32.xlu0 %v2244, 64
        %v2322 = vpop.permute.xlu0 %2321
        %2323 = vrot.lane.b32.xlu0 %v2245, 64
        %v2324 = vpop.permute.xlu0 %2323
        %2325 = vrot.lane.b32.xlu0 %v2246, 64
        %v2326 = vpop.permute.xlu0 %2325
        %2327 = vrot.lane.b32.xlu0 %v2247, 64
        %v2328 = vpop.permute.xlu0 %2327
        %2329 = vrot.lane.b32.xlu0 %v2248, 64
        %v2330 = vpop.permute.xlu0 %2329
        %2331 = vrot.lane.b32.xlu0 %v2249, 64
        %v2332 = vpop.permute.xlu0 %2331
        %2333 = vrot.lane.b32.xlu0 %v2250, 64
        %v2334 = vpop.permute.xlu0 %2333
        %2335 = vrot.lane.b32.xlu0 %v2251, 64
        %v2336 = vpop.permute.xlu0 %2335
        %2337 = vrot.lane.b32.xlu0 %v2252, 64
        %v2338 = vpop.permute.xlu0 %2337
        %2339 = vrot.lane.b32.xlu0 %v2253, 64
        %v2340 = vpop.permute.xlu0 %2339
        %2341 = vrot.lane.b32.xlu0 %v2254, 64
        %v2342 = vpop.permute.xlu0 %2341
        %2343 = vrot.lane.b32.xlu0 %v2255, 64
        %v2344 = vpop.permute.xlu0 %2343
        %2345 = vrot.lane.b32.xlu0 %v2256, 64
        %v2346 = vpop.permute.xlu0 %2345
        %2347 = vrot.lane.b32.xlu0 %v2257, 64
        %v2348 = vpop.permute.xlu0 %2347
        %2349 = vrot.lane.b32.xlu0 %v2258, 64
        %v2350 = vpop.permute.xlu0 %2349
        %2351 = vrot.lane.b32.xlu0 %v2259, 64
        %v2352 = vpop.permute.xlu0 %2351
        %2353 = vrot.lane.b32.xlu0 %v2260, 64
        %v2354 = vpop.permute.xlu0 %2353
        %2355 = vrot.lane.b32.xlu0 %v2261, 64
        %v2356 = vpop.permute.xlu0 %2355
        %2357 = vrot.lane.b32.xlu0 %v2262, 64
        %v2358 = vpop.permute.xlu0 %2357
        %2359 = vrot.lane.b32.xlu0 %v2263, 64
        %v2360 = vpop.permute.xlu0 %2359
        %2361 = vrot.lane.b32.xlu0 %v2264, 64
        %v2362 = vpop.permute.xlu0 %2361
        %2363 = vrot.lane.b32.xlu0 %v2265, 64
        %v2364 = vpop.permute.xlu0 %2363
        %2365 = vrot.lane.b32.xlu0 %v2266, 64
        %v2366 = vpop.permute.xlu0 %2365
        %2367 = vrot.lane.b32.xlu0 %v2267, 64
        %v2368 = vpop.permute.xlu0 %2367
        %2369 = vrot.lane.b32.xlu0 %v2268, 64
        %v2370 = vpop.permute.xlu0 %2369
        %2371 = vrot.lane.b32.xlu0 %v2269, 64
        %v2372 = vpop.permute.xlu0 %2371
        %2373 = vrot.lane.b32.xlu0 %v2270, 64
        %v2374 = vpop.permute.xlu0 %2373
        %2375 = vrot.lane.b32.xlu0 %v2271, 64
        %v2376 = vpop.permute.xlu0 %2375
        %2377 = vrot.lane.b32.xlu0 %v2272, 64
        %v2378 = vpop.permute.xlu0 %2377
        %v2379 = vsel %vm535, %v2316, 0
        %v2381 = vsel %vm535, %v2318, 0
        %v2383 = vsel %vm535, %v2320, 0
        %v2385 = vsel %vm535, %v2322, 0
        %v2387 = vsel %vm535, %v2324, 0
        %v2389 = vsel %vm535, %v2326, 0
        %v2391 = vsel %vm535, %v2328, 0
        %v2393 = vsel %vm535, %v2330, 0
        %v2395 = vsel %vm535, %v2332, 0
        %v2397 = vsel %vm535, %v2334, 0
        %v2399 = vsel %vm535, %v2336, 0
        %v2401 = vsel %vm535, %v2338, 0
        %v2403 = vsel %vm535, %v2340, 0
        %v2405 = vsel %vm535, %v2342, 0
        %v2407 = vsel %vm535, %v2344, 0
        %v2409 = vsel %vm535, %v2346, 0
        %v2411 = vsel %vm535, %v2348, 0
        %v2413 = vsel %vm535, %v2350, 0
        %v2415 = vsel %vm535, %v2352, 0
        %v2417 = vsel %vm535, %v2354, 0
        %v2419 = vsel %vm535, %v2356, 0
        %v2421 = vsel %vm535, %v2358, 0
        %v2423 = vsel %vm535, %v2360, 0
        %v2425 = vsel %vm535, %v2362, 0
        %v2427 = vsel %vm535, %v2364, 0
        %v2429 = vsel %vm535, %v2366, 0
        %v2431 = vsel %vm535, %v2368, 0
        %v2433 = vsel %vm535, %v2370, 0
        %v2435 = vsel %vm535, %v2372, 0
        %v2437 = vsel %vm535, %v2374, 0
        %v2439 = vsel %vm535, %v2376, 0
        %v2441 = vsel %vm535, %v2378, 0
        %2443 = vmatpush.msra.mxu0 0.0
        %2444 = vmatpush.msra.mxu0 0.0
        %2445 = vmatpush.msra.mxu0 0.0
        %2446 = vmatpush.msra.mxu0 0.0
        %2447 = vmatpush.msra.mxu0 0.0
        %2448 = vmatpush.msra.mxu0 0.0
        %2449 = vmatpush.msra.mxu0 0.0
        %2450 = vmatpush.msra.mxu0 0.0
        %2451 = vmatpush.msra.mxu0 0.0
        %2452 = vmatpush.msra.mxu0 0.0
        %2453 = vmatpush.msra.mxu0 0.0
        %2454 = vmatpush.msra.mxu0 0.0
        %2455 = vmatpush.msra.mxu0 %v2277
        %2456 = vmatpush.msra.mxu0 %v2276
        %2457 = vmatpush.msra.mxu0 %v2275
        %2458 = vmatpush.msra.mxu0 %v2274
        %2459 = vmatmul.f32.gmra.mxu0 %v2379
        %v2460 = vpop.f32.mrf.mxu0
        %v2461 = vadd.f32 %v2281, %v2460
        %2462 = vmatmul.f32.gmra.mxu0 %v2381
        %v2463 = vpop.f32.mrf.mxu0
        %v2464 = vadd.f32 %v2281, %v2463
        %2465 = vmatmul.f32.gmra.mxu0 %v2383
        %v2466 = vpop.f32.mrf.mxu0
        %v2467 = vadd.f32 %v2281, %v2466
        %2468 = vmatmul.f32.gmra.mxu0 %v2385
        %v2469 = vpop.f32.mrf.mxu0
        %v2470 = vadd.f32 %v2281, %v2469
        %2471 = vmatmul.f32.gmra.mxu0 %v2387
        %v2472 = vpop.f32.mrf.mxu0
        %v2473 = vadd.f32 %v2281, %v2472
        %2474 = vmatmul.f32.gmra.mxu0 %v2389
        %v2475 = vpop.f32.mrf.mxu0
        %v2476 = vadd.f32 %v2281, %v2475
        %2477 = vmatmul.f32.gmra.mxu0 %v2391
        %v2478 = vpop.f32.mrf.mxu0
        %v2479 = vadd.f32 %v2281, %v2478
        %2480 = vmatmul.f32.gmra.mxu0 %v2393
        %v2481 = vpop.f32.mrf.mxu0
        %v2482 = vadd.f32 %v2281, %v2481
        %2483 = vmatmul.f32.gmra.mxu0 %v2395
        %v2484 = vpop.f32.mrf.mxu0
        %v2485 = vadd.f32 %v2281, %v2484
        %2486 = vmatmul.f32.gmra.mxu0 %v2397
        %v2487 = vpop.f32.mrf.mxu0
        %v2488 = vadd.f32 %v2281, %v2487
        %2489 = vmatmul.f32.gmra.mxu0 %v2399
        %v2490 = vpop.f32.mrf.mxu0
        %v2491 = vadd.f32 %v2281, %v2490
        %2492 = vmatmul.f32.gmra.mxu0 %v2401
        %v2493 = vpop.f32.mrf.mxu0
        %v2494 = vadd.f32 %v2281, %v2493
        %2495 = vmatmul.f32.gmra.mxu0 %v2403
        %v2496 = vpop.f32.mrf.mxu0
        %v2497 = vadd.f32 %v2281, %v2496
        %2498 = vmatmul.f32.gmra.mxu0 %v2405
        %v2499 = vpop.f32.mrf.mxu0
        %v2500 = vadd.f32 %v2281, %v2499
        %2501 = vmatmul.f32.gmra.mxu0 %v2407
        %v2502 = vpop.f32.mrf.mxu0
        %v2503 = vadd.f32 %v2281, %v2502
        %2504 = vmatmul.f32.gmra.mxu0 %v2409
        %v2505 = vpop.f32.mrf.mxu0
        %v2506 = vadd.f32 %v2281, %v2505
        %2507 = vmatmul.f32.gmra.mxu0 %v2411
        %v2508 = vpop.f32.mrf.mxu0
        %v2509 = vadd.f32 %v2281, %v2508
        %2510 = vmatmul.f32.gmra.mxu0 %v2413
        %v2511 = vpop.f32.mrf.mxu0
        %v2512 = vadd.f32 %v2281, %v2511
        %2513 = vmatmul.f32.gmra.mxu0 %v2415
        %v2514 = vpop.f32.mrf.mxu0
        %v2515 = vadd.f32 %v2281, %v2514
        %2516 = vmatmul.f32.gmra.mxu0 %v2417
        %v2517 = vpop.f32.mrf.mxu0
        %v2518 = vadd.f32 %v2281, %v2517
        %2519 = vmatmul.f32.gmra.mxu0 %v2419
        %v2520 = vpop.f32.mrf.mxu0
        %v2521 = vadd.f32 %v2281, %v2520
        %2522 = vmatmul.f32.gmra.mxu0 %v2421
        %v2523 = vpop.f32.mrf.mxu0
        %v2524 = vadd.f32 %v2281, %v2523
        %2525 = vmatmul.f32.gmra.mxu0 %v2423
        %v2526 = vpop.f32.mrf.mxu0
        %v2527 = vadd.f32 %v2281, %v2526
        %2528 = vmatmul.f32.gmra.mxu0 %v2425
        %v2529 = vpop.f32.mrf.mxu0
        %v2530 = vadd.f32 %v2281, %v2529
        %2531 = vmatmul.f32.gmra.mxu0 %v2427
        %v2532 = vpop.f32.mrf.mxu0
        %v2533 = vadd.f32 %v2281, %v2532
        %2534 = vmatmul.f32.gmra.mxu0 %v2429
        %v2535 = vpop.f32.mrf.mxu0
        %v2536 = vadd.f32 %v2281, %v2535
        %2537 = vmatmul.f32.gmra.mxu0 %v2431
        %v2538 = vpop.f32.mrf.mxu0
        %v2539 = vadd.f32 %v2281, %v2538
        %2540 = vmatmul.f32.gmra.mxu0 %v2433
        %v2541 = vpop.f32.mrf.mxu0
        %v2542 = vadd.f32 %v2281, %v2541
        %2543 = vmatmul.f32.gmra.mxu0 %v2435
        %v2544 = vpop.f32.mrf.mxu0
        %v2545 = vadd.f32 %v2281, %v2544
        %2546 = vmatmul.f32.gmra.mxu0 %v2437
        %v2547 = vpop.f32.mrf.mxu0
        %v2548 = vadd.f32 %v2281, %v2547
        %2549 = vmatmul.f32.gmra.mxu0 %v2439
        %v2550 = vpop.f32.mrf.mxu0
        %v2551 = vadd.f32 %v2281, %v2550
        %2552 = vmatmul.f32.gmra.mxu0 %v2441
        %v2553 = vpop.f32.mrf.mxu0
        %v2554 = vadd.f32 %v2281, %v2553
        %2555 = vdwg.mxu0
        %v2556 = vxor.u32 %v2461, 2147483648
        %v2557 = vxor.u32 %v2464, 2147483648
        %v2558 = vxor.u32 %v2467, 2147483648
        %v2559 = vxor.u32 %v2470, 2147483648
        %v2560 = vxor.u32 %v2473, 2147483648
        %v2561 = vxor.u32 %v2476, 2147483648
        %v2562 = vxor.u32 %v2479, 2147483648
        %v2563 = vxor.u32 %v2482, 2147483648
        %v2564 = vxor.u32 %v2485, 2147483648
        %v2565 = vxor.u32 %v2488, 2147483648
        %v2566 = vxor.u32 %v2491, 2147483648
        %v2567 = vxor.u32 %v2494, 2147483648
        %v2568 = vxor.u32 %v2497, 2147483648
        %v2569 = vxor.u32 %v2500, 2147483648
        %v2570 = vxor.u32 %v2503, 2147483648
        %v2571 = vxor.u32 %v2506, 2147483648
        %v2572 = vxor.u32 %v2509, 2147483648
        %v2573 = vxor.u32 %v2512, 2147483648
        %v2574 = vxor.u32 %v2515, 2147483648
        %v2575 = vxor.u32 %v2518, 2147483648
        %v2576 = vxor.u32 %v2521, 2147483648
        %v2577 = vxor.u32 %v2524, 2147483648
        %v2578 = vxor.u32 %v2527, 2147483648
        %v2579 = vxor.u32 %v2530, 2147483648
        %v2580 = vxor.u32 %v2533, 2147483648
        %v2581 = vxor.u32 %v2536, 2147483648
        %v2582 = vxor.u32 %v2539, 2147483648
        %v2583 = vxor.u32 %v2542, 2147483648
        %v2584 = vxor.u32 %v2545, 2147483648
        %v2585 = vxor.u32 %v2548, 2147483648
        %v2586 = vxor.u32 %v2551, 2147483648
        %v2587 = vxor.u32 %v2554, 2147483648
        %v2588 = vmul.f32 %v2556, 1.442695
        %v2589 = vpow.pop %v2588
        %v2590 = vmul.f32 %v2557, 1.442695
        %v2591 = vpow.pop %v2590
        %v2592 = vmul.f32 %v2558, 1.442695
        %v2593 = vpow.pop %v2592
        %v2594 = vmul.f32 %v2559, 1.442695
        %v2595 = vpow.pop %v2594
        %v2596 = vmul.f32 %v2560, 1.442695
        %v2597 = vpow.pop %v2596
        %v2598 = vmul.f32 %v2561, 1.442695
        %v2599 = vpow.pop %v2598
        %v2600 = vmul.f32 %v2562, 1.442695
        %v2601 = vpow.pop %v2600
        %v2602 = vmul.f32 %v2563, 1.442695
        %v2603 = vpow.pop %v2602
        %v2604 = vmul.f32 %v2564, 1.442695
        %v2605 = vpow.pop %v2604
        %v2606 = vmul.f32 %v2565, 1.442695
        %v2607 = vpow.pop %v2606
        %v2608 = vmul.f32 %v2566, 1.442695
        %v2609 = vpow.pop %v2608
        %v2610 = vmul.f32 %v2567, 1.442695
        %v2611 = vpow.pop %v2610
        %v2612 = vmul.f32 %v2568, 1.442695
        %v2613 = vpow.pop %v2612
        %v2614 = vmul.f32 %v2569, 1.442695
        %v2615 = vpow.pop %v2614
        %v2616 = vmul.f32 %v2570, 1.442695
        %v2617 = vpow.pop %v2616
        %v2618 = vmul.f32 %v2571, 1.442695
        %v2619 = vpow.pop %v2618
        %v2620 = vmul.f32 %v2572, 1.442695
        %v2621 = vpow.pop %v2620
        %v2622 = vmul.f32 %v2573, 1.442695
        %v2623 = vpow.pop %v2622
        %v2624 = vmul.f32 %v2574, 1.442695
        %v2625 = vpow.pop %v2624
        %v2626 = vmul.f32 %v2575, 1.442695
        %v2627 = vpow.pop %v2626
        %v2628 = vmul.f32 %v2576, 1.442695
        %v2629 = vpow.pop %v2628
        %v2630 = vmul.f32 %v2577, 1.442695
        %v2631 = vpow.pop %v2630
        %v2632 = vmul.f32 %v2578, 1.442695
        %v2633 = vpow.pop %v2632
        %v2634 = vmul.f32 %v2579, 1.442695
        %v2635 = vpow.pop %v2634
        %v2636 = vmul.f32 %v2580, 1.442695
        %v2637 = vpow.pop %v2636
        %v2638 = vmul.f32 %v2581, 1.442695
        %v2639 = vpow.pop %v2638
        %v2640 = vmul.f32 %v2582, 1.442695
        %v2641 = vpow.pop %v2640
        %v2642 = vmul.f32 %v2583, 1.442695
        %v2643 = vpow.pop %v2642
        %v2644 = vmul.f32 %v2584, 1.442695
        %v2645 = vpow.pop %v2644
        %v2646 = vmul.f32 %v2585, 1.442695
        %v2647 = vpow.pop %v2646
        %v2648 = vmul.f32 %v2586, 1.442695
        %v2649 = vpow.pop %v2648
        %v2650 = vmul.f32 %v2587, 1.442695
        %v2651 = vpow.pop %v2650
        %v2652 = vadd.f32 %v2589, 1.0
        %v2653 = vadd.f32 %v2591, 1.0
        %v2654 = vadd.f32 %v2593, 1.0
        %v2655 = vadd.f32 %v2595, 1.0
        %v2656 = vadd.f32 %v2597, 1.0
        %v2657 = vadd.f32 %v2599, 1.0
        %v2658 = vadd.f32 %v2601, 1.0
        %v2659 = vadd.f32 %v2603, 1.0
        %v2660 = vadd.f32 %v2605, 1.0
        %v2661 = vadd.f32 %v2607, 1.0
        %v2662 = vadd.f32 %v2609, 1.0
        %v2663 = vadd.f32 %v2611, 1.0
        %v2664 = vadd.f32 %v2613, 1.0
        %v2665 = vadd.f32 %v2615, 1.0
        %v2666 = vadd.f32 %v2617, 1.0
        %v2667 = vadd.f32 %v2619, 1.0
        %v2668 = vadd.f32 %v2621, 1.0
        %v2669 = vadd.f32 %v2623, 1.0
        %v2670 = vadd.f32 %v2625, 1.0
        %v2671 = vadd.f32 %v2627, 1.0
        %v2672 = vadd.f32 %v2629, 1.0
        %v2673 = vadd.f32 %v2631, 1.0
        %v2674 = vadd.f32 %v2633, 1.0
        %v2675 = vadd.f32 %v2635, 1.0
        %v2676 = vadd.f32 %v2637, 1.0
        %v2677 = vadd.f32 %v2639, 1.0
        %v2678 = vadd.f32 %v2641, 1.0
        %v2679 = vadd.f32 %v2643, 1.0
        %v2680 = vadd.f32 %v2645, 1.0
        %v2681 = vadd.f32 %v2647, 1.0
        %v2682 = vadd.f32 %v2649, 1.0
        %v2683 = vadd.f32 %v2651, 1.0
        %v2684 = vrcp.pop %v2652
        %v2685 = vmul.f32 %v2652, %v2684
        %v2686 = vsub.f32 1.0, %v2685
        %v2687 = vmul.f32 %v2684, %v2686
        %v2688 = vadd.f32 %v2684, %v2687
        %vm2689 = vweird.f32 %v2652
        %vm2690 = vweird.f32 %v2684
        %vm2691 = vmor %vm2689, %vm2690
        %v2692 = vsel %vm2691, %v2684, %v2688
        %v2693 = vand.u32 2147483647, %v2652
        %vm2694 = vcmp.eq.f32.partialorder %v2693, 8.507059e+37
        %v2695 = vand.u32 %v2652, 2147483648
        %v2696 = vor.u32 1.1754944e-38, %v2695
        %v2697 = vsel %vm2694, %v2696, %v2692
        %v2698 = vmul.f32 1.0, %v2697
        %v2699 = vrcp.pop %v2653
        %v2700 = vmul.f32 %v2653, %v2699
        %v2701 = vsub.f32 1.0, %v2700
        %v2702 = vmul.f32 %v2699, %v2701
        %v2703 = vadd.f32 %v2699, %v2702
        %vm2704 = vweird.f32 %v2653
        %vm2705 = vweird.f32 %v2699
        %vm2706 = vmor %vm2704, %vm2705
        %v2707 = vsel %vm2706, %v2699, %v2703
        %v2708 = vand.u32 2147483647, %v2653
        %vm2709 = vcmp.eq.f32.partialorder %v2708, 8.507059e+37
        %v2710 = vand.u32 %v2653, 2147483648
        %v2711 = vor.u32 1.1754944e-38, %v2710
        %v2712 = vsel %vm2709, %v2711, %v2707
        %v2713 = vmul.f32 1.0, %v2712
        %v2714 = vrcp.pop %v2654
        %v2715 = vmul.f32 %v2654, %v2714
        %v2716 = vsub.f32 1.0, %v2715
        %v2717 = vmul.f32 %v2714, %v2716
        %v2718 = vadd.f32 %v2714, %v2717
        %vm2719 = vweird.f32 %v2654
        %vm2720 = vweird.f32 %v2714
        %vm2721 = vmor %vm2719, %vm2720
        %v2722 = vsel %vm2721, %v2714, %v2718
        %v2723 = vand.u32 2147483647, %v2654
        %vm2724 = vcmp.eq.f32.partialorder %v2723, 8.507059e+37
        %v2725 = vand.u32 %v2654, 2147483648
        %v2726 = vor.u32 1.1754944e-38, %v2725
        %v2727 = vsel %vm2724, %v2726, %v2722
        %v2728 = vmul.f32 1.0, %v2727
        %v2729 = vrcp.pop %v2655
        %v2730 = vmul.f32 %v2655, %v2729
        %v2731 = vsub.f32 1.0, %v2730
        %v2732 = vmul.f32 %v2729, %v2731
        %v2733 = vadd.f32 %v2729, %v2732
        %vm2734 = vweird.f32 %v2655
        %vm2735 = vweird.f32 %v2729
        %vm2736 = vmor %vm2734, %vm2735
        %v2737 = vsel %vm2736, %v2729, %v2733
        %v2738 = vand.u32 2147483647, %v2655
        %vm2739 = vcmp.eq.f32.partialorder %v2738, 8.507059e+37
        %v2740 = vand.u32 %v2655, 2147483648
        %v2741 = vor.u32 1.1754944e-38, %v2740
        %v2742 = vsel %vm2739, %v2741, %v2737
        %v2743 = vmul.f32 1.0, %v2742
        %v2744 = vrcp.pop %v2656
        %v2745 = vmul.f32 %v2656, %v2744
        %v2746 = vsub.f32 1.0, %v2745
        %v2747 = vmul.f32 %v2744, %v2746
        %v2748 = vadd.f32 %v2744, %v2747
        %vm2749 = vweird.f32 %v2656
        %vm2750 = vweird.f32 %v2744
        %vm2751 = vmor %vm2749, %vm2750
        %v2752 = vsel %vm2751, %v2744, %v2748
        %v2753 = vand.u32 2147483647, %v2656
        %vm2754 = vcmp.eq.f32.partialorder %v2753, 8.507059e+37
        %v2755 = vand.u32 %v2656, 2147483648
        %v2756 = vor.u32 1.1754944e-38, %v2755
        %v2757 = vsel %vm2754, %v2756, %v2752
        %v2758 = vmul.f32 1.0, %v2757
        %v2759 = vrcp.pop %v2657
        %v2760 = vmul.f32 %v2657, %v2759
        %v2761 = vsub.f32 1.0, %v2760
        %v2762 = vmul.f32 %v2759, %v2761
        %v2763 = vadd.f32 %v2759, %v2762
        %vm2764 = vweird.f32 %v2657
        %vm2765 = vweird.f32 %v2759
        %vm2766 = vmor %vm2764, %vm2765
        %v2767 = vsel %vm2766, %v2759, %v2763
        %v2768 = vand.u32 2147483647, %v2657
        %vm2769 = vcmp.eq.f32.partialorder %v2768, 8.507059e+37
        %v2770 = vand.u32 %v2657, 2147483648
        %v2771 = vor.u32 1.1754944e-38, %v2770
        %v2772 = vsel %vm2769, %v2771, %v2767
        %v2773 = vmul.f32 1.0, %v2772
        %v2774 = vrcp.pop %v2658
        %v2775 = vmul.f32 %v2658, %v2774
        %v2776 = vsub.f32 1.0, %v2775
        %v2777 = vmul.f32 %v2774, %v2776
        %v2778 = vadd.f32 %v2774, %v2777
        %vm2779 = vweird.f32 %v2658
        %vm2780 = vweird.f32 %v2774
        %vm2781 = vmor %vm2779, %vm2780
        %v2782 = vsel %vm2781, %v2774, %v2778
        %v2783 = vand.u32 2147483647, %v2658
        %vm2784 = vcmp.eq.f32.partialorder %v2783, 8.507059e+37
        %v2785 = vand.u32 %v2658, 2147483648
        %v2786 = vor.u32 1.1754944e-38, %v2785
        %v2787 = vsel %vm2784, %v2786, %v2782
        %v2788 = vmul.f32 1.0, %v2787
        %v2789 = vrcp.pop %v2659
        %v2790 = vmul.f32 %v2659, %v2789
        %v2791 = vsub.f32 1.0, %v2790
        %v2792 = vmul.f32 %v2789, %v2791
        %v2793 = vadd.f32 %v2789, %v2792
        %vm2794 = vweird.f32 %v2659
        %vm2795 = vweird.f32 %v2789
        %vm2796 = vmor %vm2794, %vm2795
        %v2797 = vsel %vm2796, %v2789, %v2793
        %v2798 = vand.u32 2147483647, %v2659
        %vm2799 = vcmp.eq.f32.partialorder %v2798, 8.507059e+37
        %v2800 = vand.u32 %v2659, 2147483648
        %v2801 = vor.u32 1.1754944e-38, %v2800
        %v2802 = vsel %vm2799, %v2801, %v2797
        %v2803 = vmul.f32 1.0, %v2802
        %v2804 = vrcp.pop %v2660
        %v2805 = vmul.f32 %v2660, %v2804
        %v2806 = vsub.f32 1.0, %v2805
        %v2807 = vmul.f32 %v2804, %v2806
        %v2808 = vadd.f32 %v2804, %v2807
        %vm2809 = vweird.f32 %v2660
        %vm2810 = vweird.f32 %v2804
        %vm2811 = vmor %vm2809, %vm2810
        %v2812 = vsel %vm2811, %v2804, %v2808
        %v2813 = vand.u32 2147483647, %v2660
        %vm2814 = vcmp.eq.f32.partialorder %v2813, 8.507059e+37
        %v2815 = vand.u32 %v2660, 2147483648
        %v2816 = vor.u32 1.1754944e-38, %v2815
        %v2817 = vsel %vm2814, %v2816, %v2812
        %v2818 = vmul.f32 1.0, %v2817
        %v2819 = vrcp.pop %v2661
        %v2820 = vmul.f32 %v2661, %v2819
        %v2821 = vsub.f32 1.0, %v2820
        %v2822 = vmul.f32 %v2819, %v2821
        %v2823 = vadd.f32 %v2819, %v2822
        %vm2824 = vweird.f32 %v2661
        %vm2825 = vweird.f32 %v2819
        %vm2826 = vmor %vm2824, %vm2825
        %v2827 = vsel %vm2826, %v2819, %v2823
        %v2828 = vand.u32 2147483647, %v2661
        %vm2829 = vcmp.eq.f32.partialorder %v2828, 8.507059e+37
        %v2830 = vand.u32 %v2661, 2147483648
        %v2831 = vor.u32 1.1754944e-38, %v2830
        %v2832 = vsel %vm2829, %v2831, %v2827
        %v2833 = vmul.f32 1.0, %v2832
        %v2834 = vrcp.pop %v2662
        %v2835 = vmul.f32 %v2662, %v2834
        %v2836 = vsub.f32 1.0, %v2835
        %v2837 = vmul.f32 %v2834, %v2836
        %v2838 = vadd.f32 %v2834, %v2837
        %vm2839 = vweird.f32 %v2662
        %vm2840 = vweird.f32 %v2834
        %vm2841 = vmor %vm2839, %vm2840
        %v2842 = vsel %vm2841, %v2834, %v2838
        %v2843 = vand.u32 2147483647, %v2662
        %vm2844 = vcmp.eq.f32.partialorder %v2843, 8.507059e+37
        %v2845 = vand.u32 %v2662, 2147483648
        %v2846 = vor.u32 1.1754944e-38, %v2845
        %v2847 = vsel %vm2844, %v2846, %v2842
        %v2848 = vmul.f32 1.0, %v2847
        %v2849 = vrcp.pop %v2663
        %v2850 = vmul.f32 %v2663, %v2849
        %v2851 = vsub.f32 1.0, %v2850
        %v2852 = vmul.f32 %v2849, %v2851
        %v2853 = vadd.f32 %v2849, %v2852
        %vm2854 = vweird.f32 %v2663
        %vm2855 = vweird.f32 %v2849
        %vm2856 = vmor %vm2854, %vm2855
        %v2857 = vsel %vm2856, %v2849, %v2853
        %v2858 = vand.u32 2147483647, %v2663
        %vm2859 = vcmp.eq.f32.partialorder %v2858, 8.507059e+37
        %v2860 = vand.u32 %v2663, 2147483648
        %v2861 = vor.u32 1.1754944e-38, %v2860
        %v2862 = vsel %vm2859, %v2861, %v2857
        %v2863 = vmul.f32 1.0, %v2862
        %v2864 = vrcp.pop %v2664
        %v2865 = vmul.f32 %v2664, %v2864
        %v2866 = vsub.f32 1.0, %v2865
        %v2867 = vmul.f32 %v2864, %v2866
        %v2868 = vadd.f32 %v2864, %v2867
        %vm2869 = vweird.f32 %v2664
        %vm2870 = vweird.f32 %v2864
        %vm2871 = vmor %vm2869, %vm2870
        %v2872 = vsel %vm2871, %v2864, %v2868
        %v2873 = vand.u32 2147483647, %v2664
        %vm2874 = vcmp.eq.f32.partialorder %v2873, 8.507059e+37
        %v2875 = vand.u32 %v2664, 2147483648
        %v2876 = vor.u32 1.1754944e-38, %v2875
        %v2877 = vsel %vm2874, %v2876, %v2872
        %v2878 = vmul.f32 1.0, %v2877
        %v2879 = vrcp.pop %v2665
        %v2880 = vmul.f32 %v2665, %v2879
        %v2881 = vsub.f32 1.0, %v2880
        %v2882 = vmul.f32 %v2879, %v2881
        %v2883 = vadd.f32 %v2879, %v2882
        %vm2884 = vweird.f32 %v2665
        %vm2885 = vweird.f32 %v2879
        %vm2886 = vmor %vm2884, %vm2885
        %v2887 = vsel %vm2886, %v2879, %v2883
        %v2888 = vand.u32 2147483647, %v2665
        %vm2889 = vcmp.eq.f32.partialorder %v2888, 8.507059e+37
        %v2890 = vand.u32 %v2665, 2147483648
        %v2891 = vor.u32 1.1754944e-38, %v2890
        %v2892 = vsel %vm2889, %v2891, %v2887
        %v2893 = vmul.f32 1.0, %v2892
        %v2894 = vrcp.pop %v2666
        %v2895 = vmul.f32 %v2666, %v2894
        %v2896 = vsub.f32 1.0, %v2895
        %v2897 = vmul.f32 %v2894, %v2896
        %v2898 = vadd.f32 %v2894, %v2897
        %vm2899 = vweird.f32 %v2666
        %vm2900 = vweird.f32 %v2894
        %vm2901 = vmor %vm2899, %vm2900
        %v2902 = vsel %vm2901, %v2894, %v2898
        %v2903 = vand.u32 2147483647, %v2666
        %vm2904 = vcmp.eq.f32.partialorder %v2903, 8.507059e+37
        %v2905 = vand.u32 %v2666, 2147483648
        %v2906 = vor.u32 1.1754944e-38, %v2905
        %v2907 = vsel %vm2904, %v2906, %v2902
        %v2908 = vmul.f32 1.0, %v2907
        %v2909 = vrcp.pop %v2667
        %v2910 = vmul.f32 %v2667, %v2909
        %v2911 = vsub.f32 1.0, %v2910
        %v2912 = vmul.f32 %v2909, %v2911
        %v2913 = vadd.f32 %v2909, %v2912
        %vm2914 = vweird.f32 %v2667
        %vm2915 = vweird.f32 %v2909
        %vm2916 = vmor %vm2914, %vm2915
        %v2917 = vsel %vm2916, %v2909, %v2913
        %v2918 = vand.u32 2147483647, %v2667
        %vm2919 = vcmp.eq.f32.partialorder %v2918, 8.507059e+37
        %v2920 = vand.u32 %v2667, 2147483648
        %v2921 = vor.u32 1.1754944e-38, %v2920
        %v2922 = vsel %vm2919, %v2921, %v2917
        %v2923 = vmul.f32 1.0, %v2922
        %v2924 = vrcp.pop %v2668
        %v2925 = vmul.f32 %v2668, %v2924
        %v2926 = vsub.f32 1.0, %v2925
        %v2927 = vmul.f32 %v2924, %v2926
        %v2928 = vadd.f32 %v2924, %v2927
        %vm2929 = vweird.f32 %v2668
        %vm2930 = vweird.f32 %v2924
        %vm2931 = vmor %vm2929, %vm2930
        %v2932 = vsel %vm2931, %v2924, %v2928
        %v2933 = vand.u32 2147483647, %v2668
        %vm2934 = vcmp.eq.f32.partialorder %v2933, 8.507059e+37
        %v2935 = vand.u32 %v2668, 2147483648
        %v2936 = vor.u32 1.1754944e-38, %v2935
        %v2937 = vsel %vm2934, %v2936, %v2932
        %v2938 = vmul.f32 1.0, %v2937
        %v2939 = vrcp.pop %v2669
        %v2940 = vmul.f32 %v2669, %v2939
        %v2941 = vsub.f32 1.0, %v2940
        %v2942 = vmul.f32 %v2939, %v2941
        %v2943 = vadd.f32 %v2939, %v2942
        %vm2944 = vweird.f32 %v2669
        %vm2945 = vweird.f32 %v2939
        %vm2946 = vmor %vm2944, %vm2945
        %v2947 = vsel %vm2946, %v2939, %v2943
        %v2948 = vand.u32 2147483647, %v2669
        %vm2949 = vcmp.eq.f32.partialorder %v2948, 8.507059e+37
        %v2950 = vand.u32 %v2669, 2147483648
        %v2951 = vor.u32 1.1754944e-38, %v2950
        %v2952 = vsel %vm2949, %v2951, %v2947
        %v2953 = vmul.f32 1.0, %v2952
        %v2954 = vrcp.pop %v2670
        %v2955 = vmul.f32 %v2670, %v2954
        %v2956 = vsub.f32 1.0, %v2955
        %v2957 = vmul.f32 %v2954, %v2956
        %v2958 = vadd.f32 %v2954, %v2957
        %vm2959 = vweird.f32 %v2670
        %vm2960 = vweird.f32 %v2954
        %vm2961 = vmor %vm2959, %vm2960
        %v2962 = vsel %vm2961, %v2954, %v2958
        %v2963 = vand.u32 2147483647, %v2670
        %vm2964 = vcmp.eq.f32.partialorder %v2963, 8.507059e+37
        %v2965 = vand.u32 %v2670, 2147483648
        %v2966 = vor.u32 1.1754944e-38, %v2965
        %v2967 = vsel %vm2964, %v2966, %v2962
        %v2968 = vmul.f32 1.0, %v2967
        %v2969 = vrcp.pop %v2671
        %v2970 = vmul.f32 %v2671, %v2969
        %v2971 = vsub.f32 1.0, %v2970
        %v2972 = vmul.f32 %v2969, %v2971
        %v2973 = vadd.f32 %v2969, %v2972
        %vm2974 = vweird.f32 %v2671
        %vm2975 = vweird.f32 %v2969
        %vm2976 = vmor %vm2974, %vm2975
        %v2977 = vsel %vm2976, %v2969, %v2973
        %v2978 = vand.u32 2147483647, %v2671
        %vm2979 = vcmp.eq.f32.partialorder %v2978, 8.507059e+37
        %v2980 = vand.u32 %v2671, 2147483648
        %v2981 = vor.u32 1.1754944e-38, %v2980
        %v2982 = vsel %vm2979, %v2981, %v2977
        %v2983 = vmul.f32 1.0, %v2982
        %v2984 = vrcp.pop %v2672
        %v2985 = vmul.f32 %v2672, %v2984
        %v2986 = vsub.f32 1.0, %v2985
        %v2987 = vmul.f32 %v2984, %v2986
        %v2988 = vadd.f32 %v2984, %v2987
        %vm2989 = vweird.f32 %v2672
        %vm2990 = vweird.f32 %v2984
        %vm2991 = vmor %vm2989, %vm2990
        %v2992 = vsel %vm2991, %v2984, %v2988
        %v2993 = vand.u32 2147483647, %v2672
        %vm2994 = vcmp.eq.f32.partialorder %v2993, 8.507059e+37
        %v2995 = vand.u32 %v2672, 2147483648
        %v2996 = vor.u32 1.1754944e-38, %v2995
        %v2997 = vsel %vm2994, %v2996, %v2992
        %v2998 = vmul.f32 1.0, %v2997
        %v2999 = vrcp.pop %v2673
        %v3000 = vmul.f32 %v2673, %v2999
        %v3001 = vsub.f32 1.0, %v3000
        %v3002 = vmul.f32 %v2999, %v3001
        %v3003 = vadd.f32 %v2999, %v3002
        %vm3004 = vweird.f32 %v2673
        %vm3005 = vweird.f32 %v2999
        %vm3006 = vmor %vm3004, %vm3005
        %v3007 = vsel %vm3006, %v2999, %v3003
        %v3008 = vand.u32 2147483647, %v2673
        %vm3009 = vcmp.eq.f32.partialorder %v3008, 8.507059e+37
        %v3010 = vand.u32 %v2673, 2147483648
        %v3011 = vor.u32 1.1754944e-38, %v3010
        %v3012 = vsel %vm3009, %v3011, %v3007
        %v3013 = vmul.f32 1.0, %v3012
        %v3014 = vrcp.pop %v2674
        %v3015 = vmul.f32 %v2674, %v3014
        %v3016 = vsub.f32 1.0, %v3015
        %v3017 = vmul.f32 %v3014, %v3016
        %v3018 = vadd.f32 %v3014, %v3017
        %vm3019 = vweird.f32 %v2674
        %vm3020 = vweird.f32 %v3014
        %vm3021 = vmor %vm3019, %vm3020
        %v3022 = vsel %vm3021, %v3014, %v3018
        %v3023 = vand.u32 2147483647, %v2674
        %vm3024 = vcmp.eq.f32.partialorder %v3023, 8.507059e+37
        %v3025 = vand.u32 %v2674, 2147483648
        %v3026 = vor.u32 1.1754944e-38, %v3025
        %v3027 = vsel %vm3024, %v3026, %v3022
        %v3028 = vmul.f32 1.0, %v3027
        %v3029 = vrcp.pop %v2675
        %v3030 = vmul.f32 %v2675, %v3029
        %v3031 = vsub.f32 1.0, %v3030
        %v3032 = vmul.f32 %v3029, %v3031
        %v3033 = vadd.f32 %v3029, %v3032
        %vm3034 = vweird.f32 %v2675
        %vm3035 = vweird.f32 %v3029
        %vm3036 = vmor %vm3034, %vm3035
        %v3037 = vsel %vm3036, %v3029, %v3033
        %v3038 = vand.u32 2147483647, %v2675
        %vm3039 = vcmp.eq.f32.partialorder %v3038, 8.507059e+37
        %v3040 = vand.u32 %v2675, 2147483648
        %v3041 = vor.u32 1.1754944e-38, %v3040
        %v3042 = vsel %vm3039, %v3041, %v3037
        %v3043 = vmul.f32 1.0, %v3042
        %v3044 = vrcp.pop %v2676
        %v3045 = vmul.f32 %v2676, %v3044
        %v3046 = vsub.f32 1.0, %v3045
        %v3047 = vmul.f32 %v3044, %v3046
        %v3048 = vadd.f32 %v3044, %v3047
        %vm3049 = vweird.f32 %v2676
        %vm3050 = vweird.f32 %v3044
        %vm3051 = vmor %vm3049, %vm3050
        %v3052 = vsel %vm3051, %v3044, %v3048
        %v3053 = vand.u32 2147483647, %v2676
        %vm3054 = vcmp.eq.f32.partialorder %v3053, 8.507059e+37
        %v3055 = vand.u32 %v2676, 2147483648
        %v3056 = vor.u32 1.1754944e-38, %v3055
        %v3057 = vsel %vm3054, %v3056, %v3052
        %v3058 = vmul.f32 1.0, %v3057
        %v3059 = vrcp.pop %v2677
        %v3060 = vmul.f32 %v2677, %v3059
        %v3061 = vsub.f32 1.0, %v3060
        %v3062 = vmul.f32 %v3059, %v3061
        %v3063 = vadd.f32 %v3059, %v3062
        %vm3064 = vweird.f32 %v2677
        %vm3065 = vweird.f32 %v3059
        %vm3066 = vmor %vm3064, %vm3065
        %v3067 = vsel %vm3066, %v3059, %v3063
        %v3068 = vand.u32 2147483647, %v2677
        %vm3069 = vcmp.eq.f32.partialorder %v3068, 8.507059e+37
        %v3070 = vand.u32 %v2677, 2147483648
        %v3071 = vor.u32 1.1754944e-38, %v3070
        %v3072 = vsel %vm3069, %v3071, %v3067
        %v3073 = vmul.f32 1.0, %v3072
        %v3074 = vrcp.pop %v2678
        %v3075 = vmul.f32 %v2678, %v3074
        %v3076 = vsub.f32 1.0, %v3075
        %v3077 = vmul.f32 %v3074, %v3076
        %v3078 = vadd.f32 %v3074, %v3077
        %vm3079 = vweird.f32 %v2678
        %vm3080 = vweird.f32 %v3074
        %vm3081 = vmor %vm3079, %vm3080
        %v3082 = vsel %vm3081, %v3074, %v3078
        %v3083 = vand.u32 2147483647, %v2678
        %vm3084 = vcmp.eq.f32.partialorder %v3083, 8.507059e+37
        %v3085 = vand.u32 %v2678, 2147483648
        %v3086 = vor.u32 1.1754944e-38, %v3085
        %v3087 = vsel %vm3084, %v3086, %v3082
        %v3088 = vmul.f32 1.0, %v3087
        %v3089 = vrcp.pop %v2679
        %v3090 = vmul.f32 %v2679, %v3089
        %v3091 = vsub.f32 1.0, %v3090
        %v3092 = vmul.f32 %v3089, %v3091
        %v3093 = vadd.f32 %v3089, %v3092
        %vm3094 = vweird.f32 %v2679
        %vm3095 = vweird.f32 %v3089
        %vm3096 = vmor %vm3094, %vm3095
        %v3097 = vsel %vm3096, %v3089, %v3093
        %v3098 = vand.u32 2147483647, %v2679
        %vm3099 = vcmp.eq.f32.partialorder %v3098, 8.507059e+37
        %v3100 = vand.u32 %v2679, 2147483648
        %v3101 = vor.u32 1.1754944e-38, %v3100
        %v3102 = vsel %vm3099, %v3101, %v3097
        %v3103 = vmul.f32 1.0, %v3102
        %v3104 = vrcp.pop %v2680
        %v3105 = vmul.f32 %v2680, %v3104
        %v3106 = vsub.f32 1.0, %v3105
        %v3107 = vmul.f32 %v3104, %v3106
        %v3108 = vadd.f32 %v3104, %v3107
        %vm3109 = vweird.f32 %v2680
        %vm3110 = vweird.f32 %v3104
        %vm3111 = vmor %vm3109, %vm3110
        %v3112 = vsel %vm3111, %v3104, %v3108
        %v3113 = vand.u32 2147483647, %v2680
        %vm3114 = vcmp.eq.f32.partialorder %v3113, 8.507059e+37
        %v3115 = vand.u32 %v2680, 2147483648
        %v3116 = vor.u32 1.1754944e-38, %v3115
        %v3117 = vsel %vm3114, %v3116, %v3112
        %v3118 = vmul.f32 1.0, %v3117
        %v3119 = vrcp.pop %v2681
        %v3120 = vmul.f32 %v2681, %v3119
        %v3121 = vsub.f32 1.0, %v3120
        %v3122 = vmul.f32 %v3119, %v3121
        %v3123 = vadd.f32 %v3119, %v3122
        %vm3124 = vweird.f32 %v2681
        %vm3125 = vweird.f32 %v3119
        %vm3126 = vmor %vm3124, %vm3125
        %v3127 = vsel %vm3126, %v3119, %v3123
        %v3128 = vand.u32 2147483647, %v2681
        %vm3129 = vcmp.eq.f32.partialorder %v3128, 8.507059e+37
        %v3130 = vand.u32 %v2681, 2147483648
        %v3131 = vor.u32 1.1754944e-38, %v3130
        %v3132 = vsel %vm3129, %v3131, %v3127
        %v3133 = vmul.f32 1.0, %v3132
        %v3134 = vrcp.pop %v2682
        %v3135 = vmul.f32 %v2682, %v3134
        %v3136 = vsub.f32 1.0, %v3135
        %v3137 = vmul.f32 %v3134, %v3136
        %v3138 = vadd.f32 %v3134, %v3137
        %vm3139 = vweird.f32 %v2682
        %vm3140 = vweird.f32 %v3134
        %vm3141 = vmor %vm3139, %vm3140
        %v3142 = vsel %vm3141, %v3134, %v3138
        %v3143 = vand.u32 2147483647, %v2682
        %vm3144 = vcmp.eq.f32.partialorder %v3143, 8.507059e+37
        %v3145 = vand.u32 %v2682, 2147483648
        %v3146 = vor.u32 1.1754944e-38, %v3145
        %v3147 = vsel %vm3144, %v3146, %v3142
        %v3148 = vmul.f32 1.0, %v3147
        %v3149 = vrcp.pop %v2683
        %v3150 = vmul.f32 %v2683, %v3149
        %v3151 = vsub.f32 1.0, %v3150
        %v3152 = vmul.f32 %v3149, %v3151
        %v3153 = vadd.f32 %v3149, %v3152
        %vm3154 = vweird.f32 %v2683
        %vm3155 = vweird.f32 %v3149
        %vm3156 = vmor %vm3154, %vm3155
        %v3157 = vsel %vm3156, %v3149, %v3153
        %v3158 = vand.u32 2147483647, %v2683
        %vm3159 = vcmp.eq.f32.partialorder %v3158, 8.507059e+37
        %v3160 = vand.u32 %v2683, 2147483648
        %v3161 = vor.u32 1.1754944e-38, %v3160
        %v3162 = vsel %vm3159, %v3161, %v3157
        %v3163 = vmul.f32 1.0, %v3162
        %v3164 = vtanh.pop %v2461
        %v3165 = vtanh.pop %v2464
        %v3166 = vtanh.pop %v2467
        %v3167 = vtanh.pop %v2470
        %v3168 = vtanh.pop %v2473
        %v3169 = vtanh.pop %v2476
        %v3170 = vtanh.pop %v2479
        %v3171 = vtanh.pop %v2482
        %v3172 = vtanh.pop %v2485
        %v3173 = vtanh.pop %v2488
        %v3174 = vtanh.pop %v2491
        %v3175 = vtanh.pop %v2494
        %v3176 = vtanh.pop %v2497
        %v3177 = vtanh.pop %v2500
        %v3178 = vtanh.pop %v2503
        %v3179 = vtanh.pop %v2506
        %v3180 = vtanh.pop %v2509
        %v3181 = vtanh.pop %v2512
        %v3182 = vtanh.pop %v2515
        %v3183 = vtanh.pop %v2518
        %v3184 = vtanh.pop %v2521
        %v3185 = vtanh.pop %v2524
        %v3186 = vtanh.pop %v2527
        %v3187 = vtanh.pop %v2530
        %v3188 = vtanh.pop %v2533
        %v3189 = vtanh.pop %v2536
        %v3190 = vtanh.pop %v2539
        %v3191 = vtanh.pop %v2542
        %v3192 = vtanh.pop %v2545
        %v3193 = vtanh.pop %v2548
        %v3194 = vtanh.pop %v2551
        %v3195 = vtanh.pop %v2554
        %3228 = vrot.lane.b32.xlu0 %v3164, 96
        %v3229 = vpop.permute.xlu0 %3228
        %3230 = vrot.lane.b32.xlu0 %v3165, 96
        %v3231 = vpop.permute.xlu0 %3230
        %3232 = vrot.lane.b32.xlu0 %v3166, 96
        %v3233 = vpop.permute.xlu0 %3232
        %3234 = vrot.lane.b32.xlu0 %v3167, 96
        %v3235 = vpop.permute.xlu0 %3234
        %3236 = vrot.lane.b32.xlu0 %v3168, 96
        %v3237 = vpop.permute.xlu0 %3236
        %3238 = vrot.lane.b32.xlu0 %v3169, 96
        %v3239 = vpop.permute.xlu0 %3238
        %3240 = vrot.lane.b32.xlu0 %v3170, 96
        %v3241 = vpop.permute.xlu0 %3240
        %3242 = vrot.lane.b32.xlu0 %v3171, 96
        %v3243 = vpop.permute.xlu0 %3242
        %3244 = vrot.lane.b32.xlu0 %v3172, 96
        %v3245 = vpop.permute.xlu0 %3244
        %3246 = vrot.lane.b32.xlu0 %v3173, 96
        %v3247 = vpop.permute.xlu0 %3246
        %3248 = vrot.lane.b32.xlu0 %v3174, 96
        %v3249 = vpop.permute.xlu0 %3248
        %3250 = vrot.lane.b32.xlu0 %v3175, 96
        %v3251 = vpop.permute.xlu0 %3250
        %3252 = vrot.lane.b32.xlu0 %v3176, 96
        %v3253 = vpop.permute.xlu0 %3252
        %3254 = vrot.lane.b32.xlu0 %v3177, 96
        %v3255 = vpop.permute.xlu0 %3254
        %3256 = vrot.lane.b32.xlu0 %v3178, 96
        %v3257 = vpop.permute.xlu0 %3256
        %3258 = vrot.lane.b32.xlu0 %v3179, 96
        %v3259 = vpop.permute.xlu0 %3258
        %3260 = vrot.lane.b32.xlu0 %v3180, 96
        %v3261 = vpop.permute.xlu0 %3260
        %3262 = vrot.lane.b32.xlu0 %v3181, 96
        %v3263 = vpop.permute.xlu0 %3262
        %3264 = vrot.lane.b32.xlu0 %v3182, 96
        %v3265 = vpop.permute.xlu0 %3264
        %3266 = vrot.lane.b32.xlu0 %v3183, 96
        %v3267 = vpop.permute.xlu0 %3266
        %3268 = vrot.lane.b32.xlu0 %v3184, 96
        %v3269 = vpop.permute.xlu0 %3268
        %3270 = vrot.lane.b32.xlu0 %v3185, 96
        %v3271 = vpop.permute.xlu0 %3270
        %3272 = vrot.lane.b32.xlu0 %v3186, 96
        %v3273 = vpop.permute.xlu0 %3272
        %3274 = vrot.lane.b32.xlu0 %v3187, 96
        %v3275 = vpop.permute.xlu0 %3274
        %3276 = vrot.lane.b32.xlu0 %v3188, 96
        %v3277 = vpop.permute.xlu0 %3276
        %3278 = vrot.lane.b32.xlu0 %v3189, 96
        %v3279 = vpop.permute.xlu0 %3278
        %3280 = vrot.lane.b32.xlu0 %v3190, 96
        %v3281 = vpop.permute.xlu0 %3280
        %3282 = vrot.lane.b32.xlu0 %v3191, 96
        %v3283 = vpop.permute.xlu0 %3282
        %3284 = vrot.lane.b32.xlu0 %v3192, 96
        %v3285 = vpop.permute.xlu0 %3284
        %3286 = vrot.lane.b32.xlu0 %v3193, 96
        %v3287 = vpop.permute.xlu0 %3286
        %3288 = vrot.lane.b32.xlu0 %v3194, 96
        %v3289 = vpop.permute.xlu0 %3288
        %3290 = vrot.lane.b32.xlu0 %v3195, 96
        %v3291 = vpop.permute.xlu0 %3290
        %v3324 = vmul.f32 %v2698, %v3229
        %v3325 = vmul.f32 %v2713, %v3231
        %v3326 = vmul.f32 %v2728, %v3233
        %v3327 = vmul.f32 %v2743, %v3235
        %v3328 = vmul.f32 %v2758, %v3237
        %v3329 = vmul.f32 %v2773, %v3239
        %v3330 = vmul.f32 %v2788, %v3241
        %v3331 = vmul.f32 %v2803, %v3243
        %v3332 = vmul.f32 %v2818, %v3245
        %v3333 = vmul.f32 %v2833, %v3247
        %v3334 = vmul.f32 %v2848, %v3249
        %v3335 = vmul.f32 %v2863, %v3251
        %v3336 = vmul.f32 %v2878, %v3253
        %v3337 = vmul.f32 %v2893, %v3255
        %v3338 = vmul.f32 %v2908, %v3257
        %v3339 = vmul.f32 %v2923, %v3259
        %v3340 = vmul.f32 %v2938, %v3261
        %v3341 = vmul.f32 %v2953, %v3263
        %v3342 = vmul.f32 %v2968, %v3265
        %v3343 = vmul.f32 %v2983, %v3267
        %v3344 = vmul.f32 %v2998, %v3269
        %v3345 = vmul.f32 %v3013, %v3271
        %v3346 = vmul.f32 %v3028, %v3273
        %v3347 = vmul.f32 %v3043, %v3275
        %v3348 = vmul.f32 %v3058, %v3277
        %v3349 = vmul.f32 %v3073, %v3279
        %v3350 = vmul.f32 %v3088, %v3281
        %v3351 = vmul.f32 %v3103, %v3283
        %v3352 = vmul.f32 %v3118, %v3285
        %v3353 = vmul.f32 %v3133, %v3287
        %v3354 = vmul.f32 %v3148, %v3289
        %v3355 = vmul.f32 %v3163, %v3291
        %v3356 = vtanh.pop %v3324
        %v3357 = vtanh.pop %v3325
        %v3358 = vtanh.pop %v3326
        %v3359 = vtanh.pop %v3327
        %v3360 = vtanh.pop %v3328
        %v3361 = vtanh.pop %v3329
        %v3362 = vtanh.pop %v3330
        %v3363 = vtanh.pop %v3331
        %v3364 = vtanh.pop %v3332
        %v3365 = vtanh.pop %v3333
        %v3366 = vtanh.pop %v3334
        %v3367 = vtanh.pop %v3335
        %v3368 = vtanh.pop %v3336
        %v3369 = vtanh.pop %v3337
        %v3370 = vtanh.pop %v3338
        %v3371 = vtanh.pop %v3339
        %v3372 = vtanh.pop %v3340
        %v3373 = vtanh.pop %v3341
        %v3374 = vtanh.pop %v3342
        %v3375 = vtanh.pop %v3343
        %v3376 = vtanh.pop %v3344
        %v3377 = vtanh.pop %v3345
        %v3378 = vtanh.pop %v3346
        %v3379 = vtanh.pop %v3347
        %v3380 = vtanh.pop %v3348
        %v3381 = vtanh.pop %v3349
        %v3382 = vtanh.pop %v3350
        %v3383 = vtanh.pop %v3351
        %v3384 = vtanh.pop %v3352
        %v3385 = vtanh.pop %v3353
        %v3386 = vtanh.pop %v3354
        %v3387 = vtanh.pop %v3355
        %3420 = vrot.lane.b32.xlu0 %v3356, 64
        %v3421 = vpop.permute.xlu0 %3420
        %3422 = vrot.lane.b32.xlu0 %v3357, 64
        %v3423 = vpop.permute.xlu0 %3422
        %3424 = vrot.lane.b32.xlu0 %v3358, 64
        %v3425 = vpop.permute.xlu0 %3424
        %3426 = vrot.lane.b32.xlu0 %v3359, 64
        %v3427 = vpop.permute.xlu0 %3426
        %3428 = vrot.lane.b32.xlu0 %v3360, 64
        %v3429 = vpop.permute.xlu0 %3428
        %3430 = vrot.lane.b32.xlu0 %v3361, 64
        %v3431 = vpop.permute.xlu0 %3430
        %3432 = vrot.lane.b32.xlu0 %v3362, 64
        %v3433 = vpop.permute.xlu0 %3432
        %3434 = vrot.lane.b32.xlu0 %v3363, 64
        %v3435 = vpop.permute.xlu0 %3434
        %3436 = vrot.lane.b32.xlu0 %v3364, 64
        %v3437 = vpop.permute.xlu0 %3436
        %3438 = vrot.lane.b32.xlu0 %v3365, 64
        %v3439 = vpop.permute.xlu0 %3438
        %3440 = vrot.lane.b32.xlu0 %v3366, 64
        %v3441 = vpop.permute.xlu0 %3440
        %3442 = vrot.lane.b32.xlu0 %v3367, 64
        %v3443 = vpop.permute.xlu0 %3442
        %3444 = vrot.lane.b32.xlu0 %v3368, 64
        %v3445 = vpop.permute.xlu0 %3444
        %3446 = vrot.lane.b32.xlu0 %v3369, 64
        %v3447 = vpop.permute.xlu0 %3446
        %3448 = vrot.lane.b32.xlu0 %v3370, 64
        %v3449 = vpop.permute.xlu0 %3448
        %3450 = vrot.lane.b32.xlu0 %v3371, 64
        %v3451 = vpop.permute.xlu0 %3450
        %3452 = vrot.lane.b32.xlu0 %v3372, 64
        %v3453 = vpop.permute.xlu0 %3452
        %3454 = vrot.lane.b32.xlu0 %v3373, 64
        %v3455 = vpop.permute.xlu0 %3454
        %3456 = vrot.lane.b32.xlu0 %v3374, 64
        %v3457 = vpop.permute.xlu0 %3456
        %3458 = vrot.lane.b32.xlu0 %v3375, 64
        %v3459 = vpop.permute.xlu0 %3458
        %3460 = vrot.lane.b32.xlu0 %v3376, 64
        %v3461 = vpop.permute.xlu0 %3460
        %3462 = vrot.lane.b32.xlu0 %v3377, 64
        %v3463 = vpop.permute.xlu0 %3462
        %3464 = vrot.lane.b32.xlu0 %v3378, 64
        %v3465 = vpop.permute.xlu0 %3464
        %3466 = vrot.lane.b32.xlu0 %v3379, 64
        %v3467 = vpop.permute.xlu0 %3466
        %3468 = vrot.lane.b32.xlu0 %v3380, 64
        %v3469 = vpop.permute.xlu0 %3468
        %3470 = vrot.lane.b32.xlu0 %v3381, 64
        %v3471 = vpop.permute.xlu0 %3470
        %3472 = vrot.lane.b32.xlu0 %v3382, 64
        %v3473 = vpop.permute.xlu0 %3472
        %3474 = vrot.lane.b32.xlu0 %v3383, 64
        %v3475 = vpop.permute.xlu0 %3474
        %3476 = vrot.lane.b32.xlu0 %v3384, 64
        %v3477 = vpop.permute.xlu0 %3476
        %3478 = vrot.lane.b32.xlu0 %v3385, 64
        %v3479 = vpop.permute.xlu0 %3478
        %3480 = vrot.lane.b32.xlu0 %v3386, 64
        %v3481 = vpop.permute.xlu0 %3480
        %3482 = vrot.lane.b32.xlu0 %v3387, 64
        %v3483 = vpop.permute.xlu0 %3482
        %v3516 = vmul.f32 %v2698, %v3421
        %v3517 = vmul.f32 %v2713, %v3423
        %v3518 = vmul.f32 %v2728, %v3425
        %v3519 = vmul.f32 %v2743, %v3427
        %v3520 = vmul.f32 %v2758, %v3429
        %v3521 = vmul.f32 %v2773, %v3431
        %v3522 = vmul.f32 %v2788, %v3433
        %v3523 = vmul.f32 %v2803, %v3435
        %v3524 = vmul.f32 %v2818, %v3437
        %v3525 = vmul.f32 %v2833, %v3439
        %v3526 = vmul.f32 %v2848, %v3441
        %v3527 = vmul.f32 %v2863, %v3443
        %v3528 = vmul.f32 %v2878, %v3445
        %v3529 = vmul.f32 %v2893, %v3447
        %v3530 = vmul.f32 %v2908, %v3449
        %v3531 = vmul.f32 %v2923, %v3451
        %v3532 = vmul.f32 %v2938, %v3453
        %v3533 = vmul.f32 %v2953, %v3455
        %v3534 = vmul.f32 %v2968, %v3457
        %v3535 = vmul.f32 %v2983, %v3459
        %v3536 = vmul.f32 %v2998, %v3461
        %v3537 = vmul.f32 %v3013, %v3463
        %v3538 = vmul.f32 %v3028, %v3465
        %v3539 = vmul.f32 %v3043, %v3467
        %v3540 = vmul.f32 %v3058, %v3469
        %v3541 = vmul.f32 %v3073, %v3471
        %v3542 = vmul.f32 %v3088, %v3473
        %v3543 = vmul.f32 %v3103, %v3475
        %v3544 = vmul.f32 %v3118, %v3477
        %v3545 = vmul.f32 %v3133, %v3479
        %v3546 = vmul.f32 %v3148, %v3481
        %v3547 = vmul.f32 %v3163, %v3483
        %s3548 = scalar_lea.vmem %s1, 64
        %v3549 = vld [vmem:[%s3548] sm:$0xff]
        %v3550 = vld [vmem:[%s3548 + $0x8] sm:$0xff]
        %v3551 = vld [vmem:[%s3548 + $0x10] sm:$0xff]
        %v3552 = vld [vmem:[%s3548 + $0x18] sm:$0xff]
        %s3553 = scalar_lea.vmem %s2, 2
        %v3554 = vld [vmem:[%s3553] sm:$0x1]
        %v3556 = vperm.slane %v3554, 0
        %3590 = vrot.lane.b32.xlu0 %v3516, 64
        %v3591 = vpop.permute.xlu0 %3590
        %3592 = vrot.lane.b32.xlu0 %v3517, 64
        %v3593 = vpop.permute.xlu0 %3592
        %3594 = vrot.lane.b32.xlu0 %v3518, 64
        %v3595 = vpop.permute.xlu0 %3594
        %3596 = vrot.lane.b32.xlu0 %v3519, 64
        %v3597 = vpop.permute.xlu0 %3596
        %3598 = vrot.lane.b32.xlu0 %v3520, 64
        %v3599 = vpop.permute.xlu0 %3598
        %3600 = vrot.lane.b32.xlu0 %v3521, 64
        %v3601 = vpop.permute.xlu0 %3600
        %3602 = vrot.lane.b32.xlu0 %v3522, 64
        %v3603 = vpop.permute.xlu0 %3602
        %3604 = vrot.lane.b32.xlu0 %v3523, 64
        %v3605 = vpop.permute.xlu0 %3604
        %3606 = vrot.lane.b32.xlu0 %v3524, 64
        %v3607 = vpop.permute.xlu0 %3606
        %3608 = vrot.lane.b32.xlu0 %v3525, 64
        %v3609 = vpop.permute.xlu0 %3608
        %3610 = vrot.lane.b32.xlu0 %v3526, 64
        %v3611 = vpop.permute.xlu0 %3610
        %3612 = vrot.lane.b32.xlu0 %v3527, 64
        %v3613 = vpop.permute.xlu0 %3612
        %3614 = vrot.lane.b32.xlu0 %v3528, 64
        %v3615 = vpop.permute.xlu0 %3614
        %3616 = vrot.lane.b32.xlu0 %v3529, 64
        %v3617 = vpop.permute.xlu0 %3616
        %3618 = vrot.lane.b32.xlu0 %v3530, 64
        %v3619 = vpop.permute.xlu0 %3618
        %3620 = vrot.lane.b32.xlu0 %v3531, 64
        %v3621 = vpop.permute.xlu0 %3620
        %3622 = vrot.lane.b32.xlu0 %v3532, 64
        %v3623 = vpop.permute.xlu0 %3622
        %3624 = vrot.lane.b32.xlu0 %v3533, 64
        %v3625 = vpop.permute.xlu0 %3624
        %3626 = vrot.lane.b32.xlu0 %v3534, 64
        %v3627 = vpop.permute.xlu0 %3626
        %3628 = vrot.lane.b32.xlu0 %v3535, 64
        %v3629 = vpop.permute.xlu0 %3628
        %3630 = vrot.lane.b32.xlu0 %v3536, 64
        %v3631 = vpop.permute.xlu0 %3630
        %3632 = vrot.lane.b32.xlu0 %v3537, 64
        %v3633 = vpop.permute.xlu0 %3632
        %3634 = vrot.lane.b32.xlu0 %v3538, 64
        %v3635 = vpop.permute.xlu0 %3634
        %3636 = vrot.lane.b32.xlu0 %v3539, 64
        %v3637 = vpop.permute.xlu0 %3636
        %3638 = vrot.lane.b32.xlu0 %v3540, 64
        %v3639 = vpop.permute.xlu0 %3638
        %3640 = vrot.lane.b32.xlu0 %v3541, 64
        %v3641 = vpop.permute.xlu0 %3640
        %3642 = vrot.lane.b32.xlu0 %v3542, 64
        %v3643 = vpop.permute.xlu0 %3642
        %3644 = vrot.lane.b32.xlu0 %v3543, 64
        %v3645 = vpop.permute.xlu0 %3644
        %3646 = vrot.lane.b32.xlu0 %v3544, 64
        %v3647 = vpop.permute.xlu0 %3646
        %3648 = vrot.lane.b32.xlu0 %v3545, 64
        %v3649 = vpop.permute.xlu0 %3648
        %3650 = vrot.lane.b32.xlu0 %v3546, 64
        %v3651 = vpop.permute.xlu0 %3650
        %3652 = vrot.lane.b32.xlu0 %v3547, 64
        %v3653 = vpop.permute.xlu0 %3652
        %v3654 = vsel %vm535, %v3591, 0
        %v3656 = vsel %vm535, %v3593, 0
        %v3658 = vsel %vm535, %v3595, 0
        %v3660 = vsel %vm535, %v3597, 0
        %v3662 = vsel %vm535, %v3599, 0
        %v3664 = vsel %vm535, %v3601, 0
        %v3666 = vsel %vm535, %v3603, 0
        %v3668 = vsel %vm535, %v3605, 0
        %v3670 = vsel %vm535, %v3607, 0
        %v3672 = vsel %vm535, %v3609, 0
        %v3674 = vsel %vm535, %v3611, 0
        %v3676 = vsel %vm535, %v3613, 0
        %v3678 = vsel %vm535, %v3615, 0
        %v3680 = vsel %vm535, %v3617, 0
        %v3682 = vsel %vm535, %v3619, 0
        %v3684 = vsel %vm535, %v3621, 0
        %v3686 = vsel %vm535, %v3623, 0
        %v3688 = vsel %vm535, %v3625, 0
        %v3690 = vsel %vm535, %v3627, 0
        %v3692 = vsel %vm535, %v3629, 0
        %v3694 = vsel %vm535, %v3631, 0
        %v3696 = vsel %vm535, %v3633, 0
        %v3698 = vsel %vm535, %v3635, 0
        %v3700 = vsel %vm535, %v3637, 0
        %v3702 = vsel %vm535, %v3639, 0
        %v3704 = vsel %vm535, %v3641, 0
        %v3706 = vsel %vm535, %v3643, 0
        %v3708 = vsel %vm535, %v3645, 0
        %v3710 = vsel %vm535, %v3647, 0
        %v3712 = vsel %vm535, %v3649, 0
        %v3714 = vsel %vm535, %v3651, 0
        %v3716 = vsel %vm535, %v3653, 0
        %3718 = vmatpush.msra.mxu0 0.0
        %3719 = vmatpush.msra.mxu0 0.0
        %3720 = vmatpush.msra.mxu0 0.0
        %3721 = vmatpush.msra.mxu0 0.0
        %3722 = vmatpush.msra.mxu0 0.0
        %3723 = vmatpush.msra.mxu0 0.0
        %3724 = vmatpush.msra.mxu0 0.0
        %3725 = vmatpush.msra.mxu0 0.0
        %3726 = vmatpush.msra.mxu0 0.0
        %3727 = vmatpush.msra.mxu0 0.0
        %3728 = vmatpush.msra.mxu0 0.0
        %3729 = vmatpush.msra.mxu0 0.0
        %3730 = vmatpush.msra.mxu0 %v3552
        %3731 = vmatpush.msra.mxu0 %v3551
        %3732 = vmatpush.msra.mxu0 %v3550
        %3733 = vmatpush.msra.mxu0 %v3549
        %3734 = vmatmul.f32.gmra.mxu0 %v3654
        %v3735 = vpop.f32.mrf.mxu0
        %3736 = vmatmul.f32.gmra.mxu0 %v3656
        %v3737 = vpop.f32.mrf.mxu0
        %3738 = vmatmul.f32.gmra.mxu0 %v3658
        %v3739 = vpop.f32.mrf.mxu0
        %3740 = vmatmul.f32.gmra.mxu0 %v3660
        %v3741 = vpop.f32.mrf.mxu0
        %v3742 = vadd.f32 %v3556, %v3741
        %3743 = vmatmul.f32.gmra.mxu0 %v3662
        %v3744 = vpop.f32.mrf.mxu0
        %3745 = vmatmul.f32.gmra.mxu0 %v3664
        %v3746 = vpop.f32.mrf.mxu0
        %3747 = vmatmul.f32.gmra.mxu0 %v3666
        %v3748 = vpop.f32.mrf.mxu0
        %3749 = vmatmul.f32.gmra.mxu0 %v3668
        %v3750 = vpop.f32.mrf.mxu0
        %v3751 = vadd.f32 %v3556, %v3750
        %3752 = vmatmul.f32.gmra.mxu0 %v3670
        %v3753 = vpop.f32.mrf.mxu0
        %3754 = vmatmul.f32.gmra.mxu0 %v3672
        %v3755 = vpop.f32.mrf.mxu0
        %3756 = vmatmul.f32.gmra.mxu0 %v3674
        %v3757 = vpop.f32.mrf.mxu0
        %3758 = vmatmul.f32.gmra.mxu0 %v3676
        %v3759 = vpop.f32.mrf.mxu0
        %v3760 = vadd.f32 %v3556, %v3759
        %3761 = vmatmul.f32.gmra.mxu0 %v3678
        %v3762 = vpop.f32.mrf.mxu0
        %3763 = vmatmul.f32.gmra.mxu0 %v3680
        %v3764 = vpop.f32.mrf.mxu0
        %3765 = vmatmul.f32.gmra.mxu0 %v3682
        %v3766 = vpop.f32.mrf.mxu0
        %3767 = vmatmul.f32.gmra.mxu0 %v3684
        %v3768 = vpop.f32.mrf.mxu0
        %v3769 = vadd.f32 %v3556, %v3768
        %3770 = vmatmul.f32.gmra.mxu0 %v3686
        %v3771 = vpop.f32.mrf.mxu0
        %3772 = vmatmul.f32.gmra.mxu0 %v3688
        %v3773 = vpop.f32.mrf.mxu0
        %3774 = vmatmul.f32.gmra.mxu0 %v3690
        %v3775 = vpop.f32.mrf.mxu0
        %3776 = vmatmul.f32.gmra.mxu0 %v3692
        %v3777 = vpop.f32.mrf.mxu0
        %v3778 = vadd.f32 %v3556, %v3777
        %3779 = vmatmul.f32.gmra.mxu0 %v3694
        %v3780 = vpop.f32.mrf.mxu0
        %3781 = vmatmul.f32.gmra.mxu0 %v3696
        %v3782 = vpop.f32.mrf.mxu0
        %3783 = vmatmul.f32.gmra.mxu0 %v3698
        %v3784 = vpop.f32.mrf.mxu0
        %3785 = vmatmul.f32.gmra.mxu0 %v3700
        %v3786 = vpop.f32.mrf.mxu0
        %v3787 = vadd.f32 %v3556, %v3786
        %3788 = vmatmul.f32.gmra.mxu0 %v3702
        %v3789 = vpop.f32.mrf.mxu0
        %3790 = vmatmul.f32.gmra.mxu0 %v3704
        %v3791 = vpop.f32.mrf.mxu0
        %3792 = vmatmul.f32.gmra.mxu0 %v3706
        %v3793 = vpop.f32.mrf.mxu0
        %3794 = vmatmul.f32.gmra.mxu0 %v3708
        %v3795 = vpop.f32.mrf.mxu0
        %v3796 = vadd.f32 %v3556, %v3795
        %3797 = vmatmul.f32.gmra.mxu0 %v3710
        %v3798 = vpop.f32.mrf.mxu0
        %3799 = vmatmul.f32.gmra.mxu0 %v3712
        %v3800 = vpop.f32.mrf.mxu0
        %3801 = vmatmul.f32.gmra.mxu0 %v3714
        %v3802 = vpop.f32.mrf.mxu0
        %3803 = vmatmul.f32.gmra.mxu0 %v3716
        %v3804 = vpop.f32.mrf.mxu0
        %v3805 = vadd.f32 %v3556, %v3804
        %3806 = vdwg.mxu0
        %v3807 = vxor.u32 %v3742, 2147483648
        %v3808 = vxor.u32 %v3751, 2147483648
        %v3809 = vxor.u32 %v3760, 2147483648
        %v3810 = vxor.u32 %v3769, 2147483648
        %v3811 = vxor.u32 %v3778, 2147483648
        %v3812 = vxor.u32 %v3787, 2147483648
        %v3813 = vxor.u32 %v3796, 2147483648
        %v3814 = vxor.u32 %v3805, 2147483648
        %v3815 = vmul.f32 %v3807, 1.442695
        %v3816 = vpow.pop %v3815
        %v3817 = vmul.f32 %v3808, 1.442695
        %v3818 = vpow.pop %v3817
        %v3819 = vmul.f32 %v3809, 1.442695
        %v3820 = vpow.pop %v3819
        %v3821 = vmul.f32 %v3810, 1.442695
        %v3822 = vpow.pop %v3821
        %v3823 = vmul.f32 %v3811, 1.442695
        %v3824 = vpow.pop %v3823
        %v3825 = vmul.f32 %v3812, 1.442695
        %v3826 = vpow.pop %v3825
        %v3827 = vmul.f32 %v3813, 1.442695
        %v3828 = vpow.pop %v3827
        %v3829 = vmul.f32 %v3814, 1.442695
        %v3830 = vpow.pop %v3829
        %v3831 = vadd.f32 %v3816, 1.0
        %v3832 = vadd.f32 %v3818, 1.0
        %v3833 = vadd.f32 %v3820, 1.0
        %v3834 = vadd.f32 %v3822, 1.0
        %v3835 = vadd.f32 %v3824, 1.0
        %v3836 = vadd.f32 %v3826, 1.0
        %v3837 = vadd.f32 %v3828, 1.0
        %v3838 = vadd.f32 %v3830, 1.0
        %v3839 = vrcp.pop %v3831
        %v3840 = vmul.f32 %v3831, %v3839
        %v3841 = vsub.f32 1.0, %v3840
        %v3842 = vmul.f32 %v3839, %v3841
        %v3843 = vadd.f32 %v3839, %v3842
        %vm3844 = vweird.f32 %v3831
        %vm3845 = vweird.f32 %v3839
        %vm3846 = vmor %vm3844, %vm3845
        %v3847 = vsel %vm3846, %v3839, %v3843
        %v3848 = vand.u32 2147483647, %v3831
        %vm3849 = vcmp.eq.f32.partialorder %v3848, 8.507059e+37
        %v3850 = vand.u32 %v3831, 2147483648
        %v3851 = vor.u32 1.1754944e-38, %v3850
        %v3852 = vsel %vm3849, %v3851, %v3847
        %v3853 = vmul.f32 1.0, %v3852
        %v3854 = vrcp.pop %v3832
        %v3855 = vmul.f32 %v3832, %v3854
        %v3856 = vsub.f32 1.0, %v3855
        %v3857 = vmul.f32 %v3854, %v3856
        %v3858 = vadd.f32 %v3854, %v3857
        %vm3859 = vweird.f32 %v3832
        %vm3860 = vweird.f32 %v3854
        %vm3861 = vmor %vm3859, %vm3860
        %v3862 = vsel %vm3861, %v3854, %v3858
        %v3863 = vand.u32 2147483647, %v3832
        %vm3864 = vcmp.eq.f32.partialorder %v3863, 8.507059e+37
        %v3865 = vand.u32 %v3832, 2147483648
        %v3866 = vor.u32 1.1754944e-38, %v3865
        %v3867 = vsel %vm3864, %v3866, %v3862
        %v3868 = vmul.f32 1.0, %v3867
        %v3869 = vrcp.pop %v3833
        %v3870 = vmul.f32 %v3833, %v3869
        %v3871 = vsub.f32 1.0, %v3870
        %v3872 = vmul.f32 %v3869, %v3871
        %v3873 = vadd.f32 %v3869, %v3872
        %vm3874 = vweird.f32 %v3833
        %vm3875 = vweird.f32 %v3869
        %vm3876 = vmor %vm3874, %vm3875
        %v3877 = vsel %vm3876, %v3869, %v3873
        %v3878 = vand.u32 2147483647, %v3833
        %vm3879 = vcmp.eq.f32.partialorder %v3878, 8.507059e+37
        %v3880 = vand.u32 %v3833, 2147483648
        %v3881 = vor.u32 1.1754944e-38, %v3880
        %v3882 = vsel %vm3879, %v3881, %v3877
        %v3883 = vmul.f32 1.0, %v3882
        %v3884 = vrcp.pop %v3834
        %v3885 = vmul.f32 %v3834, %v3884
        %v3886 = vsub.f32 1.0, %v3885
        %v3887 = vmul.f32 %v3884, %v3886
        %v3888 = vadd.f32 %v3884, %v3887
        %vm3889 = vweird.f32 %v3834
        %vm3890 = vweird.f32 %v3884
        %vm3891 = vmor %vm3889, %vm3890
        %v3892 = vsel %vm3891, %v3884, %v3888
        %v3893 = vand.u32 2147483647, %v3834
        %vm3894 = vcmp.eq.f32.partialorder %v3893, 8.507059e+37
        %v3895 = vand.u32 %v3834, 2147483648
        %v3896 = vor.u32 1.1754944e-38, %v3895
        %v3897 = vsel %vm3894, %v3896, %v3892
        %v3898 = vmul.f32 1.0, %v3897
        %v3899 = vrcp.pop %v3835
        %v3900 = vmul.f32 %v3835, %v3899
        %v3901 = vsub.f32 1.0, %v3900
        %v3902 = vmul.f32 %v3899, %v3901
        %v3903 = vadd.f32 %v3899, %v3902
        %vm3904 = vweird.f32 %v3835
        %vm3905 = vweird.f32 %v3899
        %vm3906 = vmor %vm3904, %vm3905
        %v3907 = vsel %vm3906, %v3899, %v3903
        %v3908 = vand.u32 2147483647, %v3835
        %vm3909 = vcmp.eq.f32.partialorder %v3908, 8.507059e+37
        %v3910 = vand.u32 %v3835, 2147483648
        %v3911 = vor.u32 1.1754944e-38, %v3910
        %v3912 = vsel %vm3909, %v3911, %v3907
        %v3913 = vmul.f32 1.0, %v3912
        %v3914 = vrcp.pop %v3836
        %v3915 = vmul.f32 %v3836, %v3914
        %v3916 = vsub.f32 1.0, %v3915
        %v3917 = vmul.f32 %v3914, %v3916
        %v3918 = vadd.f32 %v3914, %v3917
        %vm3919 = vweird.f32 %v3836
        %vm3920 = vweird.f32 %v3914
        %vm3921 = vmor %vm3919, %vm3920
        %v3922 = vsel %vm3921, %v3914, %v3918
        %v3923 = vand.u32 2147483647, %v3836
        %vm3924 = vcmp.eq.f32.partialorder %v3923, 8.507059e+37
        %v3925 = vand.u32 %v3836, 2147483648
        %v3926 = vor.u32 1.1754944e-38, %v3925
        %v3927 = vsel %vm3924, %v3926, %v3922
        %v3928 = vmul.f32 1.0, %v3927
        %v3929 = vrcp.pop %v3837
        %v3930 = vmul.f32 %v3837, %v3929
        %v3931 = vsub.f32 1.0, %v3930
        %v3932 = vmul.f32 %v3929, %v3931
        %v3933 = vadd.f32 %v3929, %v3932
        %vm3934 = vweird.f32 %v3837
        %vm3935 = vweird.f32 %v3929
        %vm3936 = vmor %vm3934, %vm3935
        %v3937 = vsel %vm3936, %v3929, %v3933
        %v3938 = vand.u32 2147483647, %v3837
        %vm3939 = vcmp.eq.f32.partialorder %v3938, 8.507059e+37
        %v3940 = vand.u32 %v3837, 2147483648
        %v3941 = vor.u32 1.1754944e-38, %v3940
        %v3942 = vsel %vm3939, %v3941, %v3937
        %v3943 = vmul.f32 1.0, %v3942
        %v3944 = vrcp.pop %v3838
        %v3945 = vmul.f32 %v3838, %v3944
        %v3946 = vsub.f32 1.0, %v3945
        %v3947 = vmul.f32 %v3944, %v3946
        %v3948 = vadd.f32 %v3944, %v3947
        %vm3949 = vweird.f32 %v3838
        %vm3950 = vweird.f32 %v3944
        %vm3951 = vmor %vm3949, %vm3950
        %v3952 = vsel %vm3951, %v3944, %v3948
        %v3953 = vand.u32 2147483647, %v3838
        %vm3954 = vcmp.eq.f32.partialorder %v3953, 8.507059e+37
        %v3955 = vand.u32 %v3838, 2147483648
        %v3956 = vor.u32 1.1754944e-38, %v3955
        %v3957 = vsel %vm3954, %v3956, %v3952
        %v3958 = vmul.f32 1.0, %v3957
        %v3959 = vtanh.pop %v3742
        %v3960 = vtanh.pop %v3751
        %v3961 = vtanh.pop %v3760
        %v3962 = vtanh.pop %v3769
        %v3963 = vtanh.pop %v3778
        %v3964 = vtanh.pop %v3787
        %v3965 = vtanh.pop %v3796
        %v3966 = vtanh.pop %v3805
        %3975 = vrot.lane.b32.xlu0 %v3959, 96
        %v3976 = vpop.permute.xlu0 %3975
        %3977 = vrot.lane.b32.xlu0 %v3960, 96
        %v3978 = vpop.permute.xlu0 %3977
        %3979 = vrot.lane.b32.xlu0 %v3961, 96
        %v3980 = vpop.permute.xlu0 %3979
        %3981 = vrot.lane.b32.xlu0 %v3962, 96
        %v3982 = vpop.permute.xlu0 %3981
        %3983 = vrot.lane.b32.xlu0 %v3963, 96
        %v3984 = vpop.permute.xlu0 %3983
        %3985 = vrot.lane.b32.xlu0 %v3964, 96
        %v3986 = vpop.permute.xlu0 %3985
        %3987 = vrot.lane.b32.xlu0 %v3965, 96
        %v3988 = vpop.permute.xlu0 %3987
        %3989 = vrot.lane.b32.xlu0 %v3966, 96
        %v3990 = vpop.permute.xlu0 %3989
        %v3999 = vmul.f32 %v3853, %v3976
        %v4000 = vmul.f32 %v3868, %v3978
        %v4001 = vmul.f32 %v3883, %v3980
        %v4002 = vmul.f32 %v3898, %v3982
        %v4003 = vmul.f32 %v3913, %v3984
        %v4004 = vmul.f32 %v3928, %v3986
        %v4005 = vmul.f32 %v3943, %v3988
        %v4006 = vmul.f32 %v3958, %v3990
        %v4007 = vtanh.pop %v3999
        %v4008 = vtanh.pop %v4000
        %v4009 = vtanh.pop %v4001
        %v4010 = vtanh.pop %v4002
        %v4011 = vtanh.pop %v4003
        %v4012 = vtanh.pop %v4004
        %v4013 = vtanh.pop %v4005
        %v4014 = vtanh.pop %v4006
        %4023 = vrot.lane.b32.xlu0 %v4007, 64
        %v4024 = vpop.permute.xlu0 %4023
        %4025 = vrot.lane.b32.xlu0 %v4008, 64
        %v4026 = vpop.permute.xlu0 %4025
        %4027 = vrot.lane.b32.xlu0 %v4009, 64
        %v4028 = vpop.permute.xlu0 %4027
        %4029 = vrot.lane.b32.xlu0 %v4010, 64
        %v4030 = vpop.permute.xlu0 %4029
        %4031 = vrot.lane.b32.xlu0 %v4011, 64
        %v4032 = vpop.permute.xlu0 %4031
        %4033 = vrot.lane.b32.xlu0 %v4012, 64
        %v4034 = vpop.permute.xlu0 %4033
        %4035 = vrot.lane.b32.xlu0 %v4013, 64
        %v4036 = vpop.permute.xlu0 %4035
        %4037 = vrot.lane.b32.xlu0 %v4014, 64
        %v4038 = vpop.permute.xlu0 %4037
        %v4047 = vmul.f32 %v3853, %v4024
        %v4048 = vmul.f32 %v3868, %v4026
        %v4049 = vmul.f32 %v3883, %v4028
        %v4050 = vmul.f32 %v3898, %v4030
        %v4051 = vmul.f32 %v3913, %v4032
        %v4052 = vmul.f32 %v3928, %v4034
        %v4053 = vmul.f32 %v3943, %v4036
        %v4054 = vmul.f32 %v3958, %v4038
        %s4055 = scalar_lea.vmem %s1, 96
        %v4056 = vld [vmem:[%s4055] sm:$0xff]
        %v4057 = vld [vmem:[%s4055 + $0x8] sm:$0xff]
        %v4058 = vld [vmem:[%s4055 + $0x10] sm:$0xff]
        %v4059 = vld [vmem:[%s4055 + $0x18] sm:$0xff]
        %s4060 = scalar_lea.vmem %s2, 3
        %v4061 = vld [vmem:[%s4060] sm:$0x1]
        %v4063 = vperm.slane %v4061, 0
        %v4073 = vrot.slane %v4047, 7
        %v4074 = vrot.slane %v4048, 6
        %vm4075 = vcmask 1041409
        %v4076 = vsel %vm4075, %v4074, %v4073
        %v4077 = vrot.slane %v4049, 5
        %vm4078 = vcmask 1042434
        %v4079 = vsel %vm4078, %v4077, %v4076
        %v4080 = vrot.slane %v4050, 4
        %vm4081 = vcmask 1043459
        %v4082 = vsel %vm4081, %v4080, %v4079
        %v4083 = vrot.slane %v4051, 3
        %vm4084 = vcmask 1044484
        %v4085 = vsel %vm4084, %v4083, %v4082
        %v4086 = vrot.slane %v4052, 2
        %vm4087 = vcmask 1045509
        %v4088 = vsel %vm4087, %v4086, %v4085
        %v4089 = vrot.slane %v4053, 1
        %vm4090 = vcmask 1046534
        %v4091 = vsel %vm4090, %v4089, %v4088
        %vm4092 = vcmask 1047559
        %v4093 = vsel %vm4092, %v4054, %v4091
        %4094 = vrot.lane.b32.xlu0 %v4093, 64
        %v4095 = vpop.permute.xlu0 %4094
        %v4096 = vsel %vm535, %v4095, 0
        %4098 = vmatpush.msra.mxu0 0.0
        %4099 = vmatpush.msra.mxu0 0.0
        %4100 = vmatpush.msra.mxu0 0.0
        %4101 = vmatpush.msra.mxu0 0.0
        %4102 = vmatpush.msra.mxu0 0.0
        %4103 = vmatpush.msra.mxu0 0.0
        %4104 = vmatpush.msra.mxu0 0.0
        %4105 = vmatpush.msra.mxu0 0.0
        %4106 = vmatpush.msra.mxu0 0.0
        %4107 = vmatpush.msra.mxu0 0.0
        %4108 = vmatpush.msra.mxu0 0.0
        %4109 = vmatpush.msra.mxu0 0.0
        %4110 = vmatpush.msra.mxu0 %v4059
        %4111 = vmatpush.msra.mxu0 %v4058
        %4112 = vmatpush.msra.mxu0 %v4057
        %4113 = vmatpush.msra.mxu0 %v4056
        %4114 = vmatmul.f32.gmra.mxu0 %v4096
        %v4115 = vpop.f32.mrf.mxu0
        %v4116 = vadd.f32 %v4063, %v4115
        %4117 = vdwg.mxu0
        %v4118 = vxor.u32 %v4116, 2147483648
        %v4119 = vmul.f32 %v4118, 1.442695
        %v4120 = vpow.pop %v4119
        %v4121 = vadd.f32 %v4120, 1.0
        %v4122 = vrcp.pop %v4121
        %v4123 = vmul.f32 %v4121, %v4122
        %v4124 = vsub.f32 1.0, %v4123
        %v4125 = vmul.f32 %v4122, %v4124
        %v4126 = vadd.f32 %v4122, %v4125
        %vm4127 = vweird.f32 %v4121
        %vm4128 = vweird.f32 %v4122
        %vm4129 = vmor %vm4127, %vm4128
        %v4130 = vsel %vm4129, %v4122, %v4126
        %v4131 = vand.u32 2147483647, %v4121
        %vm4132 = vcmp.eq.f32.partialorder %v4131, 8.507059e+37
        %v4133 = vand.u32 %v4121, 2147483648
        %v4134 = vor.u32 1.1754944e-38, %v4133
        %v4135 = vsel %vm4132, %v4134, %v4130
        %v4136 = vmul.f32 1.0, %v4135
        %v4137 = vtanh.pop %v4116
        %4139 = vrot.lane.b32.xlu0 %v4137, 96
        %v4140 = vpop.permute.xlu0 %4139
        %v4142 = vmul.f32 %v4136, %v4140
        %v4143 = vtanh.pop %v4142
        %4145 = vrot.lane.b32.xlu0 %v4143, 64
        %v4146 = vpop.permute.xlu0 %4145
        %v4148 = vmul.f32 %v4136, %v4146
        %4150 = vrot.lane.b32.xlu0 %v4148, 64
        %v4151 = vpop.permute.xlu0 %4150
        %4153 = vst.msk [vmem:[%s166] sm:$0xff] %vm535, %v4151
        %s4154 = sand.u32 %s93, 1
        %s4155 = scalar_lea.sflag [#allocation3], %s4154
        %s4156 = sand.u32 %s93, 1
        %s4157 = smul.addr %s4156, 8
        %s4158 = scalar_lea.vmem [#allocation2], %s4157
        // Predicated region
        $region33: #{tpu_custom_call.1} parent=31 // pred_check
          %p4159 = pneg %p103
        $region34: #{tpu_custom_call.1} parent=31 // pred_check_branch
          %4161 = sbr.rel (%p4159) target = $region36
        $region35: #{tpu_custom_call.1} parent=31 // pred_region
          %4163 = vsyncadd %s4155, 0
          %s4164 = smul.addr %s17, 8
          %s4165 = scalar_lea.hbm %s3, %s4164
          %s4167 = sshll.u32 %s4158, 4
          %s4168 = int_to_ptr.vmem [resolvable:$true] %s4167
          %s4169 = sshll.u32 %s4165, 4
          %s4170 = int_to_ptr.hbm [resolvable:$true] %s4169
          %4172 = dma.vmem_to_hbm [thread:$0]  %s4168, 128, %s4170, %s4155
        $region36: #{tpu_custom_call.1} parent=31 // pred_fallthru
          _
      $region32: #{tpu_custom_call.1} parent=5 // pred_fallthru
        _
      %p4173 = scmp.le.s32.totalorder 2, %s12
      // Predicated region
      $region37: #{tpu_custom_call.1} parent=5 // pred_check
        %p4174 = pneg %p4173
      $region38: #{tpu_custom_call.1} parent=5 // pred_check_branch
        %4176 = sbr.rel (%p4174) target = $region40
      $region39: #{tpu_custom_call.1} parent=5 // pred_region
        %s4177 = ssub.s32 %s12, 2
        // Predicated region
        $region41: #{tpu_custom_call.1} parent=39 // pred_check
          %p4178 = pneg %p109
        $region42: #{tpu_custom_call.1} parent=39 // pred_check_branch
          %4180 = sbr.rel (%p4178) target = $region44
        $region43: #{tpu_custom_call.1} parent=39 // pred_region
          %s4181 = sand.u32 %s94, 1
          %s4182 = scalar_lea.sflag [#allocation3], %s4181
          %s4183 = sand.u32 %s94, 1
          %s4184 = smul.addr %s4183, 8
          %s4185 = scalar_lea.vmem [#allocation2], %s4184
          %4187 = dma.done %s4182, 128
        $region44: #{tpu_custom_call.1} parent=39 // pred_fallthru
          _
      $region40: #{tpu_custom_call.1} parent=5 // pred_fallthru
        _
    $region6: #{tpu_custom_call.1} parent=1 // loop_footer
      %s16 = sadd.s32 1, %s12
    $region7: #{tpu_custom_call.1} parent=1 // loop_footer_branch
      %11 = sbr.rel target = $region3
    $region8: #{tpu_custom_call.1} parent=1 // loop_exit
      _
    %4188 = vsyncpa [#allocation3], 1
    %s4189 = scalar_lea.sflag [#allocation3], 1
    %4190 = vsyncpa %s4189, 1

</llo_original>
